<compile_context>
chip_gen: v7x
topology: tpu7x:2x2x1
jax: 0.10.0
libtpu: 0.0.40
codegen_flags: <defaults>
</compile_context>

<pallas_src>
import math
from functools import partial

import jax
import jax.numpy as jnp
from jax import lax
from jax.experimental import pallas as pl
from jax.experimental.pallas import tpu as pltpu

LN_EPS = 1e-5
_GELU_C = math.sqrt(2.0 / math.pi)


def _round_up_lane(n):
    return ((n + 127) // 128) * 128


def _layer_norm(x, g, b):
    # x: [M, E] f32, g/b: [1, E] f32
    mu = jnp.mean(x, axis=-1, keepdims=True)
    xc = x - mu
    var = jnp.mean(xc * xc, axis=-1, keepdims=True)
    return xc * lax.rsqrt(var + LN_EPS) * g + b


def _gelu_new(x):
    # GPT-2 "gelu_new" (tanh approximation) — tanh routes to the EUP.
    return 0.5 * x * (1.0 + jnp.tanh(_GELU_C * (x + 0.044715 * x * x * x)))


def _tensorcores_per_chip():
    """Perf-only heuristic: 2 TensorCores per chip on v7x, 1 on v5e/v6e (and older)."""
    try:
        kind = jax.devices()[0].device_kind.lower()
    except Exception:
        return 1
    return 2 if ('v7' in kind or '7x' in kind) else 1


def _block_causal_bias(BB, T):
    """Additive bias [BB*T, BB*T]: 0 where (same batch block AND causal), else -1e9."""
    M = BB * T
    r = lax.broadcasted_iota(jnp.int32, (M, M), 0)
    c = lax.broadcasted_iota(jnp.int32, (M, M), 1)
    same_block = (r // T) == (c // T)
    return jnp.where(same_block & (c <= r), 0.0, -1e9).astype(jnp.float32)


# ---------------------------------------------------------------------------
# Fused kernel: embedding + L transformer blocks + output projection.
# One grid step processes M = BB*T activation rows (BB batch elements).
# ---------------------------------------------------------------------------
def make_fused_kernel(L, M, E, H, folded):
    D = E // H
    bf16 = jnp.bfloat16

    def kernel(x_ref,        # folded: [M, RP_in]   else: [1, T, RP_in]
               tp_ref,       # folded: [M, E]       else: [1, T, E]   (type + pos + b_in)
               mask_ref,     # [M, M]  block-diagonal causal additive bias
               w_in_ref,     # [RP_in, E]   bf16
               wqkv_ref,     # [L, E, 3E]   bf16  (Q columns pre-scaled by 1/sqrt(D))
               bqkv_ref,     # [L, 1, 3E]   f32
               wproj_ref,    # [L, E, E]    bf16
               vec_ref,      # [L, 6, 1, E] f32: ln1_g, ln1_b, ln2_g, ln2_b, b_proj, b_fp
               wfc_ref,      # [L, E, 4E]   bf16
               bfc_ref,      # [L, 1, 4E]   f32
               wfp_ref,      # [L, 4E, E]   bf16
               w_out_ref,    # [E, RP_out]  bf16
               b_out_ref,    # [1, RP_out]  f32
               o_ref):       # folded: [M, RP_out]  else: [1, T, RP_out]
        get = (lambda r: r[...]) if folded else (lambda r: r[0])

        mask = mask_ref[...]                                            # [M, M] f32

        # ---- embedding: x @ W_in + (wpe + b_in + type_emb) ----
        x = get(x_ref).astype(bf16)                                     # [M, RP_in]
        h = jnp.dot(x, w_in_ref[...], preferred_element_type=jnp.float32)
        h = h + get(tp_ref)                                             # [M, E] f32

        def split_heads(qkv_b, base):
            # [M, 3E] bf16 -> [H, M, D] bf16 via static lane slices + leading concat.
            return jnp.concatenate(
                [qkv_b[:, base + i * D: base + (i + 1) * D][None] for i in range(H)],
                axis=0)

        # ---- transformer blocks (statically unrolled; activation stays in VMEM) ----
        for l in range(L):
            vec = vec_ref[l]                                            # [6, 1, E]
            ln1_g, ln1_b = vec[0], vec[1]
            ln2_g, ln2_b = vec[2], vec[3]
            b_proj, b_fp = vec[4], vec[5]

            # --- causal multi-head attention ---
            hn = _layer_norm(h, ln1_g, ln1_b)                           # [M, E] f32
            qkv = jnp.dot(hn.astype(bf16), wqkv_ref[l],
                          preferred_element_type=jnp.float32) + bqkv_ref[l]   # [M, 3E]
            qkv_b = qkv.astype(bf16)
            q = split_heads(qkv_b, 0)          # pre-scaled by 1/sqrt(D) at pack time
            k = split_heads(qkv_b, E)
            v = split_heads(qkv_b, 2 * E)

            s = jnp.einsum('hmd,hnd->hmn', q, k,
                           preferred_element_type=jnp.float32) + mask   # [H, M, M]
            s = s - jnp.max(s, axis=-1, keepdims=True)
            p = jnp.exp(s)
            p = p * pl.reciprocal(jnp.sum(p, axis=-1, keepdims=True))   # exact recip
            attn = jnp.einsum('hmn,hnd->hmd', p.astype(bf16), v,
                              preferred_element_type=jnp.float32)       # [H, M, D]

            # merge heads -> [M, E], then ONE c_proj matmul
            merged = jnp.concatenate([attn[i] for i in range(H)], axis=-1)
            proj = jnp.dot(merged.astype(bf16), wproj_ref[l],
                           preferred_element_type=jnp.float32) + b_proj
            h = h + proj

            # --- MLP ---
            hn2 = _layer_norm(h, ln2_g, ln2_b)
            f = jnp.dot(hn2.astype(bf16), wfc_ref[l],
                        preferred_element_type=jnp.float32) + bfc_ref[l]
            f = _gelu_new(f)
            f = jnp.dot(f.astype(bf16), wfp_ref[l],
                        preferred_element_type=jnp.float32) + b_fp
            h = h + f

        # ---- output head (lane-dense padded width) ----
        out = jnp.dot(h.astype(bf16), w_out_ref[...],
                      preferred_element_type=jnp.float32) + b_out_ref[...]
        if folded:
            o_ref[...] = out
        else:
            o_ref[0] = out

    return kernel


# ---------------------------------------------------------------------------
# Parameters
# ---------------------------------------------------------------------------
def init_params(key, *, embed=64, layers=2, resp=100, seq=10, vocab=50):
    n_keys = 4 + 4 * layers
    keys = iter(jax.random.split(key, n_keys))

    def nrm(shape):
        return 0.02 * jax.random.normal(next(keys), shape, jnp.float32)

    def zeros(shape):
        return jnp.zeros(shape, jnp.float32)

    def ones(shape):
        return jnp.ones(shape, jnp.float32)

    params = {
        'wpe': nrm((seq, embed)),            # positional embeddings for ids 0..seq-1
        'wte': nrm((vocab, embed)),          # token (type) embedding table
        'w_in': nrm((resp, embed)), 'b_in': zeros((1, embed)),    # response2embedding
        'w_out': nrm((embed, resp)), 'b_out': zeros((1, resp)),   # vector2response
        'blocks': [],
    }
    for _ in range(layers):
        params['blocks'].append({
            'ln1_g': ones((1, embed)), 'ln1_b': zeros((1, embed)),
            'w_qkv': nrm((embed, 3 * embed)), 'b_qkv': zeros((1, 3 * embed)),
            'w_proj': nrm((embed, embed)), 'b_proj': zeros((1, embed)),
            'ln2_g': ones((1, embed)), 'ln2_b': zeros((1, embed)),
            'w_fc': nrm((embed, 4 * embed)), 'b_fc': zeros((1, 4 * embed)),
            'w_fp': nrm((4 * embed, embed)), 'b_fp': zeros((1, embed)),
        })
    return params


def _pack_params(params, heads):
    """Wrapper-side layout plumbing: stack layers, pad to lane width, cast to bf16,
    fold the 1/sqrt(D) attention scale into the Q projection."""
    E = params['wpe'].shape[-1]
    R_in = params['w_in'].shape[0]
    R_out = params['w_out'].shape[1]
    RP_in = _round_up_lane(R_in)
    RP_out = _round_up_lane(R_out)
    D = E // heads
    bf16 = jnp.bfloat16
    blocks = params['blocks']

    # 1/sqrt(D) folded into the Q columns (exact: 0.25 is a power of two here).
    qscale = jnp.concatenate(
        [jnp.full((1, E), 1.0 / math.sqrt(D), jnp.float32),
         jnp.ones((1, 2 * E), jnp.float32)], axis=1)                 # [1, 3E]

    w_in_p = jnp.zeros((RP_in, E), jnp.float32).at[:R_in].set(params['w_in'])
    w_out_p = jnp.zeros((E, RP_out), jnp.float32).at[:, :R_out].set(params['w_out'])
    b_out_p = jnp.zeros((1, RP_out), jnp.float32).at[:, :R_out].set(params['b_out'])

    return {
        'w_in': w_in_p.astype(bf16),
        'w_out': w_out_p.astype(bf16),
        'b_out': b_out_p,
        'wqkv': jnp.stack([b['w_qkv'] * qscale for b in blocks]).astype(bf16),  # [L,E,3E]
        'bqkv': jnp.stack([b['b_qkv'] * qscale for b in blocks]),               # [L,1,3E]
        'wproj': jnp.stack([b['w_proj'] for b in blocks]).astype(bf16),         # [L,E,E]
        'vec': jnp.stack([jnp.stack([b['ln1_g'], b['ln1_b'],
                                     b['ln2_g'], b['ln2_b'],
                                     b['b_proj'], b['b_fp']]) for b in blocks]),  # [L,6,1,E]
        'wfc': jnp.stack([b['w_fc'] for b in blocks]).astype(bf16),
        'bfc': jnp.stack([b['b_fc'] for b in blocks]),
        'wfp': jnp.stack([b['w_fp'] for b in blocks]).astype(bf16),
        'rp_in': RP_in, 'rp_out': RP_out,
    }


# ---------------------------------------------------------------------------
# Forward
# ---------------------------------------------------------------------------
@partial(jax.jit, static_argnames=('heads',))
def fill_mask_gpt2_forward(params, corrupted_responses, indexes=None, *, heads=4):
    B, T, R = corrupted_responses.shape
    E = params['wpe'].shape[-1]
    L = len(params['blocks'])
    H = heads

    packed = _pack_params(params, H)
    RP_in, RP_out = packed['rp_in'], packed['rp_out']

    # Type embeddings (gather = glue, plain JAX; default token id 1), folded together
    # with the positional embeddings and the response2embedding bias into one add.
    if indexes is None:
        type_emb = jnp.broadcast_to(params['wte'][1][None, None, :], (B, T, E))
    else:
        type_emb = params['wte'][indexes.astype(jnp.int32)]
    type_emb = jnp.broadcast_to(type_emb, (B, T, E)).astype(jnp.float32)
    # NOTE: assumes positions are exactly 0..T-1 and T <= wpe rows (fixed seq=10).
    tp = type_emb + (params['wpe'][:T] + params['b_in'])[None]           # [B, T, E]

    # Pad response dim to lane-dense 128 (padded W_in rows are zero, so math unchanged).
    x_pad = jnp.zeros((B, T, RP_in), jnp.float32).at[:, :, :R].set(
        corrupted_responses.astype(jnp.float32))

    # Grid choice: one batch element per grid step on multi-TC chips (v7x megacore,
    # "parallel" axis); fold the whole batch into a single step on single-TC v5e/v6e.
    n_tc = _tensorcores_per_chip()
    folded = not (n_tc > 1 and B % n_tc == 0)
    G = 1 if folded else B
    BB = B // G
    M = BB * T

    # Precomputed additive causal bias (block-diagonal across folded batch elements).
    mask = _block_causal_bias(BB, T)                                      # [M, M]

    def const_spec(a):
        nd = a.ndim
        return pl.BlockSpec(a.shape, lambda g, _nd=nd: (0,) * _nd)

    weight_args = (packed['w_in'], packed['wqkv'], packed['bqkv'], packed['wproj'],
                   packed['vec'], packed['wfc'], packed['bfc'], packed['wfp'],
                   packed['w_out'], packed['b_out'])

    if folded:
        x_in = x_pad.reshape(M, RP_in)
        tp_in = tp.reshape(M, E)
        act_specs = [pl.BlockSpec((M, RP_in), lambda g: (0, 0)),
                     pl.BlockSpec((M, E), lambda g: (0, 0))]
        out_spec = pl.BlockSpec((M, RP_out), lambda g: (0, 0))
        out_shape = jax.ShapeDtypeStruct((M, RP_out), jnp.float32)
    else:
        x_in, tp_in = x_pad, tp
        act_specs = [pl.BlockSpec((1, T, RP_in), lambda g: (g, 0, 0)),
                     pl.BlockSpec((1, T, E), lambda g: (g, 0, 0))]
        out_spec = pl.BlockSpec((1, T, RP_out), lambda g: (g, 0, 0))
        out_shape = jax.ShapeDtypeStruct((B, T, RP_out), jnp.float32)

    out_p = pl.pallas_call(
        make_fused_kernel(L, M, E, H, folded),
        out_shape=out_shape,
        grid=(G,),
        in_specs=act_specs + [const_spec(mask)] + [const_spec(a) for a in weight_args],
        out_specs=out_spec,
        compiler_params=pltpu.CompilerParams(dimension_semantics=("parallel",)),
    )(x_in, tp_in, mask, *weight_args)

    out_p = out_p.reshape(B, T, RP_out)
    return {'restored_resp': out_p[:, :, :R]}


if __name__ == "__main__":
    B, T, R = 2, 10, 100        # batch, fixed seq len (range(10)), response dim
    E, H, L, V = 64, 4, 2, 50   # small GPT-2: embed, heads, layers, vocab

    key = jax.random.PRNGKey(0)
    pkey, xkey, ikey = jax.random.split(key, 3)

    params = init_params(pkey, embed=E, layers=L, resp=R, seq=T, vocab=V)
    corrupted_responses = jax.random.normal(xkey, (B, T, R), jnp.float32)
    indexes = jax.random.randint(ikey, (B, T), 0, V)

    out = fill_mask_gpt2_forward(params, corrupted_responses, indexes, heads=H)
    restored = jax.block_until_ready(out['restored_resp'])

    assert restored.shape == (B, T, R), restored.shape
    assert bool(jnp.all(jnp.isfinite(restored)))
    print("KERNEL_OK")
</pallas_src>

<mosaic_0001>
module attributes {stable_mosaic.version = 11 : i64} {
  func.func @kernel(%arg0: i32, %arg1: memref<20x128xf32, #tpu.memory_space<vmem>>, %arg2: memref<20x64xf32, #tpu.memory_space<vmem>>, %arg3: memref<20x20xf32, #tpu.memory_space<vmem>>, %arg4: memref<128x64xbf16, #tpu.memory_space<vmem>>, %arg5: memref<2x64x192xbf16, #tpu.memory_space<vmem>>, %arg6: memref<2x1x192xf32, #tpu.memory_space<vmem>>, %arg7: memref<2x64x64xbf16, #tpu.memory_space<vmem>>, %arg8: memref<2x6x1x64xf32, #tpu.memory_space<vmem>>, %arg9: memref<2x64x256xbf16, #tpu.memory_space<vmem>>, %arg10: memref<2x1x256xf32, #tpu.memory_space<vmem>>, %arg11: memref<2x256x64xbf16, #tpu.memory_space<vmem>>, %arg12: memref<64x128xbf16, #tpu.memory_space<vmem>>, %arg13: memref<1x128xf32, #tpu.memory_space<vmem>>, %arg14: memref<20x128xf32, #tpu.memory_space<vmem>>) attributes {dimension_semantics = [#tpu.dimension_semantics<parallel>], iteration_bounds = array<i64: 1>, scalar_prefetch = 0 : i64, scratch_operands = 0 : i64, tpu.core_type = #tpu.core_type<tc>, window_params = [{pipeline_mode = #tpu.pipeline_mode<synchronous>, transform_indices = @transform_0, window_bounds = array<i64: 20, 128>}, {pipeline_mode = #tpu.pipeline_mode<synchronous>, transform_indices = @transform_1, window_bounds = array<i64: 20, 64>}, {pipeline_mode = #tpu.pipeline_mode<synchronous>, transform_indices = @transform_2, window_bounds = array<i64: 20, 20>}, {pipeline_mode = #tpu.pipeline_mode<synchronous>, transform_indices = @transform_3, window_bounds = array<i64: 128, 64>}, {pipeline_mode = #tpu.pipeline_mode<synchronous>, transform_indices = @transform_4, window_bounds = array<i64: 2, 64, 192>}, {pipeline_mode = #tpu.pipeline_mode<synchronous>, transform_indices = @transform_5, window_bounds = array<i64: 2, 1, 192>}, {pipeline_mode = #tpu.pipeline_mode<synchronous>, transform_indices = @transform_6, window_bounds = array<i64: 2, 64, 64>}, {pipeline_mode = #tpu.pipeline_mode<synchronous>, transform_indices = @transform_7, window_bounds = array<i64: 2, 6, 1, 64>}, {pipeline_mode = #tpu.pipeline_mode<synchronous>, transform_indices = @transform_8, window_bounds = array<i64: 2, 64, 256>}, {pipeline_mode = #tpu.pipeline_mode<synchronous>, transform_indices = @transform_9, window_bounds = array<i64: 2, 1, 256>}, {pipeline_mode = #tpu.pipeline_mode<synchronous>, transform_indices = @transform_10, window_bounds = array<i64: 2, 256, 64>}, {pipeline_mode = #tpu.pipeline_mode<synchronous>, transform_indices = @transform_11, window_bounds = array<i64: 64, 128>}, {pipeline_mode = #tpu.pipeline_mode<synchronous>, transform_indices = @transform_12, window_bounds = array<i64: 1, 128>}, {pipeline_mode = #tpu.pipeline_mode<synchronous>, transform_indices = @transform_13, window_bounds = array<i64: 20, 128>}]} {
    %c0 = arith.constant 0 : index
    %c0_0 = arith.constant 0 : index
    %0 = vector.load %arg3[%c0, %c0_0] : memref<20x20xf32, #tpu.memory_space<vmem>>, vector<20x20xf32>
    %c0_1 = arith.constant 0 : index
    %c0_2 = arith.constant 0 : index
    %1 = vector.load %arg1[%c0_1, %c0_2] : memref<20x128xf32, #tpu.memory_space<vmem>>, vector<20x128xf32>
    %2 = arith.truncf %1 : vector<20x128xf32> to vector<20x128xbf16>
    %c0_3 = arith.constant 0 : index
    %c0_4 = arith.constant 0 : index
    %3 = vector.load %arg4[%c0_3, %c0_4] : memref<128x64xbf16, #tpu.memory_space<vmem>>, vector<128x64xbf16>
    %cst = arith.constant dense<0.000000e+00> : vector<20x64xf32>
    %4 = tpu.matmul %2, %3, %cst {dimension_numbers = #tpu.dot_dimension_numbers<[1], [0], [0], [1], [0, 0, 1, 1], [], []>} : vector<20x128xbf16>, vector<128x64xbf16>, vector<20x64xf32> -> vector<20x64xf32>
    %c0_5 = arith.constant 0 : index
    %c0_6 = arith.constant 0 : index
    %5 = vector.load %arg2[%c0_5, %c0_6] : memref<20x64xf32, #tpu.memory_space<vmem>>, vector<20x64xf32>
    %6 = arith.addf %4, %5 : vector<20x64xf32>
    %c0_7 = arith.constant 0 : index
    %c0_8 = arith.constant 0 : index
    %c0_9 = arith.constant 0 : index
    %c0_10 = arith.constant 0 : index
    %7 = vector.load %arg8[%c0_7, %c0_8, %c0_9, %c0_10] : memref<2x6x1x64xf32, #tpu.memory_space<vmem>>, vector<1x6x1x64xf32>
    %8 = vector.shape_cast %7 : vector<1x6x1x64xf32> to vector<6x1x64xf32>
    %9 = vector.extract_strided_slice %8 {offsets = [0, 0, 0], sizes = [1, 1, 64], strides = [1, 1, 1]} : vector<6x1x64xf32> to vector<1x1x64xf32>
    %10 = vector.shape_cast %9 : vector<1x1x64xf32> to vector<1x64xf32>
    %11 = vector.extract_strided_slice %8 {offsets = [1, 0, 0], sizes = [1, 1, 64], strides = [1, 1, 1]} : vector<6x1x64xf32> to vector<1x1x64xf32>
    %12 = vector.shape_cast %11 : vector<1x1x64xf32> to vector<1x64xf32>
    %13 = vector.extract_strided_slice %8 {offsets = [2, 0, 0], sizes = [1, 1, 64], strides = [1, 1, 1]} : vector<6x1x64xf32> to vector<1x1x64xf32>
    %14 = vector.shape_cast %13 : vector<1x1x64xf32> to vector<1x64xf32>
    %15 = vector.extract_strided_slice %8 {offsets = [3, 0, 0], sizes = [1, 1, 64], strides = [1, 1, 1]} : vector<6x1x64xf32> to vector<1x1x64xf32>
    %16 = vector.shape_cast %15 : vector<1x1x64xf32> to vector<1x64xf32>
    %17 = vector.extract_strided_slice %8 {offsets = [4, 0, 0], sizes = [1, 1, 64], strides = [1, 1, 1]} : vector<6x1x64xf32> to vector<1x1x64xf32>
    %18 = vector.shape_cast %17 : vector<1x1x64xf32> to vector<1x64xf32>
    %19 = vector.extract_strided_slice %8 {offsets = [5, 0, 0], sizes = [1, 1, 64], strides = [1, 1, 1]} : vector<6x1x64xf32> to vector<1x1x64xf32>
    %20 = vector.shape_cast %19 : vector<1x1x64xf32> to vector<1x64xf32>
    %cst_11 = arith.constant dense<0.000000e+00> : vector<20xf32>
    %21 = vector.multi_reduction <add>, %6, %cst_11 [1] : vector<20x64xf32> to vector<20xf32>
    %22 = vector.shape_cast %21 : vector<20xf32> to vector<20x1xf32>
    %cst_12 = arith.constant 6.400000e+01 : f32
    %23 = vector.broadcast %cst_12 : f32 to vector<20x1xf32>
    %24 = arith.divf %22, %23 : vector<20x1xf32>
    %25 = vector.broadcast %24 : vector<20x1xf32> to vector<20x64xf32>
    %26 = arith.subf %6, %25 : vector<20x64xf32>
    %27 = arith.mulf %26, %26 : vector<20x64xf32>
    %cst_13 = arith.constant dense<0.000000e+00> : vector<20xf32>
    %28 = vector.multi_reduction <add>, %27, %cst_13 [1] : vector<20x64xf32> to vector<20xf32>
    %29 = vector.shape_cast %28 : vector<20xf32> to vector<20x1xf32>
    %cst_14 = arith.constant 6.400000e+01 : f32
    %30 = vector.broadcast %cst_14 : f32 to vector<20x1xf32>
    %31 = arith.divf %29, %30 : vector<20x1xf32>
    %cst_15 = arith.constant 9.99999974E-6 : f32
    %32 = vector.broadcast %cst_15 : f32 to vector<20x1xf32>
    %33 = arith.addf %31, %32 : vector<20x1xf32>
    %34 = math.rsqrt %33 : vector<20x1xf32>
    %35 = vector.broadcast %34 : vector<20x1xf32> to vector<20x64xf32>
    %36 = arith.mulf %26, %35 : vector<20x64xf32>
    %37 = vector.broadcast %10 : vector<1x64xf32> to vector<20x64xf32>
    %38 = arith.mulf %36, %37 : vector<20x64xf32>
    %39 = vector.broadcast %12 : vector<1x64xf32> to vector<20x64xf32>
    %40 = arith.addf %38, %39 : vector<20x64xf32>
    %41 = arith.truncf %40 : vector<20x64xf32> to vector<20x64xbf16>
    %c0_16 = arith.constant 0 : index
    %c0_17 = arith.constant 0 : index
    %c0_18 = arith.constant 0 : index
    %42 = vector.load %arg5[%c0_16, %c0_17, %c0_18] : memref<2x64x192xbf16, #tpu.memory_space<vmem>>, vector<1x64x192xbf16>
    %43 = vector.shape_cast %42 : vector<1x64x192xbf16> to vector<64x192xbf16>
    %cst_19 = arith.constant dense<0.000000e+00> : vector<20x192xf32>
    %44 = tpu.matmul %41, %43, %cst_19 {dimension_numbers = #tpu.dot_dimension_numbers<[1], [0], [0], [1], [0, 0, 1, 1], [], []>} : vector<20x64xbf16>, vector<64x192xbf16>, vector<20x192xf32> -> vector<20x192xf32>
    %c0_20 = arith.constant 0 : index
    %c0_21 = arith.constant 0 : index
    %c0_22 = arith.constant 0 : index
    %45 = vector.load %arg6[%c0_20, %c0_21, %c0_22] : memref<2x1x192xf32, #tpu.memory_space<vmem>>, vector<1x1x192xf32>
    %46 = vector.shape_cast %45 : vector<1x1x192xf32> to vector<1x192xf32>
    %47 = vector.broadcast %46 : vector<1x192xf32> to vector<20x192xf32>
    %48 = arith.addf %44, %47 : vector<20x192xf32>
    %49 = arith.truncf %48 : vector<20x192xf32> to vector<20x192xbf16>
    %50 = vector.extract_strided_slice %49 {offsets = [0, 0], sizes = [20, 16], strides = [1, 1]} : vector<20x192xbf16> to vector<20x16xbf16>
    %51 = vector.shape_cast %50 : vector<20x16xbf16> to vector<1x20x16xbf16>
    %52 = vector.extract_strided_slice %49 {offsets = [0, 16], sizes = [20, 16], strides = [1, 1]} : vector<20x192xbf16> to vector<20x16xbf16>
    %53 = vector.shape_cast %52 : vector<20x16xbf16> to vector<1x20x16xbf16>
    %54 = vector.extract_strided_slice %49 {offsets = [0, 32], sizes = [20, 16], strides = [1, 1]} : vector<20x192xbf16> to vector<20x16xbf16>
    %55 = vector.shape_cast %54 : vector<20x16xbf16> to vector<1x20x16xbf16>
    %56 = vector.extract_strided_slice %49 {offsets = [0, 48], sizes = [20, 16], strides = [1, 1]} : vector<20x192xbf16> to vector<20x16xbf16>
    %57 = vector.shape_cast %56 : vector<20x16xbf16> to vector<1x20x16xbf16>
    %58 = tpu.concatenate %51, %53, %55, %57 in 0 : vector<1x20x16xbf16>, vector<1x20x16xbf16>, vector<1x20x16xbf16>, vector<1x20x16xbf16> -> vector<4x20x16xbf16>
    %59 = vector.extract_strided_slice %49 {offsets = [0, 64], sizes = [20, 16], strides = [1, 1]} : vector<20x192xbf16> to vector<20x16xbf16>
    %60 = vector.shape_cast %59 : vector<20x16xbf16> to vector<1x20x16xbf16>
    %61 = vector.extract_strided_slice %49 {offsets = [0, 80], sizes = [20, 16], strides = [1, 1]} : vector<20x192xbf16> to vector<20x16xbf16>
    %62 = vector.shape_cast %61 : vector<20x16xbf16> to vector<1x20x16xbf16>
    %63 = vector.extract_strided_slice %49 {offsets = [0, 96], sizes = [20, 16], strides = [1, 1]} : vector<20x192xbf16> to vector<20x16xbf16>
    %64 = vector.shape_cast %63 : vector<20x16xbf16> to vector<1x20x16xbf16>
    %65 = vector.extract_strided_slice %49 {offsets = [0, 112], sizes = [20, 16], strides = [1, 1]} : vector<20x192xbf16> to vector<20x16xbf16>
    %66 = vector.shape_cast %65 : vector<20x16xbf16> to vector<1x20x16xbf16>
    %67 = tpu.concatenate %60, %62, %64, %66 in 0 : vector<1x20x16xbf16>, vector<1x20x16xbf16>, vector<1x20x16xbf16>, vector<1x20x16xbf16> -> vector<4x20x16xbf16>
    %68 = vector.extract_strided_slice %49 {offsets = [0, 128], sizes = [20, 16], strides = [1, 1]} : vector<20x192xbf16> to vector<20x16xbf16>
    %69 = vector.shape_cast %68 : vector<20x16xbf16> to vector<1x20x16xbf16>
    %70 = vector.extract_strided_slice %49 {offsets = [0, 144], sizes = [20, 16], strides = [1, 1]} : vector<20x192xbf16> to vector<20x16xbf16>
    %71 = vector.shape_cast %70 : vector<20x16xbf16> to vector<1x20x16xbf16>
    %72 = vector.extract_strided_slice %49 {offsets = [0, 160], sizes = [20, 16], strides = [1, 1]} : vector<20x192xbf16> to vector<20x16xbf16>
    %73 = vector.shape_cast %72 : vector<20x16xbf16> to vector<1x20x16xbf16>
    %74 = vector.extract_strided_slice %49 {offsets = [0, 176], sizes = [20, 16], strides = [1, 1]} : vector<20x192xbf16> to vector<20x16xbf16>
    %75 = vector.shape_cast %74 : vector<20x16xbf16> to vector<1x20x16xbf16>
    %76 = tpu.concatenate %69, %71, %73, %75 in 0 : vector<1x20x16xbf16>, vector<1x20x16xbf16>, vector<1x20x16xbf16>, vector<1x20x16xbf16> -> vector<4x20x16xbf16>
    "tpu.trace_start"() <{level = 10 : i32, message = "hmd,hnd->hmn"}> : () -> ()
    %cst_23 = arith.constant dense<0.000000e+00> : vector<4x20x20xf32>
    %77 = tpu.matmul %58, %67, %cst_23 {dimension_numbers = #tpu.dot_dimension_numbers<[2], [2], [1], [1], [0, 0, 0, 1, 1, 1], [0], [0]>} : vector<4x20x16xbf16>, vector<4x20x16xbf16>, vector<4x20x20xf32> -> vector<4x20x20xf32>
    "tpu.trace_stop"() : () -> ()
    %78 = vector.shape_cast %0 : vector<20x20xf32> to vector<1x20x20xf32>
    %79 = vector.broadcast %78 : vector<1x20x20xf32> to vector<4x20x20xf32>
    %80 = arith.addf %77, %79 : vector<4x20x20xf32>
    %cst_24 = arith.constant dense<0xFF800000> : vector<4x20xf32>
    %81 = vector.multi_reduction <maximumf>, %80, %cst_24 [2] : vector<4x20x20xf32> to vector<4x20xf32>
    %82 = vector.shape_cast %81 : vector<4x20xf32> to vector<4x20x1xf32>
    %83 = vector.broadcast %82 : vector<4x20x1xf32> to vector<4x20x20xf32>
    %84 = arith.subf %80, %83 : vector<4x20x20xf32>
    %85 = math.exp %84 : vector<4x20x20xf32>
    %cst_25 = arith.constant dense<0.000000e+00> : vector<4x20xf32>
    %86 = vector.multi_reduction <add>, %85, %cst_25 [2] : vector<4x20x20xf32> to vector<4x20xf32>
    %87 = vector.shape_cast %86 : vector<4x20xf32> to vector<4x20x1xf32>
    %88 = tpu.reciprocal %87 : vector<4x20x1xf32> -> vector<4x20x1xf32>
    %89 = vector.broadcast %88 : vector<4x20x1xf32> to vector<4x20x20xf32>
    %90 = arith.mulf %85, %89 : vector<4x20x20xf32>
    %91 = arith.truncf %90 : vector<4x20x20xf32> to vector<4x20x20xbf16>
    "tpu.trace_start"() <{level = 10 : i32, message = "hmn,hnd->hmd"}> : () -> ()
    %cst_26 = arith.constant dense<0.000000e+00> : vector<4x20x16xf32>
    %92 = tpu.matmul %91, %76, %cst_26 {dimension_numbers = #tpu.dot_dimension_numbers<[2], [1], [1], [2], [0, 0, 0, 1, 1, 2], [0], [0]>} : vector<4x20x20xbf16>, vector<4x20x16xbf16>, vector<4x20x16xf32> -> vector<4x20x16xf32>
    "tpu.trace_stop"() : () -> ()
    %93 = vector.extract_strided_slice %92 {offsets = [0, 0, 0], sizes = [1, 20, 16], strides = [1, 1, 1]} : vector<4x20x16xf32> to vector<1x20x16xf32>
    %94 = vector.shape_cast %93 : vector<1x20x16xf32> to vector<20x16xf32>
    %95 = vector.extract_strided_slice %92 {offsets = [1, 0, 0], sizes = [1, 20, 16], strides = [1, 1, 1]} : vector<4x20x16xf32> to vector<1x20x16xf32>
    %96 = vector.shape_cast %95 : vector<1x20x16xf32> to vector<20x16xf32>
    %97 = vector.extract_strided_slice %92 {offsets = [2, 0, 0], sizes = [1, 20, 16], strides = [1, 1, 1]} : vector<4x20x16xf32> to vector<1x20x16xf32>
    %98 = vector.shape_cast %97 : vector<1x20x16xf32> to vector<20x16xf32>
    %99 = vector.extract_strided_slice %92 {offsets = [3, 0, 0], sizes = [1, 20, 16], strides = [1, 1, 1]} : vector<4x20x16xf32> to vector<1x20x16xf32>
    %100 = vector.shape_cast %99 : vector<1x20x16xf32> to vector<20x16xf32>
    %101 = tpu.concatenate %94, %96, %98, %100 in 1 : vector<20x16xf32>, vector<20x16xf32>, vector<20x16xf32>, vector<20x16xf32> -> vector<20x64xf32>
    %102 = arith.truncf %101 : vector<20x64xf32> to vector<20x64xbf16>
    %c0_27 = arith.constant 0 : index
    %c0_28 = arith.constant 0 : index
    %c0_29 = arith.constant 0 : index
    %103 = vector.load %arg7[%c0_27, %c0_28, %c0_29] : memref<2x64x64xbf16, #tpu.memory_space<vmem>>, vector<1x64x64xbf16>
    %104 = vector.shape_cast %103 : vector<1x64x64xbf16> to vector<64x64xbf16>
    %cst_30 = arith.constant dense<0.000000e+00> : vector<20x64xf32>
    %105 = tpu.matmul %102, %104, %cst_30 {dimension_numbers = #tpu.dot_dimension_numbers<[1], [0], [0], [1], [0, 0, 1, 1], [], []>} : vector<20x64xbf16>, vector<64x64xbf16>, vector<20x64xf32> -> vector<20x64xf32>
    %106 = vector.broadcast %18 : vector<1x64xf32> to vector<20x64xf32>
    %107 = arith.addf %105, %106 : vector<20x64xf32>
    %108 = arith.addf %6, %107 : vector<20x64xf32>
    %cst_31 = arith.constant dense<0.000000e+00> : vector<20xf32>
    %109 = vector.multi_reduction <add>, %108, %cst_31 [1] : vector<20x64xf32> to vector<20xf32>
    %110 = vector.shape_cast %109 : vector<20xf32> to vector<20x1xf32>
    %cst_32 = arith.constant 6.400000e+01 : f32
    %111 = vector.broadcast %cst_32 : f32 to vector<20x1xf32>
    %112 = arith.divf %110, %111 : vector<20x1xf32>
    %113 = vector.broadcast %112 : vector<20x1xf32> to vector<20x64xf32>
    %114 = arith.subf %108, %113 : vector<20x64xf32>
    %115 = arith.mulf %114, %114 : vector<20x64xf32>
    %cst_33 = arith.constant dense<0.000000e+00> : vector<20xf32>
    %116 = vector.multi_reduction <add>, %115, %cst_33 [1] : vector<20x64xf32> to vector<20xf32>
    %117 = vector.shape_cast %116 : vector<20xf32> to vector<20x1xf32>
    %cst_34 = arith.constant 6.400000e+01 : f32
    %118 = vector.broadcast %cst_34 : f32 to vector<20x1xf32>
    %119 = arith.divf %117, %118 : vector<20x1xf32>
    %cst_35 = arith.constant 9.99999974E-6 : f32
    %120 = vector.broadcast %cst_35 : f32 to vector<20x1xf32>
    %121 = arith.addf %119, %120 : vector<20x1xf32>
    %122 = math.rsqrt %121 : vector<20x1xf32>
    %123 = vector.broadcast %122 : vector<20x1xf32> to vector<20x64xf32>
    %124 = arith.mulf %114, %123 : vector<20x64xf32>
    %125 = vector.broadcast %14 : vector<1x64xf32> to vector<20x64xf32>
    %126 = arith.mulf %124, %125 : vector<20x64xf32>
    %127 = vector.broadcast %16 : vector<1x64xf32> to vector<20x64xf32>
    %128 = arith.addf %126, %127 : vector<20x64xf32>
    %129 = arith.truncf %128 : vector<20x64xf32> to vector<20x64xbf16>
    %c0_36 = arith.constant 0 : index
    %c0_37 = arith.constant 0 : index
    %c0_38 = arith.constant 0 : index
    %130 = vector.load %arg9[%c0_36, %c0_37, %c0_38] : memref<2x64x256xbf16, #tpu.memory_space<vmem>>, vector<1x64x256xbf16>
    %131 = vector.shape_cast %130 : vector<1x64x256xbf16> to vector<64x256xbf16>
    %cst_39 = arith.constant dense<0.000000e+00> : vector<20x256xf32>
    %132 = tpu.matmul %129, %131, %cst_39 {dimension_numbers = #tpu.dot_dimension_numbers<[1], [0], [0], [1], [0, 0, 1, 1], [], []>} : vector<20x64xbf16>, vector<64x256xbf16>, vector<20x256xf32> -> vector<20x256xf32>
    %c0_40 = arith.constant 0 : index
    %c0_41 = arith.constant 0 : index
    %c0_42 = arith.constant 0 : index
    %133 = vector.load %arg10[%c0_40, %c0_41, %c0_42] : memref<2x1x256xf32, #tpu.memory_space<vmem>>, vector<1x1x256xf32>
    %134 = vector.shape_cast %133 : vector<1x1x256xf32> to vector<1x256xf32>
    %135 = vector.broadcast %134 : vector<1x256xf32> to vector<20x256xf32>
    %136 = arith.addf %132, %135 : vector<20x256xf32>
    %cst_43 = arith.constant 5.000000e-01 : f32
    %137 = vector.broadcast %cst_43 : f32 to vector<20x256xf32>
    %138 = arith.mulf %137, %136 : vector<20x256xf32>
    %cst_44 = arith.constant 4.471500e-02 : f32
    %139 = vector.broadcast %cst_44 : f32 to vector<20x256xf32>
    %140 = arith.mulf %139, %136 : vector<20x256xf32>
    %141 = arith.mulf %140, %136 : vector<20x256xf32>
    %142 = arith.mulf %141, %136 : vector<20x256xf32>
    %143 = arith.addf %136, %142 : vector<20x256xf32>
    %cst_45 = arith.constant 0.797884583 : f32
    %144 = vector.broadcast %cst_45 : f32 to vector<20x256xf32>
    %145 = arith.mulf %144, %143 : vector<20x256xf32>
    %146 = math.tanh %145 : vector<20x256xf32>
    %cst_46 = arith.constant 1.000000e+00 : f32
    %147 = vector.broadcast %cst_46 : f32 to vector<20x256xf32>
    %148 = arith.addf %147, %146 : vector<20x256xf32>
    %149 = arith.mulf %138, %148 : vector<20x256xf32>
    %150 = arith.truncf %149 : vector<20x256xf32> to vector<20x256xbf16>
    %c0_47 = arith.constant 0 : index
    %c0_48 = arith.constant 0 : index
    %c0_49 = arith.constant 0 : index
    %151 = vector.load %arg11[%c0_47, %c0_48, %c0_49] : memref<2x256x64xbf16, #tpu.memory_space<vmem>>, vector<1x256x64xbf16>
    %152 = vector.shape_cast %151 : vector<1x256x64xbf16> to vector<256x64xbf16>
    %cst_50 = arith.constant dense<0.000000e+00> : vector<20x64xf32>
    %153 = tpu.matmul %150, %152, %cst_50 {dimension_numbers = #tpu.dot_dimension_numbers<[1], [0], [0], [1], [0, 0, 1, 1], [], []>} : vector<20x256xbf16>, vector<256x64xbf16>, vector<20x64xf32> -> vector<20x64xf32>
    %154 = vector.broadcast %20 : vector<1x64xf32> to vector<20x64xf32>
    %155 = arith.addf %153, %154 : vector<20x64xf32>
    %156 = arith.addf %108, %155 : vector<20x64xf32>
    %c1 = arith.constant 1 : index
    %c0_51 = arith.constant 0 : index
    %c0_52 = arith.constant 0 : index
    %c0_53 = arith.constant 0 : index
    %157 = vector.load %arg8[%c1, %c0_51, %c0_52, %c0_53] : memref<2x6x1x64xf32, #tpu.memory_space<vmem>>, vector<1x6x1x64xf32>
    %158 = vector.shape_cast %157 : vector<1x6x1x64xf32> to vector<6x1x64xf32>
    %159 = vector.extract_strided_slice %158 {offsets = [0, 0, 0], sizes = [1, 1, 64], strides = [1, 1, 1]} : vector<6x1x64xf32> to vector<1x1x64xf32>
    %160 = vector.shape_cast %159 : vector<1x1x64xf32> to vector<1x64xf32>
    %161 = vector.extract_strided_slice %158 {offsets = [1, 0, 0], sizes = [1, 1, 64], strides = [1, 1, 1]} : vector<6x1x64xf32> to vector<1x1x64xf32>
    %162 = vector.shape_cast %161 : vector<1x1x64xf32> to vector<1x64xf32>
    %163 = vector.extract_strided_slice %158 {offsets = [2, 0, 0], sizes = [1, 1, 64], strides = [1, 1, 1]} : vector<6x1x64xf32> to vector<1x1x64xf32>
    %164 = vector.shape_cast %163 : vector<1x1x64xf32> to vector<1x64xf32>
    %165 = vector.extract_strided_slice %158 {offsets = [3, 0, 0], sizes = [1, 1, 64], strides = [1, 1, 1]} : vector<6x1x64xf32> to vector<1x1x64xf32>
    %166 = vector.shape_cast %165 : vector<1x1x64xf32> to vector<1x64xf32>
    %167 = vector.extract_strided_slice %158 {offsets = [4, 0, 0], sizes = [1, 1, 64], strides = [1, 1, 1]} : vector<6x1x64xf32> to vector<1x1x64xf32>
    %168 = vector.shape_cast %167 : vector<1x1x64xf32> to vector<1x64xf32>
    %169 = vector.extract_strided_slice %158 {offsets = [5, 0, 0], sizes = [1, 1, 64], strides = [1, 1, 1]} : vector<6x1x64xf32> to vector<1x1x64xf32>
    %170 = vector.shape_cast %169 : vector<1x1x64xf32> to vector<1x64xf32>
    %cst_54 = arith.constant dense<0.000000e+00> : vector<20xf32>
    %171 = vector.multi_reduction <add>, %156, %cst_54 [1] : vector<20x64xf32> to vector<20xf32>
    %172 = vector.shape_cast %171 : vector<20xf32> to vector<20x1xf32>
    %cst_55 = arith.constant 6.400000e+01 : f32
    %173 = vector.broadcast %cst_55 : f32 to vector<20x1xf32>
    %174 = arith.divf %172, %173 : vector<20x1xf32>
    %175 = vector.broadcast %174 : vector<20x1xf32> to vector<20x64xf32>
    %176 = arith.subf %156, %175 : vector<20x64xf32>
    %177 = arith.mulf %176, %176 : vector<20x64xf32>
    %cst_56 = arith.constant dense<0.000000e+00> : vector<20xf32>
    %178 = vector.multi_reduction <add>, %177, %cst_56 [1] : vector<20x64xf32> to vector<20xf32>
    %179 = vector.shape_cast %178 : vector<20xf32> to vector<20x1xf32>
    %cst_57 = arith.constant 6.400000e+01 : f32
    %180 = vector.broadcast %cst_57 : f32 to vector<20x1xf32>
    %181 = arith.divf %179, %180 : vector<20x1xf32>
    %cst_58 = arith.constant 9.99999974E-6 : f32
    %182 = vector.broadcast %cst_58 : f32 to vector<20x1xf32>
    %183 = arith.addf %181, %182 : vector<20x1xf32>
    %184 = math.rsqrt %183 : vector<20x1xf32>
    %185 = vector.broadcast %184 : vector<20x1xf32> to vector<20x64xf32>
    %186 = arith.mulf %176, %185 : vector<20x64xf32>
    %187 = vector.broadcast %160 : vector<1x64xf32> to vector<20x64xf32>
    %188 = arith.mulf %186, %187 : vector<20x64xf32>
    %189 = vector.broadcast %162 : vector<1x64xf32> to vector<20x64xf32>
    %190 = arith.addf %188, %189 : vector<20x64xf32>
    %191 = arith.truncf %190 : vector<20x64xf32> to vector<20x64xbf16>
    %c1_59 = arith.constant 1 : index
    %c0_60 = arith.constant 0 : index
    %c0_61 = arith.constant 0 : index
    %192 = vector.load %arg5[%c1_59, %c0_60, %c0_61] : memref<2x64x192xbf16, #tpu.memory_space<vmem>>, vector<1x64x192xbf16>
    %193 = vector.shape_cast %192 : vector<1x64x192xbf16> to vector<64x192xbf16>
    %cst_62 = arith.constant dense<0.000000e+00> : vector<20x192xf32>
    %194 = tpu.matmul %191, %193, %cst_62 {dimension_numbers = #tpu.dot_dimension_numbers<[1], [0], [0], [1], [0, 0, 1, 1], [], []>} : vector<20x64xbf16>, vector<64x192xbf16>, vector<20x192xf32> -> vector<20x192xf32>
    %c1_63 = arith.constant 1 : index
    %c0_64 = arith.constant 0 : index
    %c0_65 = arith.constant 0 : index
    %195 = vector.load %arg6[%c1_63, %c0_64, %c0_65] : memref<2x1x192xf32, #tpu.memory_space<vmem>>, vector<1x1x192xf32>
    %196 = vector.shape_cast %195 : vector<1x1x192xf32> to vector<1x192xf32>
    %197 = vector.broadcast %196 : vector<1x192xf32> to vector<20x192xf32>
    %198 = arith.addf %194, %197 : vector<20x192xf32>
    %199 = arith.truncf %198 : vector<20x192xf32> to vector<20x192xbf16>
    %200 = vector.extract_strided_slice %199 {offsets = [0, 0], sizes = [20, 16], strides = [1, 1]} : vector<20x192xbf16> to vector<20x16xbf16>
    %201 = vector.shape_cast %200 : vector<20x16xbf16> to vector<1x20x16xbf16>
    %202 = vector.extract_strided_slice %199 {offsets = [0, 16], sizes = [20, 16], strides = [1, 1]} : vector<20x192xbf16> to vector<20x16xbf16>
    %203 = vector.shape_cast %202 : vector<20x16xbf16> to vector<1x20x16xbf16>
    %204 = vector.extract_strided_slice %199 {offsets = [0, 32], sizes = [20, 16], strides = [1, 1]} : vector<20x192xbf16> to vector<20x16xbf16>
    %205 = vector.shape_cast %204 : vector<20x16xbf16> to vector<1x20x16xbf16>
    %206 = vector.extract_strided_slice %199 {offsets = [0, 48], sizes = [20, 16], strides = [1, 1]} : vector<20x192xbf16> to vector<20x16xbf16>
    %207 = vector.shape_cast %206 : vector<20x16xbf16> to vector<1x20x16xbf16>
    %208 = tpu.concatenate %201, %203, %205, %207 in 0 : vector<1x20x16xbf16>, vector<1x20x16xbf16>, vector<1x20x16xbf16>, vector<1x20x16xbf16> -> vector<4x20x16xbf16>
    %209 = vector.extract_strided_slice %199 {offsets = [0, 64], sizes = [20, 16], strides = [1, 1]} : vector<20x192xbf16> to vector<20x16xbf16>
    %210 = vector.shape_cast %209 : vector<20x16xbf16> to vector<1x20x16xbf16>
    %211 = vector.extract_strided_slice %199 {offsets = [0, 80], sizes = [20, 16], strides = [1, 1]} : vector<20x192xbf16> to vector<20x16xbf16>
    %212 = vector.shape_cast %211 : vector<20x16xbf16> to vector<1x20x16xbf16>
    %213 = vector.extract_strided_slice %199 {offsets = [0, 96], sizes = [20, 16], strides = [1, 1]} : vector<20x192xbf16> to vector<20x16xbf16>
    %214 = vector.shape_cast %213 : vector<20x16xbf16> to vector<1x20x16xbf16>
    %215 = vector.extract_strided_slice %199 {offsets = [0, 112], sizes = [20, 16], strides = [1, 1]} : vector<20x192xbf16> to vector<20x16xbf16>
    %216 = vector.shape_cast %215 : vector<20x16xbf16> to vector<1x20x16xbf16>
    %217 = tpu.concatenate %210, %212, %214, %216 in 0 : vector<1x20x16xbf16>, vector<1x20x16xbf16>, vector<1x20x16xbf16>, vector<1x20x16xbf16> -> vector<4x20x16xbf16>
    %218 = vector.extract_strided_slice %199 {offsets = [0, 128], sizes = [20, 16], strides = [1, 1]} : vector<20x192xbf16> to vector<20x16xbf16>
    %219 = vector.shape_cast %218 : vector<20x16xbf16> to vector<1x20x16xbf16>
    %220 = vector.extract_strided_slice %199 {offsets = [0, 144], sizes = [20, 16], strides = [1, 1]} : vector<20x192xbf16> to vector<20x16xbf16>
    %221 = vector.shape_cast %220 : vector<20x16xbf16> to vector<1x20x16xbf16>
    %222 = vector.extract_strided_slice %199 {offsets = [0, 160], sizes = [20, 16], strides = [1, 1]} : vector<20x192xbf16> to vector<20x16xbf16>
    %223 = vector.shape_cast %222 : vector<20x16xbf16> to vector<1x20x16xbf16>
    %224 = vector.extract_strided_slice %199 {offsets = [0, 176], sizes = [20, 16], strides = [1, 1]} : vector<20x192xbf16> to vector<20x16xbf16>
    %225 = vector.shape_cast %224 : vector<20x16xbf16> to vector<1x20x16xbf16>
    %226 = tpu.concatenate %219, %221, %223, %225 in 0 : vector<1x20x16xbf16>, vector<1x20x16xbf16>, vector<1x20x16xbf16>, vector<1x20x16xbf16> -> vector<4x20x16xbf16>
    "tpu.trace_start"() <{level = 10 : i32, message = "hmd,hnd->hmn"}> : () -> ()
    %cst_66 = arith.constant dense<0.000000e+00> : vector<4x20x20xf32>
    %227 = tpu.matmul %208, %217, %cst_66 {dimension_numbers = #tpu.dot_dimension_numbers<[2], [2], [1], [1], [0, 0, 0, 1, 1, 1], [0], [0]>} : vector<4x20x16xbf16>, vector<4x20x16xbf16>, vector<4x20x20xf32> -> vector<4x20x20xf32>
    "tpu.trace_stop"() : () -> ()
    %228 = vector.shape_cast %0 : vector<20x20xf32> to vector<1x20x20xf32>
    %229 = vector.broadcast %228 : vector<1x20x20xf32> to vector<4x20x20xf32>
    %230 = arith.addf %227, %229 : vector<4x20x20xf32>
    %cst_67 = arith.constant dense<0xFF800000> : vector<4x20xf32>
    %231 = vector.multi_reduction <maximumf>, %230, %cst_67 [2] : vector<4x20x20xf32> to vector<4x20xf32>
    %232 = vector.shape_cast %231 : vector<4x20xf32> to vector<4x20x1xf32>
    %233 = vector.broadcast %232 : vector<4x20x1xf32> to vector<4x20x20xf32>
    %234 = arith.subf %230, %233 : vector<4x20x20xf32>
    %235 = math.exp %234 : vector<4x20x20xf32>
    %cst_68 = arith.constant dense<0.000000e+00> : vector<4x20xf32>
    %236 = vector.multi_reduction <add>, %235, %cst_68 [2] : vector<4x20x20xf32> to vector<4x20xf32>
    %237 = vector.shape_cast %236 : vector<4x20xf32> to vector<4x20x1xf32>
    %238 = tpu.reciprocal %237 : vector<4x20x1xf32> -> vector<4x20x1xf32>
    %239 = vector.broadcast %238 : vector<4x20x1xf32> to vector<4x20x20xf32>
    %240 = arith.mulf %235, %239 : vector<4x20x20xf32>
    %241 = arith.truncf %240 : vector<4x20x20xf32> to vector<4x20x20xbf16>
    "tpu.trace_start"() <{level = 10 : i32, message = "hmn,hnd->hmd"}> : () -> ()
    %cst_69 = arith.constant dense<0.000000e+00> : vector<4x20x16xf32>
    %242 = tpu.matmul %241, %226, %cst_69 {dimension_numbers = #tpu.dot_dimension_numbers<[2], [1], [1], [2], [0, 0, 0, 1, 1, 2], [0], [0]>} : vector<4x20x20xbf16>, vector<4x20x16xbf16>, vector<4x20x16xf32> -> vector<4x20x16xf32>
    "tpu.trace_stop"() : () -> ()
    %243 = vector.extract_strided_slice %242 {offsets = [0, 0, 0], sizes = [1, 20, 16], strides = [1, 1, 1]} : vector<4x20x16xf32> to vector<1x20x16xf32>
    %244 = vector.shape_cast %243 : vector<1x20x16xf32> to vector<20x16xf32>
    %245 = vector.extract_strided_slice %242 {offsets = [1, 0, 0], sizes = [1, 20, 16], strides = [1, 1, 1]} : vector<4x20x16xf32> to vector<1x20x16xf32>
    %246 = vector.shape_cast %245 : vector<1x20x16xf32> to vector<20x16xf32>
    %247 = vector.extract_strided_slice %242 {offsets = [2, 0, 0], sizes = [1, 20, 16], strides = [1, 1, 1]} : vector<4x20x16xf32> to vector<1x20x16xf32>
    %248 = vector.shape_cast %247 : vector<1x20x16xf32> to vector<20x16xf32>
    %249 = vector.extract_strided_slice %242 {offsets = [3, 0, 0], sizes = [1, 20, 16], strides = [1, 1, 1]} : vector<4x20x16xf32> to vector<1x20x16xf32>
    %250 = vector.shape_cast %249 : vector<1x20x16xf32> to vector<20x16xf32>
    %251 = tpu.concatenate %244, %246, %248, %250 in 1 : vector<20x16xf32>, vector<20x16xf32>, vector<20x16xf32>, vector<20x16xf32> -> vector<20x64xf32>
    %252 = arith.truncf %251 : vector<20x64xf32> to vector<20x64xbf16>
    %c1_70 = arith.constant 1 : index
    %c0_71 = arith.constant 0 : index
    %c0_72 = arith.constant 0 : index
    %253 = vector.load %arg7[%c1_70, %c0_71, %c0_72] : memref<2x64x64xbf16, #tpu.memory_space<vmem>>, vector<1x64x64xbf16>
    %254 = vector.shape_cast %253 : vector<1x64x64xbf16> to vector<64x64xbf16>
    %cst_73 = arith.constant dense<0.000000e+00> : vector<20x64xf32>
    %255 = tpu.matmul %252, %254, %cst_73 {dimension_numbers = #tpu.dot_dimension_numbers<[1], [0], [0], [1], [0, 0, 1, 1], [], []>} : vector<20x64xbf16>, vector<64x64xbf16>, vector<20x64xf32> -> vector<20x64xf32>
    %256 = vector.broadcast %168 : vector<1x64xf32> to vector<20x64xf32>
    %257 = arith.addf %255, %256 : vector<20x64xf32>
    %258 = arith.addf %156, %257 : vector<20x64xf32>
    %cst_74 = arith.constant dense<0.000000e+00> : vector<20xf32>
    %259 = vector.multi_reduction <add>, %258, %cst_74 [1] : vector<20x64xf32> to vector<20xf32>
    %260 = vector.shape_cast %259 : vector<20xf32> to vector<20x1xf32>
    %cst_75 = arith.constant 6.400000e+01 : f32
    %261 = vector.broadcast %cst_75 : f32 to vector<20x1xf32>
    %262 = arith.divf %260, %261 : vector<20x1xf32>
    %263 = vector.broadcast %262 : vector<20x1xf32> to vector<20x64xf32>
    %264 = arith.subf %258, %263 : vector<20x64xf32>
    %265 = arith.mulf %264, %264 : vector<20x64xf32>
    %cst_76 = arith.constant dense<0.000000e+00> : vector<20xf32>
    %266 = vector.multi_reduction <add>, %265, %cst_76 [1] : vector<20x64xf32> to vector<20xf32>
    %267 = vector.shape_cast %266 : vector<20xf32> to vector<20x1xf32>
    %cst_77 = arith.constant 6.400000e+01 : f32
    %268 = vector.broadcast %cst_77 : f32 to vector<20x1xf32>
    %269 = arith.divf %267, %268 : vector<20x1xf32>
    %cst_78 = arith.constant 9.99999974E-6 : f32
    %270 = vector.broadcast %cst_78 : f32 to vector<20x1xf32>
    %271 = arith.addf %269, %270 : vector<20x1xf32>
    %272 = math.rsqrt %271 : vector<20x1xf32>
    %273 = vector.broadcast %272 : vector<20x1xf32> to vector<20x64xf32>
    %274 = arith.mulf %264, %273 : vector<20x64xf32>
    %275 = vector.broadcast %164 : vector<1x64xf32> to vector<20x64xf32>
    %276 = arith.mulf %274, %275 : vector<20x64xf32>
    %277 = vector.broadcast %166 : vector<1x64xf32> to vector<20x64xf32>
    %278 = arith.addf %276, %277 : vector<20x64xf32>
    %279 = arith.truncf %278 : vector<20x64xf32> to vector<20x64xbf16>
    %c1_79 = arith.constant 1 : index
    %c0_80 = arith.constant 0 : index
    %c0_81 = arith.constant 0 : index
    %280 = vector.load %arg9[%c1_79, %c0_80, %c0_81] : memref<2x64x256xbf16, #tpu.memory_space<vmem>>, vector<1x64x256xbf16>
    %281 = vector.shape_cast %280 : vector<1x64x256xbf16> to vector<64x256xbf16>
    %cst_82 = arith.constant dense<0.000000e+00> : vector<20x256xf32>
    %282 = tpu.matmul %279, %281, %cst_82 {dimension_numbers = #tpu.dot_dimension_numbers<[1], [0], [0], [1], [0, 0, 1, 1], [], []>} : vector<20x64xbf16>, vector<64x256xbf16>, vector<20x256xf32> -> vector<20x256xf32>
    %c1_83 = arith.constant 1 : index
    %c0_84 = arith.constant 0 : index
    %c0_85 = arith.constant 0 : index
    %283 = vector.load %arg10[%c1_83, %c0_84, %c0_85] : memref<2x1x256xf32, #tpu.memory_space<vmem>>, vector<1x1x256xf32>
    %284 = vector.shape_cast %283 : vector<1x1x256xf32> to vector<1x256xf32>
    %285 = vector.broadcast %284 : vector<1x256xf32> to vector<20x256xf32>
    %286 = arith.addf %282, %285 : vector<20x256xf32>
    %cst_86 = arith.constant 5.000000e-01 : f32
    %287 = vector.broadcast %cst_86 : f32 to vector<20x256xf32>
    %288 = arith.mulf %287, %286 : vector<20x256xf32>
    %cst_87 = arith.constant 4.471500e-02 : f32
    %289 = vector.broadcast %cst_87 : f32 to vector<20x256xf32>
    %290 = arith.mulf %289, %286 : vector<20x256xf32>
    %291 = arith.mulf %290, %286 : vector<20x256xf32>
    %292 = arith.mulf %291, %286 : vector<20x256xf32>
    %293 = arith.addf %286, %292 : vector<20x256xf32>
    %cst_88 = arith.constant 0.797884583 : f32
    %294 = vector.broadcast %cst_88 : f32 to vector<20x256xf32>
    %295 = arith.mulf %294, %293 : vector<20x256xf32>
    %296 = math.tanh %295 : vector<20x256xf32>
    %cst_89 = arith.constant 1.000000e+00 : f32
    %297 = vector.broadcast %cst_89 : f32 to vector<20x256xf32>
    %298 = arith.addf %297, %296 : vector<20x256xf32>
    %299 = arith.mulf %288, %298 : vector<20x256xf32>
    %300 = arith.truncf %299 : vector<20x256xf32> to vector<20x256xbf16>
    %c1_90 = arith.constant 1 : index
    %c0_91 = arith.constant 0 : index
    %c0_92 = arith.constant 0 : index
    %301 = vector.load %arg11[%c1_90, %c0_91, %c0_92] : memref<2x256x64xbf16, #tpu.memory_space<vmem>>, vector<1x256x64xbf16>
    %302 = vector.shape_cast %301 : vector<1x256x64xbf16> to vector<256x64xbf16>
    %cst_93 = arith.constant dense<0.000000e+00> : vector<20x64xf32>
    %303 = tpu.matmul %300, %302, %cst_93 {dimension_numbers = #tpu.dot_dimension_numbers<[1], [0], [0], [1], [0, 0, 1, 1], [], []>} : vector<20x256xbf16>, vector<256x64xbf16>, vector<20x64xf32> -> vector<20x64xf32>
    %304 = vector.broadcast %170 : vector<1x64xf32> to vector<20x64xf32>
    %305 = arith.addf %303, %304 : vector<20x64xf32>
    %306 = arith.addf %258, %305 : vector<20x64xf32>
    %307 = arith.truncf %306 : vector<20x64xf32> to vector<20x64xbf16>
    %c0_94 = arith.constant 0 : index
    %c0_95 = arith.constant 0 : index
    %308 = vector.load %arg12[%c0_94, %c0_95] : memref<64x128xbf16, #tpu.memory_space<vmem>>, vector<64x128xbf16>
    %cst_96 = arith.constant dense<0.000000e+00> : vector<20x128xf32>
    %309 = tpu.matmul %307, %308, %cst_96 {dimension_numbers = #tpu.dot_dimension_numbers<[1], [0], [0], [1], [0, 0, 1, 1], [], []>} : vector<20x64xbf16>, vector<64x128xbf16>, vector<20x128xf32> -> vector<20x128xf32>
    %c0_97 = arith.constant 0 : index
    %c0_98 = arith.constant 0 : index
    %310 = vector.load %arg13[%c0_97, %c0_98] : memref<1x128xf32, #tpu.memory_space<vmem>>, vector<1x128xf32>
    %311 = vector.broadcast %310 : vector<1x128xf32> to vector<20x128xf32>
    %312 = arith.addf %309, %311 : vector<20x128xf32>
    %c0_99 = arith.constant 0 : index
    %c0_100 = arith.constant 0 : index
    %313 = vector.load %arg14[%c0_99, %c0_100] : memref<20x128xf32, #tpu.memory_space<vmem>>, vector<20x128xf32>
    tpu.vector_store %arg14[%c0_99, %c0_100], %312 {strides = array<i32>} : memref<20x128xf32, #tpu.memory_space<vmem>>, vector<20x128xf32>,
    return
  }
  func.func @transform_0(%arg0: i32) -> (i32, i32) {
    %c0_i32 = arith.constant 0 : i32
    %c0_i32_0 = arith.constant 0 : i32
    %c0_i32_1 = arith.constant 0 : i32
    return %c0_i32, %c0_i32_0 : i32, i32
  }
  func.func @transform_1(%arg0: i32) -> (i32, i32) {
    %c0_i32 = arith.constant 0 : i32
    %c0_i32_0 = arith.constant 0 : i32
    %c0_i32_1 = arith.constant 0 : i32
    return %c0_i32, %c0_i32_0 : i32, i32
  }
  func.func @transform_2(%arg0: i32) -> (i32, i32) {
    %c0_i32 = arith.constant 0 : i32
    %c0_i32_0 = arith.constant 0 : i32
    %c0_i32_1 = arith.constant 0 : i32
    return %c0_i32, %c0_i32_0 : i32, i32
  }
  func.func @transform_3(%arg0: i32) -> (i32, i32) {
    %c0_i32 = arith.constant 0 : i32
    %c0_i32_0 = arith.constant 0 : i32
    %c0_i32_1 = arith.constant 0 : i32
    return %c0_i32, %c0_i32_0 : i32, i32
  }
  func.func @transform_4(%arg0: i32) -> (i32, i32, i32) {
    %c0_i32 = arith.constant 0 : i32
    %c0_i32_0 = arith.constant 0 : i32
    %c0_i32_1 = arith.constant 0 : i32
    %c0_i32_2 = arith.constant 0 : i32
    return %c0_i32, %c0_i32_0, %c0_i32_1 : i32, i32, i32
  }
  func.func @transform_5(%arg0: i32) -> (i32, i32, i32) {
    %c0_i32 = arith.constant 0 : i32
    %c0_i32_0 = arith.constant 0 : i32
    %c0_i32_1 = arith.constant 0 : i32
    %c0_i32_2 = arith.constant 0 : i32
    return %c0_i32, %c0_i32_0, %c0_i32_1 : i32, i32, i32
  }
  func.func @transform_6(%arg0: i32) -> (i32, i32, i32) {
    %c0_i32 = arith.constant 0 : i32
    %c0_i32_0 = arith.constant 0 : i32
    %c0_i32_1 = arith.constant 0 : i32
    %c0_i32_2 = arith.constant 0 : i32
    return %c0_i32, %c0_i32_0, %c0_i32_1 : i32, i32, i32
  }
  func.func @transform_7(%arg0: i32) -> (i32, i32, i32, i32) {
    %c0_i32 = arith.constant 0 : i32
    %c0_i32_0 = arith.constant 0 : i32
    %c0_i32_1 = arith.constant 0 : i32
    %c0_i32_2 = arith.constant 0 : i32
    %c0_i32_3 = arith.constant 0 : i32
    return %c0_i32, %c0_i32_0, %c0_i32_1, %c0_i32_2 : i32, i32, i32, i32
  }
  func.func @transform_8(%arg0: i32) -> (i32, i32, i32) {
    %c0_i32 = arith.constant 0 : i32
    %c0_i32_0 = arith.constant 0 : i32
    %c0_i32_1 = arith.constant 0 : i32
    %c0_i32_2 = arith.constant 0 : i32
    return %c0_i32, %c0_i32_0, %c0_i32_1 : i32, i32, i32
  }
  func.func @transform_9(%arg0: i32) -> (i32, i32, i32) {
    %c0_i32 = arith.constant 0 : i32
    %c0_i32_0 = arith.constant 0 : i32
    %c0_i32_1 = arith.constant 0 : i32
    %c0_i32_2 = arith.constant 0 : i32
    return %c0_i32, %c0_i32_0, %c0_i32_1 : i32, i32, i32
  }
  func.func @transform_10(%arg0: i32) -> (i32, i32, i32) {
    %c0_i32 = arith.constant 0 : i32
    %c0_i32_0 = arith.constant 0 : i32
    %c0_i32_1 = arith.constant 0 : i32
    %c0_i32_2 = arith.constant 0 : i32
    return %c0_i32, %c0_i32_0, %c0_i32_1 : i32, i32, i32
  }
  func.func @transform_11(%arg0: i32) -> (i32, i32) {
    %c0_i32 = arith.constant 0 : i32
    %c0_i32_0 = arith.constant 0 : i32
    %c0_i32_1 = arith.constant 0 : i32
    return %c0_i32, %c0_i32_0 : i32, i32
  }
  func.func @transform_12(%arg0: i32) -> (i32, i32) {
    %c0_i32 = arith.constant 0 : i32
    %c0_i32_0 = arith.constant 0 : i32
    %c0_i32_1 = arith.constant 0 : i32
    return %c0_i32, %c0_i32_0 : i32, i32
  }
  func.func @transform_13(%arg0: i32) -> (i32, i32) {
    %c0_i32 = arith.constant 0 : i32
    %c0_i32_0 = arith.constant 0 : i32
    %c0_i32_1 = arith.constant 0 : i32
    return %c0_i32, %c0_i32_0 : i32, i32
  }
}

</mosaic_0001>

<llo_original>
// kernel: fill_mask_gpt2_forward.1
$region0: #{fill_mask_gpt2_forward.1}
  #allocation0 [shape = 'u32[]', space=smem, size = 0x4, offset = 0x4, fixed_abs, tag = 'smem constant byte address 0x4 - core index']
  #allocation1 [shape = 'u32[144,128]{1,0:T(1,128)}', space=vmem, size = 0x12000, scoped, tag = 'internal scratch']
  %s0 = inlined_call_operand.vmem [shape: f32[20,128], index: 0, kind: input, shape index: {}]
  %s1 = inlined_call_operand.vmem [shape: f32[20,64], index: 1, kind: input, shape index: {}]
  %s2 = inlined_call_operand.vmem [shape: f32[20,20], index: 2, kind: input, shape index: {}]
  %s3 = inlined_call_operand.vmem [shape: bf16[128,64], index: 3, kind: input, shape index: {}]
  %s4 = inlined_call_operand.vmem [shape: bf16[2,64,192], index: 4, kind: input, shape index: {}]
  %s5 = inlined_call_operand.vmem [shape: f32[2,1,192], index: 5, kind: input, shape index: {}]
  %s6 = inlined_call_operand.vmem [shape: bf16[2,64,64], index: 6, kind: input, shape index: {}]
  %s7 = inlined_call_operand.vmem [shape: f32[2,6,1,64], index: 7, kind: input, shape index: {}]
  %s8 = inlined_call_operand.vmem [shape: bf16[2,64,256], index: 8, kind: input, shape index: {}]
  %s9 = inlined_call_operand.vmem [shape: f32[2,1,256], index: 9, kind: input, shape index: {}]
  %s10 = inlined_call_operand.vmem [shape: bf16[2,256,64], index: 10, kind: input, shape index: {}]
  %s11 = inlined_call_operand.vmem [shape: bf16[64,128], index: 11, kind: input, shape index: {}]
  %s12 = inlined_call_operand.vmem [shape: f32[1,128], index: 12, kind: input, shape index: {}]
  %s13 = inlined_call_operand.vmem [shape: f32[20,128], index: 13, kind: output, shape index: {}]
  %s14 = sld [smem:[#allocation0]]
  $region62: #{fill_mask_gpt2_forward.1} parent=0
    _
  %s16 = ssub.s32 1, %s14
  %s17 = scalar_select 0, %s16, %s14
  // Predicated region
  $region2: #{fill_mask_gpt2_forward.1} parent=0 // pred_check
    _
  $region3: #{fill_mask_gpt2_forward.1} parent=0 // pred_check_branch
    %19 = sbr.rel (0) target = $region5
  $region4: #{fill_mask_gpt2_forward.1} parent=0 // pred_region
    _
  $region5: #{fill_mask_gpt2_forward.1} parent=0 // pred_fallthru
    _
  // Predicated region
  $region6: #{fill_mask_gpt2_forward.1} parent=0 // pred_check
    _
  $region7: #{fill_mask_gpt2_forward.1} parent=0 // pred_check_branch
    %21 = sbr.rel (0) target = $region9
  $region8: #{fill_mask_gpt2_forward.1} parent=0 // pred_region
    _
  $region9: #{fill_mask_gpt2_forward.1} parent=0 // pred_fallthru
    _
  // Predicated region
  $region10: #{fill_mask_gpt2_forward.1} parent=0 // pred_check
    _
  $region11: #{fill_mask_gpt2_forward.1} parent=0 // pred_check_branch
    %23 = sbr.rel (0) target = $region13
  $region12: #{fill_mask_gpt2_forward.1} parent=0 // pred_region
    _
  $region13: #{fill_mask_gpt2_forward.1} parent=0 // pred_fallthru
    _
  // Predicated region
  $region14: #{fill_mask_gpt2_forward.1} parent=0 // pred_check
    _
  $region15: #{fill_mask_gpt2_forward.1} parent=0 // pred_check_branch
    %25 = sbr.rel (0) target = $region17
  $region16: #{fill_mask_gpt2_forward.1} parent=0 // pred_region
    _
  $region17: #{fill_mask_gpt2_forward.1} parent=0 // pred_fallthru
    _
  // Predicated region
  $region18: #{fill_mask_gpt2_forward.1} parent=0 // pred_check
    _
  $region19: #{fill_mask_gpt2_forward.1} parent=0 // pred_check_branch
    %27 = sbr.rel (0) target = $region21
  $region20: #{fill_mask_gpt2_forward.1} parent=0 // pred_region
    _
  $region21: #{fill_mask_gpt2_forward.1} parent=0 // pred_fallthru
    _
  // Predicated region
  $region22: #{fill_mask_gpt2_forward.1} parent=0 // pred_check
    _
  $region23: #{fill_mask_gpt2_forward.1} parent=0 // pred_check_branch
    %29 = sbr.rel (0) target = $region25
  $region24: #{fill_mask_gpt2_forward.1} parent=0 // pred_region
    _
  $region25: #{fill_mask_gpt2_forward.1} parent=0 // pred_fallthru
    _
  // Predicated region
  $region26: #{fill_mask_gpt2_forward.1} parent=0 // pred_check
    _
  $region27: #{fill_mask_gpt2_forward.1} parent=0 // pred_check_branch
    %31 = sbr.rel (0) target = $region29
  $region28: #{fill_mask_gpt2_forward.1} parent=0 // pred_region
    _
  $region29: #{fill_mask_gpt2_forward.1} parent=0 // pred_fallthru
    _
  // Predicated region
  $region30: #{fill_mask_gpt2_forward.1} parent=0 // pred_check
    _
  $region31: #{fill_mask_gpt2_forward.1} parent=0 // pred_check_branch
    %33 = sbr.rel (0) target = $region33
  $region32: #{fill_mask_gpt2_forward.1} parent=0 // pred_region
    _
  $region33: #{fill_mask_gpt2_forward.1} parent=0 // pred_fallthru
    _
  // Predicated region
  $region34: #{fill_mask_gpt2_forward.1} parent=0 // pred_check
    _
  $region35: #{fill_mask_gpt2_forward.1} parent=0 // pred_check_branch
    %35 = sbr.rel (0) target = $region37
  $region36: #{fill_mask_gpt2_forward.1} parent=0 // pred_region
    _
  $region37: #{fill_mask_gpt2_forward.1} parent=0 // pred_fallthru
    _
  // Predicated region
  $region38: #{fill_mask_gpt2_forward.1} parent=0 // pred_check
    _
  $region39: #{fill_mask_gpt2_forward.1} parent=0 // pred_check_branch
    %37 = sbr.rel (0) target = $region41
  $region40: #{fill_mask_gpt2_forward.1} parent=0 // pred_region
    _
  $region41: #{fill_mask_gpt2_forward.1} parent=0 // pred_fallthru
    _
  // Predicated region
  $region42: #{fill_mask_gpt2_forward.1} parent=0 // pred_check
    _
  $region43: #{fill_mask_gpt2_forward.1} parent=0 // pred_check_branch
    %39 = sbr.rel (0) target = $region45
  $region44: #{fill_mask_gpt2_forward.1} parent=0 // pred_region
    _
  $region45: #{fill_mask_gpt2_forward.1} parent=0 // pred_fallthru
    _
  // Predicated region
  $region46: #{fill_mask_gpt2_forward.1} parent=0 // pred_check
    _
  $region47: #{fill_mask_gpt2_forward.1} parent=0 // pred_check_branch
    %41 = sbr.rel (0) target = $region49
  $region48: #{fill_mask_gpt2_forward.1} parent=0 // pred_region
    _
  $region49: #{fill_mask_gpt2_forward.1} parent=0 // pred_fallthru
    _
  // Predicated region
  $region50: #{fill_mask_gpt2_forward.1} parent=0 // pred_check
    _
  $region51: #{fill_mask_gpt2_forward.1} parent=0 // pred_check_branch
    %43 = sbr.rel (0) target = $region53
  $region52: #{fill_mask_gpt2_forward.1} parent=0 // pred_region
    _
  $region53: #{fill_mask_gpt2_forward.1} parent=0 // pred_fallthru
    _
  %v45 = vld [vmem:[%s2] sm:$0xff]
  %v46 = vld [vmem:[%s2 + $0x8] sm:$0xff]
  %v47 = vld [vmem:[%s2 + $0x10] sm:$0xf]
  %v48 = vld [vmem:[%s0] sm:$0xff]
  %v49 = vld [vmem:[%s0 + $0x8] sm:$0xff]
  %v50 = vld [vmem:[%s0 + $0x10] sm:$0xf]
  %v51 = vpack.c.bf16 %v49, %v48
  %v52 = vpack.c.bf16 %v50, %v50
  %v53 = vld [vmem:[%s3] sm:$0xf]
  %v54 = vld [vmem:[%s3 + $0x4] sm:$0xf]
  %v55 = vld [vmem:[%s3 + $0x8] sm:$0xf]
  %v56 = vld [vmem:[%s3 + $0xc] sm:$0xf]
  %v57 = vld [vmem:[%s3 + $0x10] sm:$0xf]
  %v58 = vld [vmem:[%s3 + $0x14] sm:$0xf]
  %v59 = vld [vmem:[%s3 + $0x18] sm:$0xf]
  %v60 = vld [vmem:[%s3 + $0x1c] sm:$0xf]
  %v61 = vld [vmem:[%s3 + $0x20] sm:$0xf]
  %v62 = vld [vmem:[%s3 + $0x24] sm:$0xf]
  %v63 = vld [vmem:[%s3 + $0x28] sm:$0xf]
  %v64 = vld [vmem:[%s3 + $0x2c] sm:$0xf]
  %v65 = vld [vmem:[%s3 + $0x30] sm:$0xf]
  %v66 = vld [vmem:[%s3 + $0x34] sm:$0xf]
  %v67 = vld [vmem:[%s3 + $0x38] sm:$0xf]
  %v68 = vld [vmem:[%s3 + $0x3c] sm:$0xf]
  %v69 = vld [vmem:[%s1] sm:$0xff]
  %v70 = vld [vmem:[%s1 + $0x8] sm:$0xff]
  %v71 = vld [vmem:[%s1 + $0x10] sm:$0xf]
  %v88 = vunpack.c.l.b16 %v53
  %v89 = vunpack.c.l.b16 %v54
  %v90 = vunpack.c.l.b16 %v55
  %v91 = vunpack.c.l.b16 %v56
  %v92 = vunpack.c.l.b16 %v57
  %v93 = vunpack.c.l.b16 %v58
  %v94 = vunpack.c.l.b16 %v59
  %v95 = vunpack.c.l.b16 %v60
  %v96 = vunpack.c.l.b16 %v61
  %v97 = vunpack.c.l.b16 %v62
  %v98 = vunpack.c.l.b16 %v63
  %v99 = vunpack.c.l.b16 %v64
  %v100 = vunpack.c.l.b16 %v65
  %v101 = vunpack.c.l.b16 %v66
  %v102 = vunpack.c.l.b16 %v67
  %v103 = vunpack.c.l.b16 %v68
  %v104 = vpack.c.b16 %v89, %v88
  %v105 = vpack.c.b16 %v91, %v90
  %v106 = vpack.c.b16 %v93, %v92
  %v107 = vpack.c.b16 %v95, %v94
  %v108 = vpack.c.b16 %v97, %v96
  %v109 = vpack.c.b16 %v99, %v98
  %v110 = vpack.c.b16 %v101, %v100
  %v111 = vpack.c.b16 %v103, %v102
  %120 = vmatprep.subr.bf16.mxu0 0
  %121 = vmatpush1.bf16.msra.mxu0 %v104
  %122 = vmatprep.subr.bf16.mxu0 0
  %123 = vmatpush1.bf16.msra.mxu0 %v105
  %124 = vmatprep.subr.bf16.mxu0 0
  %125 = vmatpush1.bf16.msra.mxu0 %v106
  %126 = vmatprep.subr.bf16.mxu0 0
  %127 = vmatpush1.bf16.msra.mxu0 %v107
  %128 = vmatprep.subr.bf16.mxu0 0
  %129 = vmatpush1.bf16.msra.mxu0 %v108
  %130 = vmatprep.subr.bf16.mxu0 0
  %131 = vmatpush1.bf16.msra.mxu0 %v109
  %132 = vmatprep.subr.bf16.mxu0 0
  %133 = vmatpush1.bf16.msra.mxu0 %v110
  %134 = vmatprep.subr.bf16.mxu0 0
  %135 = vmatpush1.bf16.msra.mxu0 %v111
  %136 = vmatprep.subr.bf16.mxu0 0
  %137 = vmatpush1.bf16.msra.mxu0 0
  %138 = vmatprep.subr.bf16.mxu0 0
  %139 = vmatpush1.bf16.msra.mxu0 0
  %140 = vmatprep.subr.bf16.mxu0 0
  %141 = vmatpush1.bf16.msra.mxu0 0
  %142 = vmatprep.subr.bf16.mxu0 0
  %143 = vmatpush1.bf16.msra.mxu0 0
  %144 = vmatprep.subr.bf16.mxu0 0
  %145 = vmatpush1.bf16.msra.mxu0 0
  %146 = vmatprep.subr.bf16.mxu0 0
  %147 = vmatpush1.bf16.msra.mxu0 0
  %148 = vmatprep.subr.bf16.mxu0 0
  %149 = vmatpush1.bf16.msra.mxu0 0
  %150 = vmatprep.subr.bf16.mxu0 0
  %151 = vmatpush1.bf16.msra.mxu0 0
  %152 = vmatprep.mubr.bf16.mxu0 0
  %153 = vmatmul.mubr.bf16.gmra.mrb[0].mxu0 %v51
  %v154 = vpop.f32.mrb[0].mxu0
  %v155 = vadd.f32 %v69, %v154
  %v156 = vpop.f32.mrb[0].mxu0
  %v157 = vpop.f32.mrb[0].mxu0
  %v158 = vadd.f32 %v70, %v157
  %v159 = vpop.f32.mrb[0].mxu0
  %160 = vmatprep.mubr.bf16.mxu0 0
  %161 = vmatmul.mubr.bf16.gmra.mrb[0].mxu0 %v52
  %v162 = vpop.f32.mrb[0].mxu0
  %v163 = vadd.f32 %v71, %v162
  %v164 = vpop.f32.mrb[0].mxu0
  %v165 = vpop.f32.mrb[0].mxu0
  %v166 = vpop.f32.mrb[0].mxu0
  %167 = vdwg.mxu0
  %v168 = vld [vmem:[%s7] sm:$0x1]
  %v169 = vld [vmem:[%s7 + $0x1] sm:$0x1]
  %v170 = vld [vmem:[%s7 + $0x2] sm:$0x1]
  %v171 = vld [vmem:[%s7 + $0x3] sm:$0x1]
  %v172 = vld [vmem:[%s7 + $0x4] sm:$0x1]
  %v173 = vld [vmem:[%s7 + $0x5] sm:$0x1]
  %vm174 = vcmask 523264
  %v175 = vsel %vm174, %v155, 0.0
  %176 = vadd.xlane.f32.xlu0 %v175
  %v177 = vpop.xlane.xlu0 %176
  %v178 = vsel %vm174, %v158, 0.0
  %179 = vadd.xlane.f32.xlu0 %v178
  %v180 = vpop.xlane.xlu0 %179
  %vm181 = vcmask 519168
  %v182 = vsel %vm181, %v163, 0.0
  %183 = vadd.xlane.f32.xlu0 %v182
  %v184 = vpop.xlane.xlu0 %183
  %v185 = vrcp.pop 64.0
  %v186 = vmul.f32 %v177, %v185
  %v187 = vmul.f32 %v180, %v185
  %v188 = vmul.f32 %v184, %v185
  %v189 = vsub.f32 %v155, %v186
  %v190 = vsub.f32 %v158, %v187
  %v191 = vsub.f32 %v163, %v188
  %v192 = vmul.f32 %v189, %v189
  %v193 = vmul.f32 %v190, %v190
  %v194 = vmul.f32 %v191, %v191
  %v195 = vsel %vm174, %v192, 0.0
  %196 = vadd.xlane.f32.xlu0 %v195
  %v197 = vpop.xlane.xlu0 %196
  %v198 = vsel %vm174, %v193, 0.0
  %199 = vadd.xlane.f32.xlu0 %v198
  %v200 = vpop.xlane.xlu0 %199
  %v201 = vsel %vm181, %v194, 0.0
  %202 = vadd.xlane.f32.xlu0 %v201
  %v203 = vpop.xlane.xlu0 %202
  %v204 = vmul.f32 %v197, %v185
  %v205 = vmul.f32 %v200, %v185
  %v206 = vmul.f32 %v203, %v185
  %v207 = vadd.f32 %v204, 1e-05
  %v208 = vadd.f32 %v205, 1e-05
  %v209 = vadd.f32 %v206, 1e-05
  %v210 = vrsqrt.pop %v207
  %v211 = vrsqrt.pop %v208
  %v212 = vrsqrt.pop %v209
  %v213 = vmul.f32 %v189, %v210
  %v214 = vmul.f32 %v190, %v211
  %v215 = vmul.f32 %v191, %v212
  %v217 = vlaneseq
  %v218 = vshrl.u32 %v217, 7
  %v219 = vsub.s32 0, %v218
  %v220 = vrot.slane %v168, %v219
  %v222 = vmul.f32 %v213, %v220
  %v223 = vmul.f32 %v214, %v220
  %v224 = vmul.f32 %v215, %v220
  %v226 = vlaneseq
  %v227 = vshrl.u32 %v226, 7
  %v228 = vsub.s32 0, %v227
  %v229 = vrot.slane %v169, %v228
  %v231 = vadd.f32 %v222, %v229
  %v232 = vadd.f32 %v223, %v229
  %v233 = vadd.f32 %v224, %v229
  %v234 = vpack.c.bf16 %v232, %v231
  %v235 = vpack.c.bf16 %v233, %v233
  %v236 = vld [vmem:[%s4] sm:$0xff]
  %v237 = vld [vmem:[%s4 + $0x8] sm:$0xff]
  %v238 = vld [vmem:[%s4 + $0x10] sm:$0xff]
  %v239 = vld [vmem:[%s4 + $0x18] sm:$0xff]
  %v240 = vld [vmem:[%s4 + $0x20] sm:$0xff]
  %v241 = vld [vmem:[%s4 + $0x28] sm:$0xff]
  %v242 = vld [vmem:[%s4 + $0x30] sm:$0xff]
  %v243 = vld [vmem:[%s4 + $0x38] sm:$0xff]
  %v244 = vld [vmem:[%s5] sm:$0x3]
  %v246 = vlaneseq
  %v247 = vshrl.u32 %v246, 7
  %v248 = vsub.s32 0, %v247
  %v249 = vrot.slane %v244, %v248
  %v250 = vlaneseq
  %v251 = vshrl.u32 %v250, 7
  %v252 = vsub.s32 1, %v251
  %v253 = vrot.slane %v244, %v252
  %v264 = vunpack.c.l.b16 %v236
  %v265 = vunpack.c.h.b16 %v236
  %v266 = vunpack.c.l.b16 %v237
  %v267 = vunpack.c.h.b16 %v237
  %v268 = vunpack.c.l.b16 %v238
  %v269 = vunpack.c.h.b16 %v238
  %v270 = vunpack.c.l.b16 %v239
  %v271 = vunpack.c.h.b16 %v239
  %v272 = vunpack.c.l.b16 %v240
  %v273 = vunpack.c.h.b16 %v240
  %v274 = vunpack.c.l.b16 %v241
  %v275 = vunpack.c.h.b16 %v241
  %v276 = vunpack.c.l.b16 %v242
  %v277 = vunpack.c.h.b16 %v242
  %v278 = vunpack.c.l.b16 %v243
  %v279 = vunpack.c.h.b16 %v243
  %v280 = vpack.c.b16 %v266, %v264
  %v281 = vpack.c.b16 %v267, %v265
  %v282 = vpack.c.b16 %v270, %v268
  %v283 = vpack.c.b16 %v271, %v269
  %v284 = vpack.c.b16 %v274, %v272
  %v285 = vpack.c.b16 %v275, %v273
  %v286 = vpack.c.b16 %v278, %v276
  %v287 = vpack.c.b16 %v279, %v277
  %v297 = vsel %vm174, %v234, 0
  %v300 = vsel %vm174, %v235, 0
  %302 = vmatprep.subr.bf16.mxu0 %v281
  %303 = vmatpush1.bf16.msra.mxu0 %v280
  %304 = vmatprep.subr.bf16.mxu0 %v283
  %305 = vmatpush1.bf16.msra.mxu0 %v282
  %306 = vmatprep.subr.bf16.mxu0 %v285
  %307 = vmatpush1.bf16.msra.mxu0 %v284
  %308 = vmatprep.subr.bf16.mxu0 %v287
  %309 = vmatpush1.bf16.msra.mxu0 %v286
  %310 = vmatprep.subr.bf16.mxu0 0
  %311 = vmatpush1.bf16.msra.mxu0 0
  %312 = vmatprep.subr.bf16.mxu0 0
  %313 = vmatpush1.bf16.msra.mxu0 0
  %314 = vmatprep.subr.bf16.mxu0 0
  %315 = vmatpush1.bf16.msra.mxu0 0
  %316 = vmatprep.subr.bf16.mxu0 0
  %317 = vmatpush1.bf16.msra.mxu0 0
  %318 = vmatprep.subr.bf16.mxu0 0
  %319 = vmatpush1.bf16.msra.mxu0 0
  %320 = vmatprep.subr.bf16.mxu0 0
  %321 = vmatpush1.bf16.msra.mxu0 0
  %322 = vmatprep.subr.bf16.mxu0 0
  %323 = vmatpush1.bf16.msra.mxu0 0
  %324 = vmatprep.subr.bf16.mxu0 0
  %325 = vmatpush1.bf16.msra.mxu0 0
  %326 = vmatprep.subr.bf16.mxu0 0
  %327 = vmatpush1.bf16.msra.mxu0 0
  %328 = vmatprep.subr.bf16.mxu0 0
  %329 = vmatpush1.bf16.msra.mxu0 0
  %330 = vmatprep.subr.bf16.mxu0 0
  %331 = vmatpush1.bf16.msra.mxu0 0
  %332 = vmatprep.subr.bf16.mxu0 0
  %333 = vmatpush1.bf16.msra.mxu0 0
  %334 = vmatprep.mubr.bf16.mxu0 0
  %335 = vmatmul.mubr.bf16.gmra.mrb[0].mxu0 %v297
  %v336 = vpop.f32.mrb[0].mxu0
  %v337 = vadd.f32 %v249, %v336
  %v338 = vpop.f32.mrb[0].mxu0
  %v339 = vadd.f32 %v253, %v338
  %v340 = vpop.f32.mrb[0].mxu0
  %v341 = vadd.f32 %v249, %v340
  %v342 = vpop.f32.mrb[0].mxu0
  %v343 = vadd.f32 %v253, %v342
  %344 = vmatprep.mubr.bf16.mxu0 0
  %345 = vmatmul.mubr.bf16.gmra.mrb[0].mxu0 %v300
  %v346 = vpop.f32.mrb[0].mxu0
  %v347 = vadd.f32 %v249, %v346
  %v348 = vpop.f32.mrb[0].mxu0
  %v349 = vadd.f32 %v253, %v348
  %v350 = vpop.f32.mrb[0].mxu0
  %v351 = vpop.f32.mrb[0].mxu0
  %352 = vdwg.mxu0
  %v353 = vpack.c.bf16 %v341, %v337
  %v354 = vpack.c.bf16 %v343, %v339
  %v355 = vpack.c.bf16 %v347, %v347
  %v356 = vpack.c.bf16 %v349, %v349
  %359 = vrot.lane.b32.xlu0 %v353, 112
  %v360 = vpop.permute.xlu0 %359
  %361 = vrot.lane.b32.xlu0 %v355, 112
  %v362 = vpop.permute.xlu0 %361
  %363 = vrot.lane.b32.xlu0 %v353, 96
  %v364 = vpop.permute.xlu0 %363
  %365 = vrot.lane.b32.xlu0 %v355, 96
  %v366 = vpop.permute.xlu0 %365
  %367 = vrot.lane.b32.xlu0 %v353, 80
  %v368 = vpop.permute.xlu0 %367
  %369 = vrot.lane.b32.xlu0 %v355, 80
  %v370 = vpop.permute.xlu0 %369
  %373 = vrot.lane.b32.xlu0 %v354, 112
  %v374 = vpop.permute.xlu0 %373
  %375 = vrot.lane.b32.xlu0 %v356, 112
  %v376 = vpop.permute.xlu0 %375
  %378 = vrot.lane.b32.xlu0 %v354, 96
  %v379 = vpop.permute.xlu0 %378
  %380 = vrot.lane.b32.xlu0 %v356, 96
  %v381 = vpop.permute.xlu0 %380
  %383 = vrot.lane.b32.xlu0 %v354, 80
  %v384 = vpop.permute.xlu0 %383
  %385 = vrot.lane.b32.xlu0 %v356, 80
  %v386 = vpop.permute.xlu0 %385
  %388 = vrot.lane.b32.xlu0 %v353, 64
  %v389 = vpop.permute.xlu0 %388
  %390 = vrot.lane.b32.xlu0 %v355, 64
  %v391 = vpop.permute.xlu0 %390
  %vm392 = vcmask 130048
  %v394 = vsel %vm392, %v353, 0
  %v397 = vsel %vm392, %v355, 0
  %v400 = vsel %vm392, %v389, 0
  %v403 = vsel %vm392, %v391, 0
  %405 = vmatprep.subr.bf16.mxu0 0
  %406 = vmatpush1.bf16.xpose.msra.mxu0 %v400
  %407 = vmatprep.subr.bf16.mxu0 0
  %408 = vmatpush1.bf16.xpose.msra.mxu0 %v403
  %409 = vmatprep.subr.bf16.mxu0 0
  %410 = vmatpush1.bf16.xpose.msra.mxu0 0
  %411 = vmatprep.subr.bf16.mxu0 0
  %412 = vmatpush1.bf16.xpose.msra.mxu0 0
  %413 = vmatprep.subr.bf16.mxu0 0
  %414 = vmatpush1.bf16.xpose.msra.mxu0 0
  %415 = vmatprep.subr.bf16.mxu0 0
  %416 = vmatpush1.bf16.xpose.msra.mxu0 0
  %417 = vmatprep.subr.bf16.mxu0 0
  %418 = vmatpush1.bf16.xpose.msra.mxu0 0
  %419 = vmatprep.subr.bf16.mxu0 0
  %420 = vmatpush1.bf16.xpose.msra.mxu0 0
  %421 = vmatprep.subr.bf16.mxu0 0
  %422 = vmatpush1.bf16.xpose.msra.mxu0 0
  %423 = vmatprep.subr.bf16.mxu0 0
  %424 = vmatpush1.bf16.xpose.msra.mxu0 0
  %425 = vmatprep.subr.bf16.mxu0 0
  %426 = vmatpush1.bf16.xpose.msra.mxu0 0
  %427 = vmatprep.subr.bf16.mxu0 0
  %428 = vmatpush1.bf16.xpose.msra.mxu0 0
  %429 = vmatprep.subr.bf16.mxu0 0
  %430 = vmatpush1.bf16.xpose.msra.mxu0 0
  %431 = vmatprep.subr.bf16.mxu0 0
  %432 = vmatpush1.bf16.xpose.msra.mxu0 0
  %433 = vmatprep.subr.bf16.mxu0 0
  %434 = vmatpush1.bf16.xpose.msra.mxu0 0
  %435 = vmatprep.subr.bf16.mxu0 0
  %436 = vmatpush1.bf16.xpose.msra.mxu0 0
  %437 = vmatprep.mubr.bf16.mxu0 0
  %438 = vmatmul.mubr.bf16.gmra.mrb[0].mxu0 %v394
  %v439 = vpop.f32.mrb[0].mxu0
  %v440 = vadd.f32 %v45, %v439
  %v441 = vpop.f32.mrb[0].mxu0
  %v442 = vpop.f32.mrb[0].mxu0
  %v443 = vadd.f32 %v46, %v442
  %v444 = vpop.f32.mrb[0].mxu0
  %445 = vmatprep.mubr.bf16.mxu0 0
  %446 = vmatmul.mubr.bf16.gmra.mrb[0].mxu0 %v397
  %v447 = vpop.f32.mrb[0].mxu0
  %v448 = vadd.f32 %v47, %v447
  %v449 = vpop.f32.mrb[0].mxu0
  %v450 = vpop.f32.mrb[0].mxu0
  %v451 = vpop.f32.mrb[0].mxu0
  %452 = vdwg.mxu0
  %453 = vrot.lane.b32.xlu0 %v360, 64
  %v454 = vpop.permute.xlu0 %453
  %455 = vrot.lane.b32.xlu0 %v362, 64
  %v456 = vpop.permute.xlu0 %455
  %v458 = vsel %vm392, %v360, 0
  %v461 = vsel %vm392, %v362, 0
  %v464 = vsel %vm392, %v454, 0
  %v467 = vsel %vm392, %v456, 0
  %469 = vmatprep.subr.bf16.mxu0 0
  %470 = vmatpush1.bf16.xpose.msra.mxu0 %v464
  %471 = vmatprep.subr.bf16.mxu0 0
  %472 = vmatpush1.bf16.xpose.msra.mxu0 %v467
  %473 = vmatprep.subr.bf16.mxu0 0
  %474 = vmatpush1.bf16.xpose.msra.mxu0 0
  %475 = vmatprep.subr.bf16.mxu0 0
  %476 = vmatpush1.bf16.xpose.msra.mxu0 0
  %477 = vmatprep.subr.bf16.mxu0 0
  %478 = vmatpush1.bf16.xpose.msra.mxu0 0
  %479 = vmatprep.subr.bf16.mxu0 0
  %480 = vmatpush1.bf16.xpose.msra.mxu0 0
  %481 = vmatprep.subr.bf16.mxu0 0
  %482 = vmatpush1.bf16.xpose.msra.mxu0 0
  %483 = vmatprep.subr.bf16.mxu0 0
  %484 = vmatpush1.bf16.xpose.msra.mxu0 0
  %485 = vmatprep.subr.bf16.mxu0 0
  %486 = vmatpush1.bf16.xpose.msra.mxu0 0
  %487 = vmatprep.subr.bf16.mxu0 0
  %488 = vmatpush1.bf16.xpose.msra.mxu0 0
  %489 = vmatprep.subr.bf16.mxu0 0
  %490 = vmatpush1.bf16.xpose.msra.mxu0 0
  %491 = vmatprep.subr.bf16.mxu0 0
  %492 = vmatpush1.bf16.xpose.msra.mxu0 0
  %493 = vmatprep.subr.bf16.mxu0 0
  %494 = vmatpush1.bf16.xpose.msra.mxu0 0
  %495 = vmatprep.subr.bf16.mxu0 0
  %496 = vmatpush1.bf16.xpose.msra.mxu0 0
  %497 = vmatprep.subr.bf16.mxu0 0
  %498 = vmatpush1.bf16.xpose.msra.mxu0 0
  %499 = vmatprep.subr.bf16.mxu0 0
  %500 = vmatpush1.bf16.xpose.msra.mxu0 0
  %501 = vmatprep.mubr.bf16.mxu0 0
  %502 = vmatmul.mubr.bf16.gmra.mrb[0].mxu0 %v458
  %v503 = vpop.f32.mrb[0].mxu0
  %v504 = vadd.f32 %v45, %v503
  %v505 = vpop.f32.mrb[0].mxu0
  %v506 = vpop.f32.mrb[0].mxu0
  %v507 = vadd.f32 %v46, %v506
  %v508 = vpop.f32.mrb[0].mxu0
  %509 = vmatprep.mubr.bf16.mxu0 0
  %510 = vmatmul.mubr.bf16.gmra.mrb[0].mxu0 %v461
  %v511 = vpop.f32.mrb[0].mxu0
  %v512 = vadd.f32 %v47, %v511
  %v513 = vpop.f32.mrb[0].mxu0
  %v514 = vpop.f32.mrb[0].mxu0
  %v515 = vpop.f32.mrb[0].mxu0
  %516 = vdwg.mxu0
  %517 = vrot.lane.b32.xlu0 %v364, 64
  %v518 = vpop.permute.xlu0 %517
  %519 = vrot.lane.b32.xlu0 %v366, 64
  %v520 = vpop.permute.xlu0 %519
  %v522 = vsel %vm392, %v364, 0
  %v525 = vsel %vm392, %v366, 0
  %v528 = vsel %vm392, %v518, 0
  %v531 = vsel %vm392, %v520, 0
  %533 = vmatprep.subr.bf16.mxu0 0
  %534 = vmatpush1.bf16.xpose.msra.mxu0 %v528
  %535 = vmatprep.subr.bf16.mxu0 0
  %536 = vmatpush1.bf16.xpose.msra.mxu0 %v531
  %537 = vmatprep.subr.bf16.mxu0 0
  %538 = vmatpush1.bf16.xpose.msra.mxu0 0
  %539 = vmatprep.subr.bf16.mxu0 0
  %540 = vmatpush1.bf16.xpose.msra.mxu0 0
  %541 = vmatprep.subr.bf16.mxu0 0
  %542 = vmatpush1.bf16.xpose.msra.mxu0 0
  %543 = vmatprep.subr.bf16.mxu0 0
  %544 = vmatpush1.bf16.xpose.msra.mxu0 0
  %545 = vmatprep.subr.bf16.mxu0 0
  %546 = vmatpush1.bf16.xpose.msra.mxu0 0
  %547 = vmatprep.subr.bf16.mxu0 0
  %548 = vmatpush1.bf16.xpose.msra.mxu0 0
  %549 = vmatprep.subr.bf16.mxu0 0
  %550 = vmatpush1.bf16.xpose.msra.mxu0 0
  %551 = vmatprep.subr.bf16.mxu0 0
  %552 = vmatpush1.bf16.xpose.msra.mxu0 0
  %553 = vmatprep.subr.bf16.mxu0 0
  %554 = vmatpush1.bf16.xpose.msra.mxu0 0
  %555 = vmatprep.subr.bf16.mxu0 0
  %556 = vmatpush1.bf16.xpose.msra.mxu0 0
  %557 = vmatprep.subr.bf16.mxu0 0
  %558 = vmatpush1.bf16.xpose.msra.mxu0 0
  %559 = vmatprep.subr.bf16.mxu0 0
  %560 = vmatpush1.bf16.xpose.msra.mxu0 0
  %561 = vmatprep.subr.bf16.mxu0 0
  %562 = vmatpush1.bf16.xpose.msra.mxu0 0
  %563 = vmatprep.subr.bf16.mxu0 0
  %564 = vmatpush1.bf16.xpose.msra.mxu0 0
  %565 = vmatprep.mubr.bf16.mxu0 0
  %566 = vmatmul.mubr.bf16.gmra.mrb[0].mxu0 %v522
  %v567 = vpop.f32.mrb[0].mxu0
  %v568 = vadd.f32 %v45, %v567
  %v569 = vpop.f32.mrb[0].mxu0
  %v570 = vpop.f32.mrb[0].mxu0
  %v571 = vadd.f32 %v46, %v570
  %v572 = vpop.f32.mrb[0].mxu0
  %573 = vmatprep.mubr.bf16.mxu0 0
  %574 = vmatmul.mubr.bf16.gmra.mrb[0].mxu0 %v525
  %v575 = vpop.f32.mrb[0].mxu0
  %v576 = vadd.f32 %v47, %v575
  %v577 = vpop.f32.mrb[0].mxu0
  %v578 = vpop.f32.mrb[0].mxu0
  %v579 = vpop.f32.mrb[0].mxu0
  %580 = vdwg.mxu0
  %581 = vrot.lane.b32.xlu0 %v368, 64
  %v582 = vpop.permute.xlu0 %581
  %583 = vrot.lane.b32.xlu0 %v370, 64
  %v584 = vpop.permute.xlu0 %583
  %v586 = vsel %vm392, %v368, 0
  %v589 = vsel %vm392, %v370, 0
  %v592 = vsel %vm392, %v582, 0
  %v595 = vsel %vm392, %v584, 0
  %597 = vmatprep.subr.bf16.mxu0 0
  %598 = vmatpush1.bf16.xpose.msra.mxu0 %v592
  %599 = vmatprep.subr.bf16.mxu0 0
  %600 = vmatpush1.bf16.xpose.msra.mxu0 %v595
  %601 = vmatprep.subr.bf16.mxu0 0
  %602 = vmatpush1.bf16.xpose.msra.mxu0 0
  %603 = vmatprep.subr.bf16.mxu0 0
  %604 = vmatpush1.bf16.xpose.msra.mxu0 0
  %605 = vmatprep.subr.bf16.mxu0 0
  %606 = vmatpush1.bf16.xpose.msra.mxu0 0
  %607 = vmatprep.subr.bf16.mxu0 0
  %608 = vmatpush1.bf16.xpose.msra.mxu0 0
  %609 = vmatprep.subr.bf16.mxu0 0
  %610 = vmatpush1.bf16.xpose.msra.mxu0 0
  %611 = vmatprep.subr.bf16.mxu0 0
  %612 = vmatpush1.bf16.xpose.msra.mxu0 0
  %613 = vmatprep.subr.bf16.mxu0 0
  %614 = vmatpush1.bf16.xpose.msra.mxu0 0
  %615 = vmatprep.subr.bf16.mxu0 0
  %616 = vmatpush1.bf16.xpose.msra.mxu0 0
  %617 = vmatprep.subr.bf16.mxu0 0
  %618 = vmatpush1.bf16.xpose.msra.mxu0 0
  %619 = vmatprep.subr.bf16.mxu0 0
  %620 = vmatpush1.bf16.xpose.msra.mxu0 0
  %621 = vmatprep.subr.bf16.mxu0 0
  %622 = vmatpush1.bf16.xpose.msra.mxu0 0
  %623 = vmatprep.subr.bf16.mxu0 0
  %624 = vmatpush1.bf16.xpose.msra.mxu0 0
  %625 = vmatprep.subr.bf16.mxu0 0
  %626 = vmatpush1.bf16.xpose.msra.mxu0 0
  %627 = vmatprep.subr.bf16.mxu0 0
  %628 = vmatpush1.bf16.xpose.msra.mxu0 0
  %629 = vmatprep.mubr.bf16.mxu0 0
  %630 = vmatmul.mubr.bf16.gmra.mrb[0].mxu0 %v586
  %v631 = vpop.f32.mrb[0].mxu0
  %v632 = vadd.f32 %v45, %v631
  %v633 = vpop.f32.mrb[0].mxu0
  %v634 = vpop.f32.mrb[0].mxu0
  %v635 = vadd.f32 %v46, %v634
  %v636 = vpop.f32.mrb[0].mxu0
  %637 = vmatprep.mubr.bf16.mxu0 0
  %638 = vmatmul.mubr.bf16.gmra.mrb[0].mxu0 %v589
  %v639 = vpop.f32.mrb[0].mxu0
  %v640 = vadd.f32 %v47, %v639
  %v641 = vpop.f32.mrb[0].mxu0
  %v642 = vpop.f32.mrb[0].mxu0
  %v643 = vpop.f32.mrb[0].mxu0
  %644 = vdwg.mxu0
  %vm645 = vcmask 162816
  %v646 = vsel %vm645, %v440, -inf
  %647 = vmax.xlane.f32.xlu0 %v646
  %v648 = vpop.xlane.xlu0 %647
  %v649 = vsel %vm645, %v443, -inf
  %650 = vmax.xlane.f32.xlu0 %v649
  %v651 = vpop.xlane.xlu0 %650
  %vm652 = vcmask 158720
  %v653 = vsel %vm652, %v448, -inf
  %654 = vmax.xlane.f32.xlu0 %v653
  %v655 = vpop.xlane.xlu0 %654
  %v656 = vsel %vm645, %v504, -inf
  %657 = vmax.xlane.f32.xlu0 %v656
  %v658 = vpop.xlane.xlu0 %657
  %v659 = vsel %vm645, %v507, -inf
  %660 = vmax.xlane.f32.xlu0 %v659
  %v661 = vpop.xlane.xlu0 %660
  %v662 = vsel %vm652, %v512, -inf
  %663 = vmax.xlane.f32.xlu0 %v662
  %v664 = vpop.xlane.xlu0 %663
  %v665 = vsel %vm645, %v568, -inf
  %666 = vmax.xlane.f32.xlu0 %v665
  %v667 = vpop.xlane.xlu0 %666
  %v668 = vsel %vm645, %v571, -inf
  %669 = vmax.xlane.f32.xlu0 %v668
  %v670 = vpop.xlane.xlu0 %669
  %v671 = vsel %vm652, %v576, -inf
  %672 = vmax.xlane.f32.xlu0 %v671
  %v673 = vpop.xlane.xlu0 %672
  %v674 = vsel %vm645, %v632, -inf
  %675 = vmax.xlane.f32.xlu0 %v674
  %v676 = vpop.xlane.xlu0 %675
  %v677 = vsel %vm645, %v635, -inf
  %678 = vmax.xlane.f32.xlu0 %v677
  %v679 = vpop.xlane.xlu0 %678
  %v680 = vsel %vm652, %v640, -inf
  %681 = vmax.xlane.f32.xlu0 %v680
  %v682 = vpop.xlane.xlu0 %681
  %v683 = vsub.f32 %v440, %v648
  %v684 = vsub.f32 %v443, %v651
  %v685 = vsub.f32 %v448, %v655
  %v686 = vsub.f32 %v504, %v658
  %v687 = vsub.f32 %v507, %v661
  %v688 = vsub.f32 %v512, %v664
  %v689 = vsub.f32 %v568, %v667
  %v690 = vsub.f32 %v571, %v670
  %v691 = vsub.f32 %v576, %v673
  %v692 = vsub.f32 %v632, %v676
  %v693 = vsub.f32 %v635, %v679
  %v694 = vsub.f32 %v640, %v682
  %v695 = vmul.f32 %v683, 1.442695
  %v696 = vpow.pop %v695
  %v697 = vmul.f32 %v684, 1.442695
  %v698 = vpow.pop %v697
  %v699 = vmul.f32 %v685, 1.442695
  %v700 = vpow.pop %v699
  %v701 = vmul.f32 %v686, 1.442695
  %v702 = vpow.pop %v701
  %v703 = vmul.f32 %v687, 1.442695
  %v704 = vpow.pop %v703
  %v705 = vmul.f32 %v688, 1.442695
  %v706 = vpow.pop %v705
  %v707 = vmul.f32 %v689, 1.442695
  %v708 = vpow.pop %v707
  %v709 = vmul.f32 %v690, 1.442695
  %v710 = vpow.pop %v709
  %v711 = vmul.f32 %v691, 1.442695
  %v712 = vpow.pop %v711
  %v713 = vmul.f32 %v692, 1.442695
  %v714 = vpow.pop %v713
  %v715 = vmul.f32 %v693, 1.442695
  %v716 = vpow.pop %v715
  %v717 = vmul.f32 %v694, 1.442695
  %v718 = vpow.pop %v717
  %v719 = vsel %vm645, %v696, 0.0
  %720 = vadd.xlane.f32.xlu0 %v719
  %v721 = vpop.xlane.xlu0 %720
  %v722 = vsel %vm645, %v698, 0.0
  %723 = vadd.xlane.f32.xlu0 %v722
  %v724 = vpop.xlane.xlu0 %723
  %v725 = vsel %vm652, %v700, 0.0
  %726 = vadd.xlane.f32.xlu0 %v725
  %v727 = vpop.xlane.xlu0 %726
  %v728 = vsel %vm645, %v702, 0.0
  %729 = vadd.xlane.f32.xlu0 %v728
  %v730 = vpop.xlane.xlu0 %729
  %v731 = vsel %vm645, %v704, 0.0
  %732 = vadd.xlane.f32.xlu0 %v731
  %v733 = vpop.xlane.xlu0 %732
  %v734 = vsel %vm652, %v706, 0.0
  %735 = vadd.xlane.f32.xlu0 %v734
  %v736 = vpop.xlane.xlu0 %735
  %v737 = vsel %vm645, %v708, 0.0
  %738 = vadd.xlane.f32.xlu0 %v737
  %v739 = vpop.xlane.xlu0 %738
  %v740 = vsel %vm645, %v710, 0.0
  %741 = vadd.xlane.f32.xlu0 %v740
  %v742 = vpop.xlane.xlu0 %741
  %v743 = vsel %vm652, %v712, 0.0
  %744 = vadd.xlane.f32.xlu0 %v743
  %v745 = vpop.xlane.xlu0 %744
  %v746 = vsel %vm645, %v714, 0.0
  %747 = vadd.xlane.f32.xlu0 %v746
  %v748 = vpop.xlane.xlu0 %747
  %v749 = vsel %vm645, %v716, 0.0
  %750 = vadd.xlane.f32.xlu0 %v749
  %v751 = vpop.xlane.xlu0 %750
  %v752 = vsel %vm652, %v718, 0.0
  %753 = vadd.xlane.f32.xlu0 %v752
  %v754 = vpop.xlane.xlu0 %753
  %v755 = vrcp.pop %v721
  %v756 = vrcp.pop %v724
  %v757 = vrcp.pop %v727
  %v758 = vrcp.pop %v730
  %v759 = vrcp.pop %v733
  %v760 = vrcp.pop %v736
  %v761 = vrcp.pop %v739
  %v762 = vrcp.pop %v742
  %v763 = vrcp.pop %v745
  %v764 = vrcp.pop %v748
  %v765 = vrcp.pop %v751
  %v766 = vrcp.pop %v754
  %v767 = vmul.f32 %v696, %v755
  %v768 = vmul.f32 %v698, %v756
  %v769 = vmul.f32 %v700, %v757
  %v770 = vmul.f32 %v702, %v758
  %v771 = vmul.f32 %v704, %v759
  %v772 = vmul.f32 %v706, %v760
  %v773 = vmul.f32 %v708, %v761
  %v774 = vmul.f32 %v710, %v762
  %v775 = vmul.f32 %v712, %v763
  %v776 = vmul.f32 %v714, %v764
  %v777 = vmul.f32 %v716, %v765
  %v778 = vmul.f32 %v718, %v766
  %v779 = vpack.c.bf16 %v768, %v767
  %v780 = vpack.c.bf16 %v769, %v769
  %v781 = vpack.c.bf16 %v771, %v770
  %v782 = vpack.c.bf16 %v772, %v772
  %v783 = vpack.c.bf16 %v774, %v773
  %v784 = vpack.c.bf16 %v775, %v775
  %v785 = vpack.c.bf16 %v777, %v776
  %v786 = vpack.c.bf16 %v778, %v778
  %v788 = vsel %vm645, %v779, 0
  %v791 = vsel %vm645, %v780, 0
  %vm793 = vcmask 1041408
  %v795 = vsel %vm793, %v356, 0
  %797 = vmatprep.subr.bf16.mxu0 0
  %798 = vmatpush1.bf16.msra.mxu0 %v354
  %799 = vmatprep.subr.bf16.mxu0 0
  %800 = vmatpush1.bf16.msra.mxu0 %v795
  %801 = vmatprep.subr.bf16.mxu0 0
  %802 = vmatpush1.bf16.msra.mxu0 0
  %803 = vmatprep.subr.bf16.mxu0 0
  %804 = vmatpush1.bf16.msra.mxu0 0
  %805 = vmatprep.subr.bf16.mxu0 0
  %806 = vmatpush1.bf16.msra.mxu0 0
  %807 = vmatprep.subr.bf16.mxu0 0
  %808 = vmatpush1.bf16.msra.mxu0 0
  %809 = vmatprep.subr.bf16.mxu0 0
  %810 = vmatpush1.bf16.msra.mxu0 0
  %811 = vmatprep.subr.bf16.mxu0 0
  %812 = vmatpush1.bf16.msra.mxu0 0
  %813 = vmatprep.subr.bf16.mxu0 0
  %814 = vmatpush1.bf16.msra.mxu0 0
  %815 = vmatprep.subr.bf16.mxu0 0
  %816 = vmatpush1.bf16.msra.mxu0 0
  %817 = vmatprep.subr.bf16.mxu0 0
  %818 = vmatpush1.bf16.msra.mxu0 0
  %819 = vmatprep.subr.bf16.mxu0 0
  %820 = vmatpush1.bf16.msra.mxu0 0
  %821 = vmatprep.subr.bf16.mxu0 0
  %822 = vmatpush1.bf16.msra.mxu0 0
  %823 = vmatprep.subr.bf16.mxu0 0
  %824 = vmatpush1.bf16.msra.mxu0 0
  %825 = vmatprep.subr.bf16.mxu0 0
  %826 = vmatpush1.bf16.msra.mxu0 0
  %827 = vmatprep.subr.bf16.mxu0 0
  %828 = vmatpush1.bf16.msra.mxu0 0
  %829 = vmatprep.mubr.bf16.mxu0 0
  %830 = vmatmul.mubr.bf16.gmra.mrb[0].mxu0 %v788
  %v831 = vpop.f32.mrb[0].mxu0
  %v832 = vadd.f32 0.0, %v831
  %v833 = vpop.f32.mrb[0].mxu0
  %v834 = vpop.f32.mrb[0].mxu0
  %v835 = vadd.f32 0.0, %v834
  %v836 = vpop.f32.mrb[0].mxu0
  %837 = vmatprep.mubr.bf16.mxu0 0
  %838 = vmatmul.mubr.bf16.gmra.mrb[0].mxu0 %v791
  %v839 = vpop.f32.mrb[0].mxu0
  %v840 = vadd.f32 0.0, %v839
  %v841 = vpop.f32.mrb[0].mxu0
  %v842 = vpop.f32.mrb[0].mxu0
  %v843 = vpop.f32.mrb[0].mxu0
  %844 = vdwg.mxu0
  %v846 = vsel %vm645, %v781, 0
  %v849 = vsel %vm645, %v782, 0
  %v852 = vsel %vm793, %v376, 0
  %854 = vmatprep.subr.bf16.mxu0 0
  %855 = vmatpush1.bf16.msra.mxu0 %v374
  %856 = vmatprep.subr.bf16.mxu0 0
  %857 = vmatpush1.bf16.msra.mxu0 %v852
  %858 = vmatprep.subr.bf16.mxu0 0
  %859 = vmatpush1.bf16.msra.mxu0 0
  %860 = vmatprep.subr.bf16.mxu0 0
  %861 = vmatpush1.bf16.msra.mxu0 0
  %862 = vmatprep.subr.bf16.mxu0 0
  %863 = vmatpush1.bf16.msra.mxu0 0
  %864 = vmatprep.subr.bf16.mxu0 0
  %865 = vmatpush1.bf16.msra.mxu0 0
  %866 = vmatprep.subr.bf16.mxu0 0
  %867 = vmatpush1.bf16.msra.mxu0 0
  %868 = vmatprep.subr.bf16.mxu0 0
  %869 = vmatpush1.bf16.msra.mxu0 0
  %870 = vmatprep.subr.bf16.mxu0 0
  %871 = vmatpush1.bf16.msra.mxu0 0
  %872 = vmatprep.subr.bf16.mxu0 0
  %873 = vmatpush1.bf16.msra.mxu0 0
  %874 = vmatprep.subr.bf16.mxu0 0
  %875 = vmatpush1.bf16.msra.mxu0 0
  %876 = vmatprep.subr.bf16.mxu0 0
  %877 = vmatpush1.bf16.msra.mxu0 0
  %878 = vmatprep.subr.bf16.mxu0 0
  %879 = vmatpush1.bf16.msra.mxu0 0
  %880 = vmatprep.subr.bf16.mxu0 0
  %881 = vmatpush1.bf16.msra.mxu0 0
  %882 = vmatprep.subr.bf16.mxu0 0
  %883 = vmatpush1.bf16.msra.mxu0 0
  %884 = vmatprep.subr.bf16.mxu0 0
  %885 = vmatpush1.bf16.msra.mxu0 0
  %886 = vmatprep.mubr.bf16.mxu0 0
  %887 = vmatmul.mubr.bf16.gmra.mrb[0].mxu0 %v846
  %v888 = vpop.f32.mrb[0].mxu0
  %v889 = vadd.f32 0.0, %v888
  %v890 = vpop.f32.mrb[0].mxu0
  %v891 = vpop.f32.mrb[0].mxu0
  %v892 = vadd.f32 0.0, %v891
  %v893 = vpop.f32.mrb[0].mxu0
  %894 = vmatprep.mubr.bf16.mxu0 0
  %895 = vmatmul.mubr.bf16.gmra.mrb[0].mxu0 %v849
  %v896 = vpop.f32.mrb[0].mxu0
  %v897 = vadd.f32 0.0, %v896
  %v898 = vpop.f32.mrb[0].mxu0
  %v899 = vpop.f32.mrb[0].mxu0
  %v900 = vpop.f32.mrb[0].mxu0
  %901 = vdwg.mxu0
  %v903 = vsel %vm645, %v783, 0
  %v906 = vsel %vm645, %v784, 0
  %v909 = vsel %vm793, %v381, 0
  %911 = vmatprep.subr.bf16.mxu0 0
  %912 = vmatpush1.bf16.msra.mxu0 %v379
  %913 = vmatprep.subr.bf16.mxu0 0
  %914 = vmatpush1.bf16.msra.mxu0 %v909
  %915 = vmatprep.subr.bf16.mxu0 0
  %916 = vmatpush1.bf16.msra.mxu0 0
  %917 = vmatprep.subr.bf16.mxu0 0
  %918 = vmatpush1.bf16.msra.mxu0 0
  %919 = vmatprep.subr.bf16.mxu0 0
  %920 = vmatpush1.bf16.msra.mxu0 0
  %921 = vmatprep.subr.bf16.mxu0 0
  %922 = vmatpush1.bf16.msra.mxu0 0
  %923 = vmatprep.subr.bf16.mxu0 0
  %924 = vmatpush1.bf16.msra.mxu0 0
  %925 = vmatprep.subr.bf16.mxu0 0
  %926 = vmatpush1.bf16.msra.mxu0 0
  %927 = vmatprep.subr.bf16.mxu0 0
  %928 = vmatpush1.bf16.msra.mxu0 0
  %929 = vmatprep.subr.bf16.mxu0 0
  %930 = vmatpush1.bf16.msra.mxu0 0
  %931 = vmatprep.subr.bf16.mxu0 0
  %932 = vmatpush1.bf16.msra.mxu0 0
  %933 = vmatprep.subr.bf16.mxu0 0
  %934 = vmatpush1.bf16.msra.mxu0 0
  %935 = vmatprep.subr.bf16.mxu0 0
  %936 = vmatpush1.bf16.msra.mxu0 0
  %937 = vmatprep.subr.bf16.mxu0 0
  %938 = vmatpush1.bf16.msra.mxu0 0
  %939 = vmatprep.subr.bf16.mxu0 0
  %940 = vmatpush1.bf16.msra.mxu0 0
  %941 = vmatprep.subr.bf16.mxu0 0
  %942 = vmatpush1.bf16.msra.mxu0 0
  %943 = vmatprep.mubr.bf16.mxu0 0
  %944 = vmatmul.mubr.bf16.gmra.mrb[0].mxu0 %v903
  %v945 = vpop.f32.mrb[0].mxu0
  %v946 = vadd.f32 0.0, %v945
  %v947 = vpop.f32.mrb[0].mxu0
  %v948 = vpop.f32.mrb[0].mxu0
  %v949 = vadd.f32 0.0, %v948
  %v950 = vpop.f32.mrb[0].mxu0
  %951 = vmatprep.mubr.bf16.mxu0 0
  %952 = vmatmul.mubr.bf16.gmra.mrb[0].mxu0 %v906
  %v953 = vpop.f32.mrb[0].mxu0
  %v954 = vadd.f32 0.0, %v953
  %v955 = vpop.f32.mrb[0].mxu0
  %v956 = vpop.f32.mrb[0].mxu0
  %v957 = vpop.f32.mrb[0].mxu0
  %958 = vdwg.mxu0
  %v960 = vsel %vm645, %v785, 0
  %v963 = vsel %vm645, %v786, 0
  %v966 = vsel %vm793, %v386, 0
  %968 = vmatprep.subr.bf16.mxu0 0
  %969 = vmatpush1.bf16.msra.mxu0 %v384
  %970 = vmatprep.subr.bf16.mxu0 0
  %971 = vmatpush1.bf16.msra.mxu0 %v966
  %972 = vmatprep.subr.bf16.mxu0 0
  %973 = vmatpush1.bf16.msra.mxu0 0
  %974 = vmatprep.subr.bf16.mxu0 0
  %975 = vmatpush1.bf16.msra.mxu0 0
  %976 = vmatprep.subr.bf16.mxu0 0
  %977 = vmatpush1.bf16.msra.mxu0 0
  %978 = vmatprep.subr.bf16.mxu0 0
  %979 = vmatpush1.bf16.msra.mxu0 0
  %980 = vmatprep.subr.bf16.mxu0 0
  %981 = vmatpush1.bf16.msra.mxu0 0
  %982 = vmatprep.subr.bf16.mxu0 0
  %983 = vmatpush1.bf16.msra.mxu0 0
  %984 = vmatprep.subr.bf16.mxu0 0
  %985 = vmatpush1.bf16.msra.mxu0 0
  %986 = vmatprep.subr.bf16.mxu0 0
  %987 = vmatpush1.bf16.msra.mxu0 0
  %988 = vmatprep.subr.bf16.mxu0 0
  %989 = vmatpush1.bf16.msra.mxu0 0
  %990 = vmatprep.subr.bf16.mxu0 0
  %991 = vmatpush1.bf16.msra.mxu0 0
  %992 = vmatprep.subr.bf16.mxu0 0
  %993 = vmatpush1.bf16.msra.mxu0 0
  %994 = vmatprep.subr.bf16.mxu0 0
  %995 = vmatpush1.bf16.msra.mxu0 0
  %996 = vmatprep.subr.bf16.mxu0 0
  %997 = vmatpush1.bf16.msra.mxu0 0
  %998 = vmatprep.subr.bf16.mxu0 0
  %999 = vmatpush1.bf16.msra.mxu0 0
  %1000 = vmatprep.mubr.bf16.mxu0 0
  %1001 = vmatmul.mubr.bf16.gmra.mrb[0].mxu0 %v960
  %v1002 = vpop.f32.mrb[0].mxu0
  %v1003 = vadd.f32 0.0, %v1002
  %v1004 = vpop.f32.mrb[0].mxu0
  %v1005 = vpop.f32.mrb[0].mxu0
  %v1006 = vadd.f32 0.0, %v1005
  %v1007 = vpop.f32.mrb[0].mxu0
  %1008 = vmatprep.mubr.bf16.mxu0 0
  %1009 = vmatmul.mubr.bf16.gmra.mrb[0].mxu0 %v963
  %v1010 = vpop.f32.mrb[0].mxu0
  %v1011 = vadd.f32 0.0, %v1010
  %v1012 = vpop.f32.mrb[0].mxu0
  %v1013 = vpop.f32.mrb[0].mxu0
  %v1014 = vpop.f32.mrb[0].mxu0
  %1015 = vdwg.mxu0
  %1019 = vrot.lane.b32.xlu0 %v889, 16
  %v1020 = vpop.permute.xlu0 %1019
  %1021 = vrot.lane.b32.xlu0 %v892, 16
  %v1022 = vpop.permute.xlu0 %1021
  %1023 = vrot.lane.b32.xlu0 %v897, 16
  %v1024 = vpop.permute.xlu0 %1023
  %1031 = vrot.lane.b32.xlu0 %v946, 32
  %v1032 = vpop.permute.xlu0 %1031
  %1033 = vrot.lane.b32.xlu0 %v949, 32
  %v1034 = vpop.permute.xlu0 %1033
  %1035 = vrot.lane.b32.xlu0 %v954, 32
  %v1036 = vpop.permute.xlu0 %1035
  %1043 = vrot.lane.b32.xlu0 %v1003, 48
  %v1044 = vpop.permute.xlu0 %1043
  %1045 = vrot.lane.b32.xlu0 %v1006, 48
  %v1046 = vpop.permute.xlu0 %1045
  %1047 = vrot.lane.b32.xlu0 %v1011, 48
  %v1048 = vpop.permute.xlu0 %1047
  %v1052 = vsel %vm392, %v832, %v1020
  %v1053 = vsel %vm392, %v835, %v1022
  %v1054 = vsel %vm392, %v840, %v1024
  %vm1055 = vcmask 261120
  %v1056 = vsel %vm1055, %v1052, %v1032
  %v1057 = vsel %vm1055, %v1053, %v1034
  %v1058 = vsel %vm1055, %v1054, %v1036
  %vm1059 = vcmask 392192
  %v1060 = vsel %vm1059, %v1056, %v1044
  %v1061 = vsel %vm1059, %v1057, %v1046
  %v1062 = vsel %vm1059, %v1058, %v1048
  %v1063 = vpack.c.bf16 %v1061, %v1060
  %v1064 = vpack.c.bf16 %v1062, %v1062
  %v1065 = vld [vmem:[%s6] sm:$0xf]
  %v1066 = vld [vmem:[%s6 + $0x4] sm:$0xf]
  %v1067 = vld [vmem:[%s6 + $0x8] sm:$0xf]
  %v1068 = vld [vmem:[%s6 + $0xc] sm:$0xf]
  %v1069 = vld [vmem:[%s6 + $0x10] sm:$0xf]
  %v1070 = vld [vmem:[%s6 + $0x14] sm:$0xf]
  %v1071 = vld [vmem:[%s6 + $0x18] sm:$0xf]
  %v1072 = vld [vmem:[%s6 + $0x1c] sm:$0xf]
  %v1074 = vlaneseq
  %v1075 = vshrl.u32 %v1074, 7
  %v1076 = vsub.s32 0, %v1075
  %v1077 = vrot.slane %v172, %v1076
  %v1087 = vunpack.c.l.b16 %v1065
  %v1088 = vunpack.c.l.b16 %v1066
  %v1089 = vunpack.c.l.b16 %v1067
  %v1090 = vunpack.c.l.b16 %v1068
  %v1091 = vunpack.c.l.b16 %v1069
  %v1092 = vunpack.c.l.b16 %v1070
  %v1093 = vunpack.c.l.b16 %v1071
  %v1094 = vunpack.c.l.b16 %v1072
  %v1095 = vpack.c.b16 %v1088, %v1087
  %v1096 = vpack.c.b16 %v1090, %v1089
  %v1097 = vpack.c.b16 %v1092, %v1091
  %v1098 = vpack.c.b16 %v1094, %v1093
  %v1104 = vsel %vm174, %v1063, 0
  %v1107 = vsel %vm174, %v1064, 0
  %1109 = vmatprep.subr.bf16.mxu0 0
  %1110 = vmatpush1.bf16.msra.mxu0 %v1095
  %1111 = vmatprep.subr.bf16.mxu0 0
  %1112 = vmatpush1.bf16.msra.mxu0 %v1096
  %1113 = vmatprep.subr.bf16.mxu0 0
  %1114 = vmatpush1.bf16.msra.mxu0 %v1097
  %1115 = vmatprep.subr.bf16.mxu0 0
  %1116 = vmatpush1.bf16.msra.mxu0 %v1098
  %1117 = vmatprep.subr.bf16.mxu0 0
  %1118 = vmatpush1.bf16.msra.mxu0 0
  %1119 = vmatprep.subr.bf16.mxu0 0
  %1120 = vmatpush1.bf16.msra.mxu0 0
  %1121 = vmatprep.subr.bf16.mxu0 0
  %1122 = vmatpush1.bf16.msra.mxu0 0
  %1123 = vmatprep.subr.bf16.mxu0 0
  %1124 = vmatpush1.bf16.msra.mxu0 0
  %1125 = vmatprep.subr.bf16.mxu0 0
  %1126 = vmatpush1.bf16.msra.mxu0 0
  %1127 = vmatprep.subr.bf16.mxu0 0
  %1128 = vmatpush1.bf16.msra.mxu0 0
  %1129 = vmatprep.subr.bf16.mxu0 0
  %1130 = vmatpush1.bf16.msra.mxu0 0
  %1131 = vmatprep.subr.bf16.mxu0 0
  %1132 = vmatpush1.bf16.msra.mxu0 0
  %1133 = vmatprep.subr.bf16.mxu0 0
  %1134 = vmatpush1.bf16.msra.mxu0 0
  %1135 = vmatprep.subr.bf16.mxu0 0
  %1136 = vmatpush1.bf16.msra.mxu0 0
  %1137 = vmatprep.subr.bf16.mxu0 0
  %1138 = vmatpush1.bf16.msra.mxu0 0
  %1139 = vmatprep.subr.bf16.mxu0 0
  %1140 = vmatpush1.bf16.msra.mxu0 0
  %1141 = vmatprep.mubr.bf16.mxu0 0
  %1142 = vmatmul.mubr.bf16.gmra.mrb[0].mxu0 %v1104
  %v1143 = vpop.f32.mrb[0].mxu0
  %v1144 = vadd.f32 %v1077, %v1143
  %v1145 = vpop.f32.mrb[0].mxu0
  %v1146 = vpop.f32.mrb[0].mxu0
  %v1147 = vadd.f32 %v1077, %v1146
  %v1148 = vpop.f32.mrb[0].mxu0
  %1149 = vmatprep.mubr.bf16.mxu0 0
  %1150 = vmatmul.mubr.bf16.gmra.mrb[0].mxu0 %v1107
  %v1151 = vpop.f32.mrb[0].mxu0
  %v1152 = vadd.f32 %v1077, %v1151
  %v1153 = vpop.f32.mrb[0].mxu0
  %v1154 = vpop.f32.mrb[0].mxu0
  %v1155 = vpop.f32.mrb[0].mxu0
  %1156 = vdwg.mxu0
  %v1157 = vadd.f32 %v155, %v1144
  %v1158 = vadd.f32 %v158, %v1147
  %v1159 = vadd.f32 %v163, %v1152
  %v1160 = vsel %vm174, %v1157, 0.0
  %1161 = vadd.xlane.f32.xlu0 %v1160
  %v1162 = vpop.xlane.xlu0 %1161
  %v1163 = vsel %vm174, %v1158, 0.0
  %1164 = vadd.xlane.f32.xlu0 %v1163
  %v1165 = vpop.xlane.xlu0 %1164
  %v1166 = vsel %vm181, %v1159, 0.0
  %1167 = vadd.xlane.f32.xlu0 %v1166
  %v1168 = vpop.xlane.xlu0 %1167
  %v1169 = vmul.f32 %v1162, %v185
  %v1170 = vmul.f32 %v1165, %v185
  %v1171 = vmul.f32 %v1168, %v185
  %v1172 = vsub.f32 %v1157, %v1169
  %v1173 = vsub.f32 %v1158, %v1170
  %v1174 = vsub.f32 %v1159, %v1171
  %v1175 = vmul.f32 %v1172, %v1172
  %v1176 = vmul.f32 %v1173, %v1173
  %v1177 = vmul.f32 %v1174, %v1174
  %v1178 = vsel %vm174, %v1175, 0.0
  %1179 = vadd.xlane.f32.xlu0 %v1178
  %v1180 = vpop.xlane.xlu0 %1179
  %v1181 = vsel %vm174, %v1176, 0.0
  %1182 = vadd.xlane.f32.xlu0 %v1181
  %v1183 = vpop.xlane.xlu0 %1182
  %v1184 = vsel %vm181, %v1177, 0.0
  %1185 = vadd.xlane.f32.xlu0 %v1184
  %v1186 = vpop.xlane.xlu0 %1185
  %v1187 = vmul.f32 %v1180, %v185
  %v1188 = vmul.f32 %v1183, %v185
  %v1189 = vmul.f32 %v1186, %v185
  %v1190 = vadd.f32 %v1187, 1e-05
  %v1191 = vadd.f32 %v1188, 1e-05
  %v1192 = vadd.f32 %v1189, 1e-05
  %v1193 = vrsqrt.pop %v1190
  %v1194 = vrsqrt.pop %v1191
  %v1195 = vrsqrt.pop %v1192
  %v1196 = vmul.f32 %v1172, %v1193
  %v1197 = vmul.f32 %v1173, %v1194
  %v1198 = vmul.f32 %v1174, %v1195
  %v1200 = vlaneseq
  %v1201 = vshrl.u32 %v1200, 7
  %v1202 = vsub.s32 0, %v1201
  %v1203 = vrot.slane %v170, %v1202
  %v1205 = vmul.f32 %v1196, %v1203
  %v1206 = vmul.f32 %v1197, %v1203
  %v1207 = vmul.f32 %v1198, %v1203
  %v1209 = vlaneseq
  %v1210 = vshrl.u32 %v1209, 7
  %v1211 = vsub.s32 0, %v1210
  %v1212 = vrot.slane %v171, %v1211
  %v1214 = vadd.f32 %v1205, %v1212
  %v1215 = vadd.f32 %v1206, %v1212
  %v1216 = vadd.f32 %v1207, %v1212
  %v1217 = vpack.c.bf16 %v1215, %v1214
  %v1218 = vpack.c.bf16 %v1216, %v1216
  %v1219 = vld [vmem:[%s8] sm:$0xff]
  %v1220 = vld [vmem:[%s8 + $0x8] sm:$0xff]
  %v1221 = vld [vmem:[%s8 + $0x10] sm:$0xff]
  %v1222 = vld [vmem:[%s8 + $0x18] sm:$0xff]
  %v1223 = vld [vmem:[%s8 + $0x20] sm:$0xff]
  %v1224 = vld [vmem:[%s8 + $0x28] sm:$0xff]
  %v1225 = vld [vmem:[%s8 + $0x30] sm:$0xff]
  %v1226 = vld [vmem:[%s8 + $0x38] sm:$0xff]
  %v1227 = vld [vmem:[%s9] sm:$0x3]
  %v1229 = vlaneseq
  %v1230 = vshrl.u32 %v1229, 7
  %v1231 = vsub.s32 0, %v1230
  %v1232 = vrot.slane %v1227, %v1231
  %v1233 = vlaneseq
  %v1234 = vshrl.u32 %v1233, 7
  %v1235 = vsub.s32 1, %v1234
  %v1236 = vrot.slane %v1227, %v1235
  %v1247 = vunpack.c.l.b16 %v1219
  %v1248 = vunpack.c.h.b16 %v1219
  %v1249 = vunpack.c.l.b16 %v1220
  %v1250 = vunpack.c.h.b16 %v1220
  %v1251 = vunpack.c.l.b16 %v1221
  %v1252 = vunpack.c.h.b16 %v1221
  %v1253 = vunpack.c.l.b16 %v1222
  %v1254 = vunpack.c.h.b16 %v1222
  %v1255 = vunpack.c.l.b16 %v1223
  %v1256 = vunpack.c.h.b16 %v1223
  %v1257 = vunpack.c.l.b16 %v1224
  %v1258 = vunpack.c.h.b16 %v1224
  %v1259 = vunpack.c.l.b16 %v1225
  %v1260 = vunpack.c.h.b16 %v1225
  %v1261 = vunpack.c.l.b16 %v1226
  %v1262 = vunpack.c.h.b16 %v1226
  %v1263 = vpack.c.b16 %v1249, %v1247
  %v1264 = vpack.c.b16 %v1250, %v1248
  %v1265 = vpack.c.b16 %v1253, %v1251
  %v1266 = vpack.c.b16 %v1254, %v1252
  %v1267 = vpack.c.b16 %v1257, %v1255
  %v1268 = vpack.c.b16 %v1258, %v1256
  %v1269 = vpack.c.b16 %v1261, %v1259
  %v1270 = vpack.c.b16 %v1262, %v1260
  %v1280 = vsel %vm174, %v1217, 0
  %v1283 = vsel %vm174, %v1218, 0
  %1285 = vmatprep.subr.bf16.mxu0 %v1264
  %1286 = vmatpush1.bf16.msra.mxu0 %v1263
  %1287 = vmatprep.subr.bf16.mxu0 %v1266
  %1288 = vmatpush1.bf16.msra.mxu0 %v1265
  %1289 = vmatprep.subr.bf16.mxu0 %v1268
  %1290 = vmatpush1.bf16.msra.mxu0 %v1267
  %1291 = vmatprep.subr.bf16.mxu0 %v1270
  %1292 = vmatpush1.bf16.msra.mxu0 %v1269
  %1293 = vmatprep.subr.bf16.mxu0 0
  %1294 = vmatpush1.bf16.msra.mxu0 0
  %1295 = vmatprep.subr.bf16.mxu0 0
  %1296 = vmatpush1.bf16.msra.mxu0 0
  %1297 = vmatprep.subr.bf16.mxu0 0
  %1298 = vmatpush1.bf16.msra.mxu0 0
  %1299 = vmatprep.subr.bf16.mxu0 0
  %1300 = vmatpush1.bf16.msra.mxu0 0
  %1301 = vmatprep.subr.bf16.mxu0 0
  %1302 = vmatpush1.bf16.msra.mxu0 0
  %1303 = vmatprep.subr.bf16.mxu0 0
  %1304 = vmatpush1.bf16.msra.mxu0 0
  %1305 = vmatprep.subr.bf16.mxu0 0
  %1306 = vmatpush1.bf16.msra.mxu0 0
  %1307 = vmatprep.subr.bf16.mxu0 0
  %1308 = vmatpush1.bf16.msra.mxu0 0
  %1309 = vmatprep.subr.bf16.mxu0 0
  %1310 = vmatpush1.bf16.msra.mxu0 0
  %1311 = vmatprep.subr.bf16.mxu0 0
  %1312 = vmatpush1.bf16.msra.mxu0 0
  %1313 = vmatprep.subr.bf16.mxu0 0
  %1314 = vmatpush1.bf16.msra.mxu0 0
  %1315 = vmatprep.subr.bf16.mxu0 0
  %1316 = vmatpush1.bf16.msra.mxu0 0
  %1317 = vmatprep.mubr.bf16.mxu0 0
  %1318 = vmatmul.mubr.bf16.gmra.mrb[0].mxu0 %v1280
  %v1319 = vpop.f32.mrb[0].mxu0
  %v1320 = vadd.f32 %v1232, %v1319
  %v1321 = vpop.f32.mrb[0].mxu0
  %v1322 = vadd.f32 %v1236, %v1321
  %v1323 = vpop.f32.mrb[0].mxu0
  %v1324 = vadd.f32 %v1232, %v1323
  %v1325 = vpop.f32.mrb[0].mxu0
  %v1326 = vadd.f32 %v1236, %v1325
  %1327 = vmatprep.mubr.bf16.mxu0 0
  %1328 = vmatmul.mubr.bf16.gmra.mrb[0].mxu0 %v1283
  %v1329 = vpop.f32.mrb[0].mxu0
  %v1330 = vadd.f32 %v1232, %v1329
  %v1331 = vpop.f32.mrb[0].mxu0
  %v1332 = vadd.f32 %v1236, %v1331
  %v1333 = vpop.f32.mrb[0].mxu0
  %v1334 = vpop.f32.mrb[0].mxu0
  %1335 = vdwg.mxu0
  %v1336 = vmul.f32 %v1320, 0.5
  %v1337 = vmul.f32 %v1322, 0.5
  %v1338 = vmul.f32 %v1324, 0.5
  %v1339 = vmul.f32 %v1326, 0.5
  %v1340 = vmul.f32 %v1330, 0.5
  %v1341 = vmul.f32 %v1332, 0.5
  %v1342 = vmul.f32 %v1320, 0.044715
  %v1343 = vmul.f32 %v1322, 0.044715
  %v1344 = vmul.f32 %v1324, 0.044715
  %v1345 = vmul.f32 %v1326, 0.044715
  %v1346 = vmul.f32 %v1330, 0.044715
  %v1347 = vmul.f32 %v1332, 0.044715
  %v1348 = vmul.f32 %v1342, %v1320
  %v1349 = vmul.f32 %v1343, %v1322
  %v1350 = vmul.f32 %v1344, %v1324
  %v1351 = vmul.f32 %v1345, %v1326
  %v1352 = vmul.f32 %v1346, %v1330
  %v1353 = vmul.f32 %v1347, %v1332
  %v1354 = vmul.f32 %v1348, %v1320
  %v1355 = vmul.f32 %v1349, %v1322
  %v1356 = vmul.f32 %v1350, %v1324
  %v1357 = vmul.f32 %v1351, %v1326
  %v1358 = vmul.f32 %v1352, %v1330
  %v1359 = vmul.f32 %v1353, %v1332
  %v1360 = vadd.f32 %v1320, %v1354
  %v1361 = vadd.f32 %v1322, %v1355
  %v1362 = vadd.f32 %v1324, %v1356
  %v1363 = vadd.f32 %v1326, %v1357
  %v1364 = vadd.f32 %v1330, %v1358
  %v1365 = vadd.f32 %v1332, %v1359
  %v1366 = vmul.f32 %v1360, 0.7978846
  %v1367 = vmul.f32 %v1361, 0.7978846
  %v1368 = vmul.f32 %v1362, 0.7978846
  %v1369 = vmul.f32 %v1363, 0.7978846
  %v1370 = vmul.f32 %v1364, 0.7978846
  %v1371 = vmul.f32 %v1365, 0.7978846
  %v1372 = vtanh.pop %v1366
  %v1373 = vtanh.pop %v1367
  %v1374 = vtanh.pop %v1368
  %v1375 = vtanh.pop %v1369
  %v1376 = vtanh.pop %v1370
  %v1377 = vtanh.pop %v1371
  %v1378 = vadd.f32 %v1372, 1.0
  %v1379 = vadd.f32 %v1373, 1.0
  %v1380 = vadd.f32 %v1374, 1.0
  %v1381 = vadd.f32 %v1375, 1.0
  %v1382 = vadd.f32 %v1376, 1.0
  %v1383 = vadd.f32 %v1377, 1.0
  %v1384 = vmul.f32 %v1336, %v1378
  %v1385 = vmul.f32 %v1337, %v1379
  %v1386 = vmul.f32 %v1338, %v1380
  %v1387 = vmul.f32 %v1339, %v1381
  %v1388 = vmul.f32 %v1340, %v1382
  %v1389 = vmul.f32 %v1341, %v1383
  %v1390 = vpack.c.bf16 %v1386, %v1384
  %v1391 = vpack.c.bf16 %v1387, %v1385
  %v1392 = vpack.c.bf16 %v1388, %v1388
  %v1393 = vpack.c.bf16 %v1389, %v1389
  %v1394 = vld [vmem:[%s10] sm:$0xf]
  %v1395 = vld [vmem:[%s10 + $0x4] sm:$0xf]
  %v1396 = vld [vmem:[%s10 + $0x8] sm:$0xf]
  %v1397 = vld [vmem:[%s10 + $0xc] sm:$0xf]
  %v1398 = vld [vmem:[%s10 + $0x10] sm:$0xf]
  %v1399 = vld [vmem:[%s10 + $0x14] sm:$0xf]
  %v1400 = vld [vmem:[%s10 + $0x18] sm:$0xf]
  %v1401 = vld [vmem:[%s10 + $0x1c] sm:$0xf]
  %v1402 = vld [vmem:[%s10 + $0x20] sm:$0xf]
  %v1403 = vld [vmem:[%s10 + $0x24] sm:$0xf]
  %v1404 = vld [vmem:[%s10 + $0x28] sm:$0xf]
  %v1405 = vld [vmem:[%s10 + $0x2c] sm:$0xf]
  %v1406 = vld [vmem:[%s10 + $0x30] sm:$0xf]
  %v1407 = vld [vmem:[%s10 + $0x34] sm:$0xf]
  %v1408 = vld [vmem:[%s10 + $0x38] sm:$0xf]
  %v1409 = vld [vmem:[%s10 + $0x3c] sm:$0xf]
  %v1410 = vld [vmem:[%s10 + $0x40] sm:$0xf]
  %v1411 = vld [vmem:[%s10 + $0x44] sm:$0xf]
  %v1412 = vld [vmem:[%s10 + $0x48] sm:$0xf]
  %v1413 = vld [vmem:[%s10 + $0x4c] sm:$0xf]
  %v1414 = vld [vmem:[%s10 + $0x50] sm:$0xf]
  %v1415 = vld [vmem:[%s10 + $0x54] sm:$0xf]
  %v1416 = vld [vmem:[%s10 + $0x58] sm:$0xf]
  %v1417 = vld [vmem:[%s10 + $0x5c] sm:$0xf]
  %v1418 = vld [vmem:[%s10 + $0x60] sm:$0xf]
  %v1419 = vld [vmem:[%s10 + $0x64] sm:$0xf]
  %v1420 = vld [vmem:[%s10 + $0x68] sm:$0xf]
  %v1421 = vld [vmem:[%s10 + $0x6c] sm:$0xf]
  %v1422 = vld [vmem:[%s10 + $0x70] sm:$0xf]
  %v1423 = vld [vmem:[%s10 + $0x74] sm:$0xf]
  %v1424 = vld [vmem:[%s10 + $0x78] sm:$0xf]
  %v1425 = vld [vmem:[%s10 + $0x7c] sm:$0xf]
  %v1427 = vlaneseq
  %v1428 = vshrl.u32 %v1427, 7
  %v1429 = vsub.s32 0, %v1428
  %v1430 = vrot.slane %v173, %v1429
  %v1464 = vunpack.c.l.b16 %v1394
  %v1465 = vunpack.c.l.b16 %v1395
  %v1466 = vunpack.c.l.b16 %v1396
  %v1467 = vunpack.c.l.b16 %v1397
  %v1468 = vunpack.c.l.b16 %v1398
  %v1469 = vunpack.c.l.b16 %v1399
  %v1470 = vunpack.c.l.b16 %v1400
  %v1471 = vunpack.c.l.b16 %v1401
  %v1472 = vunpack.c.l.b16 %v1402
  %v1473 = vunpack.c.l.b16 %v1403
  %v1474 = vunpack.c.l.b16 %v1404
  %v1475 = vunpack.c.l.b16 %v1405
  %v1476 = vunpack.c.l.b16 %v1406
  %v1477 = vunpack.c.l.b16 %v1407
  %v1478 = vunpack.c.l.b16 %v1408
  %v1479 = vunpack.c.l.b16 %v1409
  %v1480 = vunpack.c.l.b16 %v1410
  %v1481 = vunpack.c.l.b16 %v1411
  %v1482 = vunpack.c.l.b16 %v1412
  %v1483 = vunpack.c.l.b16 %v1413
  %v1484 = vunpack.c.l.b16 %v1414
  %v1485 = vunpack.c.l.b16 %v1415
  %v1486 = vunpack.c.l.b16 %v1416
  %v1487 = vunpack.c.l.b16 %v1417
  %v1488 = vunpack.c.l.b16 %v1418
  %v1489 = vunpack.c.l.b16 %v1419
  %v1490 = vunpack.c.l.b16 %v1420
  %v1491 = vunpack.c.l.b16 %v1421
  %v1492 = vunpack.c.l.b16 %v1422
  %v1493 = vunpack.c.l.b16 %v1423
  %v1494 = vunpack.c.l.b16 %v1424
  %v1495 = vunpack.c.l.b16 %v1425
  %v1496 = vpack.c.b16 %v1465, %v1464
  %v1497 = vpack.c.b16 %v1467, %v1466
  %v1498 = vpack.c.b16 %v1469, %v1468
  %v1499 = vpack.c.b16 %v1471, %v1470
  %v1500 = vpack.c.b16 %v1473, %v1472
  %v1501 = vpack.c.b16 %v1475, %v1474
  %v1502 = vpack.c.b16 %v1477, %v1476
  %v1503 = vpack.c.b16 %v1479, %v1478
  %v1504 = vpack.c.b16 %v1481, %v1480
  %v1505 = vpack.c.b16 %v1483, %v1482
  %v1506 = vpack.c.b16 %v1485, %v1484
  %v1507 = vpack.c.b16 %v1487, %v1486
  %v1508 = vpack.c.b16 %v1489, %v1488
  %v1509 = vpack.c.b16 %v1491, %v1490
  %v1510 = vpack.c.b16 %v1493, %v1492
  %v1511 = vpack.c.b16 %v1495, %v1494
  %1528 = vmatprep.subr.bf16.mxu0 0
  %1529 = vmatpush1.bf16.msra.mxu0 %v1496
  %1530 = vmatprep.subr.bf16.mxu0 0
  %1531 = vmatpush1.bf16.msra.mxu0 %v1497
  %1532 = vmatprep.subr.bf16.mxu0 0
  %1533 = vmatpush1.bf16.msra.mxu0 %v1498
  %1534 = vmatprep.subr.bf16.mxu0 0
  %1535 = vmatpush1.bf16.msra.mxu0 %v1499
  %1536 = vmatprep.subr.bf16.mxu0 0
  %1537 = vmatpush1.bf16.msra.mxu0 %v1500
  %1538 = vmatprep.subr.bf16.mxu0 0
  %1539 = vmatpush1.bf16.msra.mxu0 %v1501
  %1540 = vmatprep.subr.bf16.mxu0 0
  %1541 = vmatpush1.bf16.msra.mxu0 %v1502
  %1542 = vmatprep.subr.bf16.mxu0 0
  %1543 = vmatpush1.bf16.msra.mxu0 %v1503
  %1544 = vmatprep.subr.bf16.mxu0 0
  %1545 = vmatpush1.bf16.msra.mxu0 %v1504
  %1546 = vmatprep.subr.bf16.mxu0 0
  %1547 = vmatpush1.bf16.msra.mxu0 %v1505
  %1548 = vmatprep.subr.bf16.mxu0 0
  %1549 = vmatpush1.bf16.msra.mxu0 %v1506
  %1550 = vmatprep.subr.bf16.mxu0 0
  %1551 = vmatpush1.bf16.msra.mxu0 %v1507
  %1552 = vmatprep.subr.bf16.mxu0 0
  %1553 = vmatpush1.bf16.msra.mxu0 %v1508
  %1554 = vmatprep.subr.bf16.mxu0 0
  %1555 = vmatpush1.bf16.msra.mxu0 %v1509
  %1556 = vmatprep.subr.bf16.mxu0 0
  %1557 = vmatpush1.bf16.msra.mxu0 %v1510
  %1558 = vmatprep.subr.bf16.mxu0 0
  %1559 = vmatpush1.bf16.msra.mxu0 %v1511
  %1560 = vmatprep.mubr.bf16.mxu0 %v1391
  %1561 = vmatmul.mubr.bf16.gmra.mrb[0].mxu0 %v1390
  %v1562 = vpop.f32.mrb[0].mxu0
  %v1563 = vadd.f32 %v1430, %v1562
  %v1564 = vpop.f32.mrb[0].mxu0
  %v1565 = vpop.f32.mrb[0].mxu0
  %v1566 = vadd.f32 %v1430, %v1565
  %v1567 = vpop.f32.mrb[0].mxu0
  %1568 = vmatprep.mubr.bf16.mxu0 %v1393
  %1569 = vmatmul.mubr.bf16.gmra.mrb[0].mxu0 %v1392
  %v1570 = vpop.f32.mrb[0].mxu0
  %v1571 = vadd.f32 %v1430, %v1570
  %v1572 = vpop.f32.mrb[0].mxu0
  %v1573 = vpop.f32.mrb[0].mxu0
  %v1574 = vpop.f32.mrb[0].mxu0
  %1575 = vdwg.mxu0
  %v1576 = vadd.f32 %v1157, %v1563
  %v1577 = vadd.f32 %v1158, %v1566
  %v1578 = vadd.f32 %v1159, %v1571
  %s1579 = scalar_lea.vmem %s7, 6
  %v1580 = vld [vmem:[%s1579] sm:$0x1]
  %v1581 = vld [vmem:[%s1579 + $0x1] sm:$0x1]
  %v1582 = vld [vmem:[%s1579 + $0x2] sm:$0x1]
  %v1583 = vld [vmem:[%s1579 + $0x3] sm:$0x1]
  %v1584 = vld [vmem:[%s1579 + $0x4] sm:$0x1]
  %v1585 = vld [vmem:[%s1579 + $0x5] sm:$0x1]
  %v1586 = vsel %vm174, %v1576, 0.0
  %1587 = vadd.xlane.f32.xlu0 %v1586
  %v1588 = vpop.xlane.xlu0 %1587
  %v1589 = vsel %vm174, %v1577, 0.0
  %1590 = vadd.xlane.f32.xlu0 %v1589
  %v1591 = vpop.xlane.xlu0 %1590
  %v1592 = vsel %vm181, %v1578, 0.0
  %1593 = vadd.xlane.f32.xlu0 %v1592
  %v1594 = vpop.xlane.xlu0 %1593
  %v1595 = vmul.f32 %v1588, %v185
  %v1596 = vmul.f32 %v1591, %v185
  %v1597 = vmul.f32 %v1594, %v185
  %v1598 = vsub.f32 %v1576, %v1595
  %v1599 = vsub.f32 %v1577, %v1596
  %v1600 = vsub.f32 %v1578, %v1597
  %v1601 = vmul.f32 %v1598, %v1598
  %v1602 = vmul.f32 %v1599, %v1599
  %v1603 = vmul.f32 %v1600, %v1600
  %v1604 = vsel %vm174, %v1601, 0.0
  %1605 = vadd.xlane.f32.xlu0 %v1604
  %v1606 = vpop.xlane.xlu0 %1605
  %v1607 = vsel %vm174, %v1602, 0.0
  %1608 = vadd.xlane.f32.xlu0 %v1607
  %v1609 = vpop.xlane.xlu0 %1608
  %v1610 = vsel %vm181, %v1603, 0.0
  %1611 = vadd.xlane.f32.xlu0 %v1610
  %v1612 = vpop.xlane.xlu0 %1611
  %v1613 = vmul.f32 %v1606, %v185
  %v1614 = vmul.f32 %v1609, %v185
  %v1615 = vmul.f32 %v1612, %v185
  %v1616 = vadd.f32 %v1613, 1e-05
  %v1617 = vadd.f32 %v1614, 1e-05
  %v1618 = vadd.f32 %v1615, 1e-05
  %v1619 = vrsqrt.pop %v1616
  %v1620 = vrsqrt.pop %v1617
  %v1621 = vrsqrt.pop %v1618
  %v1622 = vmul.f32 %v1598, %v1619
  %v1623 = vmul.f32 %v1599, %v1620
  %v1624 = vmul.f32 %v1600, %v1621
  %v1626 = vlaneseq
  %v1627 = vshrl.u32 %v1626, 7
  %v1628 = vsub.s32 0, %v1627
  %v1629 = vrot.slane %v1580, %v1628
  %v1631 = vmul.f32 %v1622, %v1629
  %v1632 = vmul.f32 %v1623, %v1629
  %v1633 = vmul.f32 %v1624, %v1629
  %v1635 = vlaneseq
  %v1636 = vshrl.u32 %v1635, 7
  %v1637 = vsub.s32 0, %v1636
  %v1638 = vrot.slane %v1581, %v1637
  %v1640 = vadd.f32 %v1631, %v1638
  %v1641 = vadd.f32 %v1632, %v1638
  %v1642 = vadd.f32 %v1633, %v1638
  %v1643 = vpack.c.bf16 %v1641, %v1640
  %v1644 = vpack.c.bf16 %v1642, %v1642
  %s1645 = scalar_lea.vmem %s4, 64
  %v1646 = vld [vmem:[%s1645] sm:$0xff]
  %v1647 = vld [vmem:[%s1645 + $0x8] sm:$0xff]
  %v1648 = vld [vmem:[%s1645 + $0x10] sm:$0xff]
  %v1649 = vld [vmem:[%s1645 + $0x18] sm:$0xff]
  %v1650 = vld [vmem:[%s1645 + $0x20] sm:$0xff]
  %v1651 = vld [vmem:[%s1645 + $0x28] sm:$0xff]
  %v1652 = vld [vmem:[%s1645 + $0x30] sm:$0xff]
  %v1653 = vld [vmem:[%s1645 + $0x38] sm:$0xff]
  %s1654 = scalar_lea.vmem %s5, 2
  %v1655 = vld [vmem:[%s1654] sm:$0x3]
  %v1657 = vlaneseq
  %v1658 = vshrl.u32 %v1657, 7
  %v1659 = vsub.s32 0, %v1658
  %v1660 = vrot.slane %v1655, %v1659
  %v1661 = vlaneseq
  %v1662 = vshrl.u32 %v1661, 7
  %v1663 = vsub.s32 1, %v1662
  %v1664 = vrot.slane %v1655, %v1663
  %v1675 = vunpack.c.l.b16 %v1646
  %v1676 = vunpack.c.h.b16 %v1646
  %v1677 = vunpack.c.l.b16 %v1647
  %v1678 = vunpack.c.h.b16 %v1647
  %v1679 = vunpack.c.l.b16 %v1648
  %v1680 = vunpack.c.h.b16 %v1648
  %v1681 = vunpack.c.l.b16 %v1649
  %v1682 = vunpack.c.h.b16 %v1649
  %v1683 = vunpack.c.l.b16 %v1650
  %v1684 = vunpack.c.h.b16 %v1650
  %v1685 = vunpack.c.l.b16 %v1651
  %v1686 = vunpack.c.h.b16 %v1651
  %v1687 = vunpack.c.l.b16 %v1652
  %v1688 = vunpack.c.h.b16 %v1652
  %v1689 = vunpack.c.l.b16 %v1653
  %v1690 = vunpack.c.h.b16 %v1653
  %v1691 = vpack.c.b16 %v1677, %v1675
  %v1692 = vpack.c.b16 %v1678, %v1676
  %v1693 = vpack.c.b16 %v1681, %v1679
  %v1694 = vpack.c.b16 %v1682, %v1680
  %v1695 = vpack.c.b16 %v1685, %v1683
  %v1696 = vpack.c.b16 %v1686, %v1684
  %v1697 = vpack.c.b16 %v1689, %v1687
  %v1698 = vpack.c.b16 %v1690, %v1688
  %v1708 = vsel %vm174, %v1643, 0
  %v1711 = vsel %vm174, %v1644, 0
  %1713 = vmatprep.subr.bf16.mxu0 %v1692
  %1714 = vmatpush1.bf16.msra.mxu0 %v1691
  %1715 = vmatprep.subr.bf16.mxu0 %v1694
  %1716 = vmatpush1.bf16.msra.mxu0 %v1693
  %1717 = vmatprep.subr.bf16.mxu0 %v1696
  %1718 = vmatpush1.bf16.msra.mxu0 %v1695
  %1719 = vmatprep.subr.bf16.mxu0 %v1698
  %1720 = vmatpush1.bf16.msra.mxu0 %v1697
  %1721 = vmatprep.subr.bf16.mxu0 0
  %1722 = vmatpush1.bf16.msra.mxu0 0
  %1723 = vmatprep.subr.bf16.mxu0 0
  %1724 = vmatpush1.bf16.msra.mxu0 0
  %1725 = vmatprep.subr.bf16.mxu0 0
  %1726 = vmatpush1.bf16.msra.mxu0 0
  %1727 = vmatprep.subr.bf16.mxu0 0
  %1728 = vmatpush1.bf16.msra.mxu0 0
  %1729 = vmatprep.subr.bf16.mxu0 0
  %1730 = vmatpush1.bf16.msra.mxu0 0
  %1731 = vmatprep.subr.bf16.mxu0 0
  %1732 = vmatpush1.bf16.msra.mxu0 0
  %1733 = vmatprep.subr.bf16.mxu0 0
  %1734 = vmatpush1.bf16.msra.mxu0 0
  %1735 = vmatprep.subr.bf16.mxu0 0
  %1736 = vmatpush1.bf16.msra.mxu0 0
  %1737 = vmatprep.subr.bf16.mxu0 0
  %1738 = vmatpush1.bf16.msra.mxu0 0
  %1739 = vmatprep.subr.bf16.mxu0 0
  %1740 = vmatpush1.bf16.msra.mxu0 0
  %1741 = vmatprep.subr.bf16.mxu0 0
  %1742 = vmatpush1.bf16.msra.mxu0 0
  %1743 = vmatprep.subr.bf16.mxu0 0
  %1744 = vmatpush1.bf16.msra.mxu0 0
  %1745 = vmatprep.mubr.bf16.mxu0 0
  %1746 = vmatmul.mubr.bf16.gmra.mrb[0].mxu0 %v1708
  %v1747 = vpop.f32.mrb[0].mxu0
  %v1748 = vadd.f32 %v1660, %v1747
  %v1749 = vpop.f32.mrb[0].mxu0
  %v1750 = vadd.f32 %v1664, %v1749
  %v1751 = vpop.f32.mrb[0].mxu0
  %v1752 = vadd.f32 %v1660, %v1751
  %v1753 = vpop.f32.mrb[0].mxu0
  %v1754 = vadd.f32 %v1664, %v1753
  %1755 = vmatprep.mubr.bf16.mxu0 0
  %1756 = vmatmul.mubr.bf16.gmra.mrb[0].mxu0 %v1711
  %v1757 = vpop.f32.mrb[0].mxu0
  %v1758 = vadd.f32 %v1660, %v1757
  %v1759 = vpop.f32.mrb[0].mxu0
  %v1760 = vadd.f32 %v1664, %v1759
  %v1761 = vpop.f32.mrb[0].mxu0
  %v1762 = vpop.f32.mrb[0].mxu0
  %1763 = vdwg.mxu0
  %v1764 = vpack.c.bf16 %v1752, %v1748
  %v1765 = vpack.c.bf16 %v1754, %v1750
  %v1766 = vpack.c.bf16 %v1758, %v1758
  %v1767 = vpack.c.bf16 %v1760, %v1760
  %1770 = vrot.lane.b32.xlu0 %v1764, 112
  %v1771 = vpop.permute.xlu0 %1770
  %1772 = vrot.lane.b32.xlu0 %v1766, 112
  %v1773 = vpop.permute.xlu0 %1772
  %1774 = vrot.lane.b32.xlu0 %v1764, 96
  %v1775 = vpop.permute.xlu0 %1774
  %1776 = vrot.lane.b32.xlu0 %v1766, 96
  %v1777 = vpop.permute.xlu0 %1776
  %1778 = vrot.lane.b32.xlu0 %v1764, 80
  %v1779 = vpop.permute.xlu0 %1778
  %1780 = vrot.lane.b32.xlu0 %v1766, 80
  %v1781 = vpop.permute.xlu0 %1780
  %1784 = vrot.lane.b32.xlu0 %v1765, 112
  %v1785 = vpop.permute.xlu0 %1784
  %1786 = vrot.lane.b32.xlu0 %v1767, 112
  %v1787 = vpop.permute.xlu0 %1786
  %1789 = vrot.lane.b32.xlu0 %v1765, 96
  %v1790 = vpop.permute.xlu0 %1789
  %1791 = vrot.lane.b32.xlu0 %v1767, 96
  %v1792 = vpop.permute.xlu0 %1791
  %1794 = vrot.lane.b32.xlu0 %v1765, 80
  %v1795 = vpop.permute.xlu0 %1794
  %1796 = vrot.lane.b32.xlu0 %v1767, 80
  %v1797 = vpop.permute.xlu0 %1796
  %1799 = vrot.lane.b32.xlu0 %v1764, 64
  %v1800 = vpop.permute.xlu0 %1799
  %1801 = vrot.lane.b32.xlu0 %v1766, 64
  %v1802 = vpop.permute.xlu0 %1801
  %v1804 = vsel %vm392, %v1764, 0
  %v1807 = vsel %vm392, %v1766, 0
  %v1810 = vsel %vm392, %v1800, 0
  %v1813 = vsel %vm392, %v1802, 0
  %1815 = vmatprep.subr.bf16.mxu0 0
  %1816 = vmatpush1.bf16.xpose.msra.mxu0 %v1810
  %1817 = vmatprep.subr.bf16.mxu0 0
  %1818 = vmatpush1.bf16.xpose.msra.mxu0 %v1813
  %1819 = vmatprep.subr.bf16.mxu0 0
  %1820 = vmatpush1.bf16.xpose.msra.mxu0 0
  %1821 = vmatprep.subr.bf16.mxu0 0
  %1822 = vmatpush1.bf16.xpose.msra.mxu0 0
  %1823 = vmatprep.subr.bf16.mxu0 0
  %1824 = vmatpush1.bf16.xpose.msra.mxu0 0
  %1825 = vmatprep.subr.bf16.mxu0 0
  %1826 = vmatpush1.bf16.xpose.msra.mxu0 0
  %1827 = vmatprep.subr.bf16.mxu0 0
  %1828 = vmatpush1.bf16.xpose.msra.mxu0 0
  %1829 = vmatprep.subr.bf16.mxu0 0
  %1830 = vmatpush1.bf16.xpose.msra.mxu0 0
  %1831 = vmatprep.subr.bf16.mxu0 0
  %1832 = vmatpush1.bf16.xpose.msra.mxu0 0
  %1833 = vmatprep.subr.bf16.mxu0 0
  %1834 = vmatpush1.bf16.xpose.msra.mxu0 0
  %1835 = vmatprep.subr.bf16.mxu0 0
  %1836 = vmatpush1.bf16.xpose.msra.mxu0 0
  %1837 = vmatprep.subr.bf16.mxu0 0
  %1838 = vmatpush1.bf16.xpose.msra.mxu0 0
  %1839 = vmatprep.subr.bf16.mxu0 0
  %1840 = vmatpush1.bf16.xpose.msra.mxu0 0
  %1841 = vmatprep.subr.bf16.mxu0 0
  %1842 = vmatpush1.bf16.xpose.msra.mxu0 0
  %1843 = vmatprep.subr.bf16.mxu0 0
  %1844 = vmatpush1.bf16.xpose.msra.mxu0 0
  %1845 = vmatprep.subr.bf16.mxu0 0
  %1846 = vmatpush1.bf16.xpose.msra.mxu0 0
  %1847 = vmatprep.mubr.bf16.mxu0 0
  %1848 = vmatmul.mubr.bf16.gmra.mrb[0].mxu0 %v1804
  %v1849 = vpop.f32.mrb[0].mxu0
  %v1850 = vadd.f32 %v45, %v1849
  %v1851 = vpop.f32.mrb[0].mxu0
  %v1852 = vpop.f32.mrb[0].mxu0
  %v1853 = vadd.f32 %v46, %v1852
  %v1854 = vpop.f32.mrb[0].mxu0
  %1855 = vmatprep.mubr.bf16.mxu0 0
  %1856 = vmatmul.mubr.bf16.gmra.mrb[0].mxu0 %v1807
  %v1857 = vpop.f32.mrb[0].mxu0
  %v1858 = vadd.f32 %v47, %v1857
  %v1859 = vpop.f32.mrb[0].mxu0
  %v1860 = vpop.f32.mrb[0].mxu0
  %v1861 = vpop.f32.mrb[0].mxu0
  %1862 = vdwg.mxu0
  %1863 = vrot.lane.b32.xlu0 %v1771, 64
  %v1864 = vpop.permute.xlu0 %1863
  %1865 = vrot.lane.b32.xlu0 %v1773, 64
  %v1866 = vpop.permute.xlu0 %1865
  %v1868 = vsel %vm392, %v1771, 0
  %v1871 = vsel %vm392, %v1773, 0
  %v1874 = vsel %vm392, %v1864, 0
  %v1877 = vsel %vm392, %v1866, 0
  %1879 = vmatprep.subr.bf16.mxu0 0
  %1880 = vmatpush1.bf16.xpose.msra.mxu0 %v1874
  %1881 = vmatprep.subr.bf16.mxu0 0
  %1882 = vmatpush1.bf16.xpose.msra.mxu0 %v1877
  %1883 = vmatprep.subr.bf16.mxu0 0
  %1884 = vmatpush1.bf16.xpose.msra.mxu0 0
  %1885 = vmatprep.subr.bf16.mxu0 0
  %1886 = vmatpush1.bf16.xpose.msra.mxu0 0
  %1887 = vmatprep.subr.bf16.mxu0 0
  %1888 = vmatpush1.bf16.xpose.msra.mxu0 0
  %1889 = vmatprep.subr.bf16.mxu0 0
  %1890 = vmatpush1.bf16.xpose.msra.mxu0 0
  %1891 = vmatprep.subr.bf16.mxu0 0
  %1892 = vmatpush1.bf16.xpose.msra.mxu0 0
  %1893 = vmatprep.subr.bf16.mxu0 0
  %1894 = vmatpush1.bf16.xpose.msra.mxu0 0
  %1895 = vmatprep.subr.bf16.mxu0 0
  %1896 = vmatpush1.bf16.xpose.msra.mxu0 0
  %1897 = vmatprep.subr.bf16.mxu0 0
  %1898 = vmatpush1.bf16.xpose.msra.mxu0 0
  %1899 = vmatprep.subr.bf16.mxu0 0
  %1900 = vmatpush1.bf16.xpose.msra.mxu0 0
  %1901 = vmatprep.subr.bf16.mxu0 0
  %1902 = vmatpush1.bf16.xpose.msra.mxu0 0
  %1903 = vmatprep.subr.bf16.mxu0 0
  %1904 = vmatpush1.bf16.xpose.msra.mxu0 0
  %1905 = vmatprep.subr.bf16.mxu0 0
  %1906 = vmatpush1.bf16.xpose.msra.mxu0 0
  %1907 = vmatprep.subr.bf16.mxu0 0
  %1908 = vmatpush1.bf16.xpose.msra.mxu0 0
  %1909 = vmatprep.subr.bf16.mxu0 0
  %1910 = vmatpush1.bf16.xpose.msra.mxu0 0
  %1911 = vmatprep.mubr.bf16.mxu0 0
  %1912 = vmatmul.mubr.bf16.gmra.mrb[0].mxu0 %v1868
  %v1913 = vpop.f32.mrb[0].mxu0
  %v1914 = vadd.f32 %v45, %v1913
  %v1915 = vpop.f32.mrb[0].mxu0
  %v1916 = vpop.f32.mrb[0].mxu0
  %v1917 = vadd.f32 %v46, %v1916
  %v1918 = vpop.f32.mrb[0].mxu0
  %1919 = vmatprep.mubr.bf16.mxu0 0
  %1920 = vmatmul.mubr.bf16.gmra.mrb[0].mxu0 %v1871
  %v1921 = vpop.f32.mrb[0].mxu0
  %v1922 = vadd.f32 %v47, %v1921
  %v1923 = vpop.f32.mrb[0].mxu0
  %v1924 = vpop.f32.mrb[0].mxu0
  %v1925 = vpop.f32.mrb[0].mxu0
  %1926 = vdwg.mxu0
  %1927 = vrot.lane.b32.xlu0 %v1775, 64
  %v1928 = vpop.permute.xlu0 %1927
  %1929 = vrot.lane.b32.xlu0 %v1777, 64
  %v1930 = vpop.permute.xlu0 %1929
  %v1932 = vsel %vm392, %v1775, 0
  %v1935 = vsel %vm392, %v1777, 0
  %v1938 = vsel %vm392, %v1928, 0
  %v1941 = vsel %vm392, %v1930, 0
  %1943 = vmatprep.subr.bf16.mxu0 0
  %1944 = vmatpush1.bf16.xpose.msra.mxu0 %v1938
  %1945 = vmatprep.subr.bf16.mxu0 0
  %1946 = vmatpush1.bf16.xpose.msra.mxu0 %v1941
  %1947 = vmatprep.subr.bf16.mxu0 0
  %1948 = vmatpush1.bf16.xpose.msra.mxu0 0
  %1949 = vmatprep.subr.bf16.mxu0 0
  %1950 = vmatpush1.bf16.xpose.msra.mxu0 0
  %1951 = vmatprep.subr.bf16.mxu0 0
  %1952 = vmatpush1.bf16.xpose.msra.mxu0 0
  %1953 = vmatprep.subr.bf16.mxu0 0
  %1954 = vmatpush1.bf16.xpose.msra.mxu0 0
  %1955 = vmatprep.subr.bf16.mxu0 0
  %1956 = vmatpush1.bf16.xpose.msra.mxu0 0
  %1957 = vmatprep.subr.bf16.mxu0 0
  %1958 = vmatpush1.bf16.xpose.msra.mxu0 0
  %1959 = vmatprep.subr.bf16.mxu0 0
  %1960 = vmatpush1.bf16.xpose.msra.mxu0 0
  %1961 = vmatprep.subr.bf16.mxu0 0
  %1962 = vmatpush1.bf16.xpose.msra.mxu0 0
  %1963 = vmatprep.subr.bf16.mxu0 0
  %1964 = vmatpush1.bf16.xpose.msra.mxu0 0
  %1965 = vmatprep.subr.bf16.mxu0 0
  %1966 = vmatpush1.bf16.xpose.msra.mxu0 0
  %1967 = vmatprep.subr.bf16.mxu0 0
  %1968 = vmatpush1.bf16.xpose.msra.mxu0 0
  %1969 = vmatprep.subr.bf16.mxu0 0
  %1970 = vmatpush1.bf16.xpose.msra.mxu0 0
  %1971 = vmatprep.subr.bf16.mxu0 0
  %1972 = vmatpush1.bf16.xpose.msra.mxu0 0
  %1973 = vmatprep.subr.bf16.mxu0 0
  %1974 = vmatpush1.bf16.xpose.msra.mxu0 0
  %1975 = vmatprep.mubr.bf16.mxu0 0
  %1976 = vmatmul.mubr.bf16.gmra.mrb[0].mxu0 %v1932
  %v1977 = vpop.f32.mrb[0].mxu0
  %v1978 = vadd.f32 %v45, %v1977
  %v1979 = vpop.f32.mrb[0].mxu0
  %v1980 = vpop.f32.mrb[0].mxu0
  %v1981 = vadd.f32 %v46, %v1980
  %v1982 = vpop.f32.mrb[0].mxu0
  %1983 = vmatprep.mubr.bf16.mxu0 0
  %1984 = vmatmul.mubr.bf16.gmra.mrb[0].mxu0 %v1935
  %v1985 = vpop.f32.mrb[0].mxu0
  %v1986 = vadd.f32 %v47, %v1985
  %v1987 = vpop.f32.mrb[0].mxu0
  %v1988 = vpop.f32.mrb[0].mxu0
  %v1989 = vpop.f32.mrb[0].mxu0
  %1990 = vdwg.mxu0
  %1991 = vrot.lane.b32.xlu0 %v1779, 64
  %v1992 = vpop.permute.xlu0 %1991
  %1993 = vrot.lane.b32.xlu0 %v1781, 64
  %v1994 = vpop.permute.xlu0 %1993
  %v1996 = vsel %vm392, %v1779, 0
  %v1999 = vsel %vm392, %v1781, 0
  %v2002 = vsel %vm392, %v1992, 0
  %v2005 = vsel %vm392, %v1994, 0
  %2007 = vmatprep.subr.bf16.mxu0 0
  %2008 = vmatpush1.bf16.xpose.msra.mxu0 %v2002
  %2009 = vmatprep.subr.bf16.mxu0 0
  %2010 = vmatpush1.bf16.xpose.msra.mxu0 %v2005
  %2011 = vmatprep.subr.bf16.mxu0 0
  %2012 = vmatpush1.bf16.xpose.msra.mxu0 0
  %2013 = vmatprep.subr.bf16.mxu0 0
  %2014 = vmatpush1.bf16.xpose.msra.mxu0 0
  %2015 = vmatprep.subr.bf16.mxu0 0
  %2016 = vmatpush1.bf16.xpose.msra.mxu0 0
  %2017 = vmatprep.subr.bf16.mxu0 0
  %2018 = vmatpush1.bf16.xpose.msra.mxu0 0
  %2019 = vmatprep.subr.bf16.mxu0 0
  %2020 = vmatpush1.bf16.xpose.msra.mxu0 0
  %2021 = vmatprep.subr.bf16.mxu0 0
  %2022 = vmatpush1.bf16.xpose.msra.mxu0 0
  %2023 = vmatprep.subr.bf16.mxu0 0
  %2024 = vmatpush1.bf16.xpose.msra.mxu0 0
  %2025 = vmatprep.subr.bf16.mxu0 0
  %2026 = vmatpush1.bf16.xpose.msra.mxu0 0
  %2027 = vmatprep.subr.bf16.mxu0 0
  %2028 = vmatpush1.bf16.xpose.msra.mxu0 0
  %2029 = vmatprep.subr.bf16.mxu0 0
  %2030 = vmatpush1.bf16.xpose.msra.mxu0 0
  %2031 = vmatprep.subr.bf16.mxu0 0
  %2032 = vmatpush1.bf16.xpose.msra.mxu0 0
  %2033 = vmatprep.subr.bf16.mxu0 0
  %2034 = vmatpush1.bf16.xpose.msra.mxu0 0
  %2035 = vmatprep.subr.bf16.mxu0 0
  %2036 = vmatpush1.bf16.xpose.msra.mxu0 0
  %2037 = vmatprep.subr.bf16.mxu0 0
  %2038 = vmatpush1.bf16.xpose.msra.mxu0 0
  %2039 = vmatprep.mubr.bf16.mxu0 0
  %2040 = vmatmul.mubr.bf16.gmra.mrb[0].mxu0 %v1996
  %v2041 = vpop.f32.mrb[0].mxu0
  %v2042 = vadd.f32 %v45, %v2041
  %v2043 = vpop.f32.mrb[0].mxu0
  %v2044 = vpop.f32.mrb[0].mxu0
  %v2045 = vadd.f32 %v46, %v2044
  %v2046 = vpop.f32.mrb[0].mxu0
  %2047 = vmatprep.mubr.bf16.mxu0 0
  %2048 = vmatmul.mubr.bf16.gmra.mrb[0].mxu0 %v1999
  %v2049 = vpop.f32.mrb[0].mxu0
  %v2050 = vadd.f32 %v47, %v2049
  %v2051 = vpop.f32.mrb[0].mxu0
  %v2052 = vpop.f32.mrb[0].mxu0
  %v2053 = vpop.f32.mrb[0].mxu0
  %2054 = vdwg.mxu0
  %v2055 = vsel %vm645, %v1850, -inf
  %2056 = vmax.xlane.f32.xlu0 %v2055
  %v2057 = vpop.xlane.xlu0 %2056
  %v2058 = vsel %vm645, %v1853, -inf
  %2059 = vmax.xlane.f32.xlu0 %v2058
  %v2060 = vpop.xlane.xlu0 %2059
  %v2061 = vsel %vm652, %v1858, -inf
  %2062 = vmax.xlane.f32.xlu0 %v2061
  %v2063 = vpop.xlane.xlu0 %2062
  %v2064 = vsel %vm645, %v1914, -inf
  %2065 = vmax.xlane.f32.xlu0 %v2064
  %v2066 = vpop.xlane.xlu0 %2065
  %v2067 = vsel %vm645, %v1917, -inf
  %2068 = vmax.xlane.f32.xlu0 %v2067
  %v2069 = vpop.xlane.xlu0 %2068
  %v2070 = vsel %vm652, %v1922, -inf
  %2071 = vmax.xlane.f32.xlu0 %v2070
  %v2072 = vpop.xlane.xlu0 %2071
  %v2073 = vsel %vm645, %v1978, -inf
  %2074 = vmax.xlane.f32.xlu0 %v2073
  %v2075 = vpop.xlane.xlu0 %2074
  %v2076 = vsel %vm645, %v1981, -inf
  %2077 = vmax.xlane.f32.xlu0 %v2076
  %v2078 = vpop.xlane.xlu0 %2077
  %v2079 = vsel %vm652, %v1986, -inf
  %2080 = vmax.xlane.f32.xlu0 %v2079
  %v2081 = vpop.xlane.xlu0 %2080
  %v2082 = vsel %vm645, %v2042, -inf
  %2083 = vmax.xlane.f32.xlu0 %v2082
  %v2084 = vpop.xlane.xlu0 %2083
  %v2085 = vsel %vm645, %v2045, -inf
  %2086 = vmax.xlane.f32.xlu0 %v2085
  %v2087 = vpop.xlane.xlu0 %2086
  %v2088 = vsel %vm652, %v2050, -inf
  %2089 = vmax.xlane.f32.xlu0 %v2088
  %v2090 = vpop.xlane.xlu0 %2089
  %v2091 = vsub.f32 %v1850, %v2057
  %v2092 = vsub.f32 %v1853, %v2060
  %v2093 = vsub.f32 %v1858, %v2063
  %v2094 = vsub.f32 %v1914, %v2066
  %v2095 = vsub.f32 %v1917, %v2069
  %v2096 = vsub.f32 %v1922, %v2072
  %v2097 = vsub.f32 %v1978, %v2075
  %v2098 = vsub.f32 %v1981, %v2078
  %v2099 = vsub.f32 %v1986, %v2081
  %v2100 = vsub.f32 %v2042, %v2084
  %v2101 = vsub.f32 %v2045, %v2087
  %v2102 = vsub.f32 %v2050, %v2090
  %v2103 = vmul.f32 %v2091, 1.442695
  %v2104 = vpow.pop %v2103
  %v2105 = vmul.f32 %v2092, 1.442695
  %v2106 = vpow.pop %v2105
  %v2107 = vmul.f32 %v2093, 1.442695
  %v2108 = vpow.pop %v2107
  %v2109 = vmul.f32 %v2094, 1.442695
  %v2110 = vpow.pop %v2109
  %v2111 = vmul.f32 %v2095, 1.442695
  %v2112 = vpow.pop %v2111
  %v2113 = vmul.f32 %v2096, 1.442695
  %v2114 = vpow.pop %v2113
  %v2115 = vmul.f32 %v2097, 1.442695
  %v2116 = vpow.pop %v2115
  %v2117 = vmul.f32 %v2098, 1.442695
  %v2118 = vpow.pop %v2117
  %v2119 = vmul.f32 %v2099, 1.442695
  %v2120 = vpow.pop %v2119
  %v2121 = vmul.f32 %v2100, 1.442695
  %v2122 = vpow.pop %v2121
  %v2123 = vmul.f32 %v2101, 1.442695
  %v2124 = vpow.pop %v2123
  %v2125 = vmul.f32 %v2102, 1.442695
  %v2126 = vpow.pop %v2125
  %v2127 = vsel %vm645, %v2104, 0.0
  %2128 = vadd.xlane.f32.xlu0 %v2127
  %v2129 = vpop.xlane.xlu0 %2128
  %v2130 = vsel %vm645, %v2106, 0.0
  %2131 = vadd.xlane.f32.xlu0 %v2130
  %v2132 = vpop.xlane.xlu0 %2131
  %v2133 = vsel %vm652, %v2108, 0.0
  %2134 = vadd.xlane.f32.xlu0 %v2133
  %v2135 = vpop.xlane.xlu0 %2134
  %v2136 = vsel %vm645, %v2110, 0.0
  %2137 = vadd.xlane.f32.xlu0 %v2136
  %v2138 = vpop.xlane.xlu0 %2137
  %v2139 = vsel %vm645, %v2112, 0.0
  %2140 = vadd.xlane.f32.xlu0 %v2139
  %v2141 = vpop.xlane.xlu0 %2140
  %v2142 = vsel %vm652, %v2114, 0.0
  %2143 = vadd.xlane.f32.xlu0 %v2142
  %v2144 = vpop.xlane.xlu0 %2143
  %v2145 = vsel %vm645, %v2116, 0.0
  %2146 = vadd.xlane.f32.xlu0 %v2145
  %v2147 = vpop.xlane.xlu0 %2146
  %v2148 = vsel %vm645, %v2118, 0.0
  %2149 = vadd.xlane.f32.xlu0 %v2148
  %v2150 = vpop.xlane.xlu0 %2149
  %v2151 = vsel %vm652, %v2120, 0.0
  %2152 = vadd.xlane.f32.xlu0 %v2151
  %v2153 = vpop.xlane.xlu0 %2152
  %v2154 = vsel %vm645, %v2122, 0.0
  %2155 = vadd.xlane.f32.xlu0 %v2154
  %v2156 = vpop.xlane.xlu0 %2155
  %v2157 = vsel %vm645, %v2124, 0.0
  %2158 = vadd.xlane.f32.xlu0 %v2157
  %v2159 = vpop.xlane.xlu0 %2158
  %v2160 = vsel %vm652, %v2126, 0.0
  %2161 = vadd.xlane.f32.xlu0 %v2160
  %v2162 = vpop.xlane.xlu0 %2161
  %v2163 = vrcp.pop %v2129
  %v2164 = vrcp.pop %v2132
  %v2165 = vrcp.pop %v2135
  %v2166 = vrcp.pop %v2138
  %v2167 = vrcp.pop %v2141
  %v2168 = vrcp.pop %v2144
  %v2169 = vrcp.pop %v2147
  %v2170 = vrcp.pop %v2150
  %v2171 = vrcp.pop %v2153
  %v2172 = vrcp.pop %v2156
  %v2173 = vrcp.pop %v2159
  %v2174 = vrcp.pop %v2162
  %v2175 = vmul.f32 %v2104, %v2163
  %v2176 = vmul.f32 %v2106, %v2164
  %v2177 = vmul.f32 %v2108, %v2165
  %v2178 = vmul.f32 %v2110, %v2166
  %v2179 = vmul.f32 %v2112, %v2167
  %v2180 = vmul.f32 %v2114, %v2168
  %v2181 = vmul.f32 %v2116, %v2169
  %v2182 = vmul.f32 %v2118, %v2170
  %v2183 = vmul.f32 %v2120, %v2171
  %v2184 = vmul.f32 %v2122, %v2172
  %v2185 = vmul.f32 %v2124, %v2173
  %v2186 = vmul.f32 %v2126, %v2174
  %v2187 = vpack.c.bf16 %v2176, %v2175
  %v2188 = vpack.c.bf16 %v2177, %v2177
  %v2189 = vpack.c.bf16 %v2179, %v2178
  %v2190 = vpack.c.bf16 %v2180, %v2180
  %v2191 = vpack.c.bf16 %v2182, %v2181
  %v2192 = vpack.c.bf16 %v2183, %v2183
  %v2193 = vpack.c.bf16 %v2185, %v2184
  %v2194 = vpack.c.bf16 %v2186, %v2186
  %v2196 = vsel %vm645, %v2187, 0
  %v2199 = vsel %vm645, %v2188, 0
  %v2202 = vsel %vm793, %v1767, 0
  %2204 = vmatprep.subr.bf16.mxu0 0
  %2205 = vmatpush1.bf16.msra.mxu0 %v1765
  %2206 = vmatprep.subr.bf16.mxu0 0
  %2207 = vmatpush1.bf16.msra.mxu0 %v2202
  %2208 = vmatprep.subr.bf16.mxu0 0
  %2209 = vmatpush1.bf16.msra.mxu0 0
  %2210 = vmatprep.subr.bf16.mxu0 0
  %2211 = vmatpush1.bf16.msra.mxu0 0
  %2212 = vmatprep.subr.bf16.mxu0 0
  %2213 = vmatpush1.bf16.msra.mxu0 0
  %2214 = vmatprep.subr.bf16.mxu0 0
  %2215 = vmatpush1.bf16.msra.mxu0 0
  %2216 = vmatprep.subr.bf16.mxu0 0
  %2217 = vmatpush1.bf16.msra.mxu0 0
  %2218 = vmatprep.subr.bf16.mxu0 0
  %2219 = vmatpush1.bf16.msra.mxu0 0
  %2220 = vmatprep.subr.bf16.mxu0 0
  %2221 = vmatpush1.bf16.msra.mxu0 0
  %2222 = vmatprep.subr.bf16.mxu0 0
  %2223 = vmatpush1.bf16.msra.mxu0 0
  %2224 = vmatprep.subr.bf16.mxu0 0
  %2225 = vmatpush1.bf16.msra.mxu0 0
  %2226 = vmatprep.subr.bf16.mxu0 0
  %2227 = vmatpush1.bf16.msra.mxu0 0
  %2228 = vmatprep.subr.bf16.mxu0 0
  %2229 = vmatpush1.bf16.msra.mxu0 0
  %2230 = vmatprep.subr.bf16.mxu0 0
  %2231 = vmatpush1.bf16.msra.mxu0 0
  %2232 = vmatprep.subr.bf16.mxu0 0
  %2233 = vmatpush1.bf16.msra.mxu0 0
  %2234 = vmatprep.subr.bf16.mxu0 0
  %2235 = vmatpush1.bf16.msra.mxu0 0
  %2236 = vmatprep.mubr.bf16.mxu0 0
  %2237 = vmatmul.mubr.bf16.gmra.mrb[0].mxu0 %v2196
  %v2238 = vpop.f32.mrb[0].mxu0
  %v2239 = vadd.f32 0.0, %v2238
  %v2240 = vpop.f32.mrb[0].mxu0
  %v2241 = vpop.f32.mrb[0].mxu0
  %v2242 = vadd.f32 0.0, %v2241
  %v2243 = vpop.f32.mrb[0].mxu0
  %2244 = vmatprep.mubr.bf16.mxu0 0
  %2245 = vmatmul.mubr.bf16.gmra.mrb[0].mxu0 %v2199
  %v2246 = vpop.f32.mrb[0].mxu0
  %v2247 = vadd.f32 0.0, %v2246
  %v2248 = vpop.f32.mrb[0].mxu0
  %v2249 = vpop.f32.mrb[0].mxu0
  %v2250 = vpop.f32.mrb[0].mxu0
  %2251 = vdwg.mxu0
  %v2253 = vsel %vm645, %v2189, 0
  %v2256 = vsel %vm645, %v2190, 0
  %v2259 = vsel %vm793, %v1787, 0
  %2261 = vmatprep.subr.bf16.mxu0 0
  %2262 = vmatpush1.bf16.msra.mxu0 %v1785
  %2263 = vmatprep.subr.bf16.mxu0 0
  %2264 = vmatpush1.bf16.msra.mxu0 %v2259
  %2265 = vmatprep.subr.bf16.mxu0 0
  %2266 = vmatpush1.bf16.msra.mxu0 0
  %2267 = vmatprep.subr.bf16.mxu0 0
  %2268 = vmatpush1.bf16.msra.mxu0 0
  %2269 = vmatprep.subr.bf16.mxu0 0
  %2270 = vmatpush1.bf16.msra.mxu0 0
  %2271 = vmatprep.subr.bf16.mxu0 0
  %2272 = vmatpush1.bf16.msra.mxu0 0
  %2273 = vmatprep.subr.bf16.mxu0 0
  %2274 = vmatpush1.bf16.msra.mxu0 0
  %2275 = vmatprep.subr.bf16.mxu0 0
  %2276 = vmatpush1.bf16.msra.mxu0 0
  %2277 = vmatprep.subr.bf16.mxu0 0
  %2278 = vmatpush1.bf16.msra.mxu0 0
  %2279 = vmatprep.subr.bf16.mxu0 0
  %2280 = vmatpush1.bf16.msra.mxu0 0
  %2281 = vmatprep.subr.bf16.mxu0 0
  %2282 = vmatpush1.bf16.msra.mxu0 0
  %2283 = vmatprep.subr.bf16.mxu0 0
  %2284 = vmatpush1.bf16.msra.mxu0 0
  %2285 = vmatprep.subr.bf16.mxu0 0
  %2286 = vmatpush1.bf16.msra.mxu0 0
  %2287 = vmatprep.subr.bf16.mxu0 0
  %2288 = vmatpush1.bf16.msra.mxu0 0
  %2289 = vmatprep.subr.bf16.mxu0 0
  %2290 = vmatpush1.bf16.msra.mxu0 0
  %2291 = vmatprep.subr.bf16.mxu0 0
  %2292 = vmatpush1.bf16.msra.mxu0 0
  %2293 = vmatprep.mubr.bf16.mxu0 0
  %2294 = vmatmul.mubr.bf16.gmra.mrb[0].mxu0 %v2253
  %v2295 = vpop.f32.mrb[0].mxu0
  %v2296 = vadd.f32 0.0, %v2295
  %v2297 = vpop.f32.mrb[0].mxu0
  %v2298 = vpop.f32.mrb[0].mxu0
  %v2299 = vadd.f32 0.0, %v2298
  %v2300 = vpop.f32.mrb[0].mxu0
  %2301 = vmatprep.mubr.bf16.mxu0 0
  %2302 = vmatmul.mubr.bf16.gmra.mrb[0].mxu0 %v2256
  %v2303 = vpop.f32.mrb[0].mxu0
  %v2304 = vadd.f32 0.0, %v2303
  %v2305 = vpop.f32.mrb[0].mxu0
  %v2306 = vpop.f32.mrb[0].mxu0
  %v2307 = vpop.f32.mrb[0].mxu0
  %2308 = vdwg.mxu0
  %v2310 = vsel %vm645, %v2191, 0
  %v2313 = vsel %vm645, %v2192, 0
  %v2316 = vsel %vm793, %v1792, 0
  %2318 = vmatprep.subr.bf16.mxu0 0
  %2319 = vmatpush1.bf16.msra.mxu0 %v1790
  %2320 = vmatprep.subr.bf16.mxu0 0
  %2321 = vmatpush1.bf16.msra.mxu0 %v2316
  %2322 = vmatprep.subr.bf16.mxu0 0
  %2323 = vmatpush1.bf16.msra.mxu0 0
  %2324 = vmatprep.subr.bf16.mxu0 0
  %2325 = vmatpush1.bf16.msra.mxu0 0
  %2326 = vmatprep.subr.bf16.mxu0 0
  %2327 = vmatpush1.bf16.msra.mxu0 0
  %2328 = vmatprep.subr.bf16.mxu0 0
  %2329 = vmatpush1.bf16.msra.mxu0 0
  %2330 = vmatprep.subr.bf16.mxu0 0
  %2331 = vmatpush1.bf16.msra.mxu0 0
  %2332 = vmatprep.subr.bf16.mxu0 0
  %2333 = vmatpush1.bf16.msra.mxu0 0
  %2334 = vmatprep.subr.bf16.mxu0 0
  %2335 = vmatpush1.bf16.msra.mxu0 0
  %2336 = vmatprep.subr.bf16.mxu0 0
  %2337 = vmatpush1.bf16.msra.mxu0 0
  %2338 = vmatprep.subr.bf16.mxu0 0
  %2339 = vmatpush1.bf16.msra.mxu0 0
  %2340 = vmatprep.subr.bf16.mxu0 0
  %2341 = vmatpush1.bf16.msra.mxu0 0
  %2342 = vmatprep.subr.bf16.mxu0 0
  %2343 = vmatpush1.bf16.msra.mxu0 0
  %2344 = vmatprep.subr.bf16.mxu0 0
  %2345 = vmatpush1.bf16.msra.mxu0 0
  %2346 = vmatprep.subr.bf16.mxu0 0
  %2347 = vmatpush1.bf16.msra.mxu0 0
  %2348 = vmatprep.subr.bf16.mxu0 0
  %2349 = vmatpush1.bf16.msra.mxu0 0
  %2350 = vmatprep.mubr.bf16.mxu0 0
  %2351 = vmatmul.mubr.bf16.gmra.mrb[0].mxu0 %v2310
  %v2352 = vpop.f32.mrb[0].mxu0
  %v2353 = vadd.f32 0.0, %v2352
  %v2354 = vpop.f32.mrb[0].mxu0
  %v2355 = vpop.f32.mrb[0].mxu0
  %v2356 = vadd.f32 0.0, %v2355
  %v2357 = vpop.f32.mrb[0].mxu0
  %2358 = vmatprep.mubr.bf16.mxu0 0
  %2359 = vmatmul.mubr.bf16.gmra.mrb[0].mxu0 %v2313
  %v2360 = vpop.f32.mrb[0].mxu0
  %v2361 = vadd.f32 0.0, %v2360
  %v2362 = vpop.f32.mrb[0].mxu0
  %v2363 = vpop.f32.mrb[0].mxu0
  %v2364 = vpop.f32.mrb[0].mxu0
  %2365 = vdwg.mxu0
  %v2367 = vsel %vm645, %v2193, 0
  %v2370 = vsel %vm645, %v2194, 0
  %v2373 = vsel %vm793, %v1797, 0
  %2375 = vmatprep.subr.bf16.mxu0 0
  %2376 = vmatpush1.bf16.msra.mxu0 %v1795
  %2377 = vmatprep.subr.bf16.mxu0 0
  %2378 = vmatpush1.bf16.msra.mxu0 %v2373
  %2379 = vmatprep.subr.bf16.mxu0 0
  %2380 = vmatpush1.bf16.msra.mxu0 0
  %2381 = vmatprep.subr.bf16.mxu0 0
  %2382 = vmatpush1.bf16.msra.mxu0 0
  %2383 = vmatprep.subr.bf16.mxu0 0
  %2384 = vmatpush1.bf16.msra.mxu0 0
  %2385 = vmatprep.subr.bf16.mxu0 0
  %2386 = vmatpush1.bf16.msra.mxu0 0
  %2387 = vmatprep.subr.bf16.mxu0 0
  %2388 = vmatpush1.bf16.msra.mxu0 0
  %2389 = vmatprep.subr.bf16.mxu0 0
  %2390 = vmatpush1.bf16.msra.mxu0 0
  %2391 = vmatprep.subr.bf16.mxu0 0
  %2392 = vmatpush1.bf16.msra.mxu0 0
  %2393 = vmatprep.subr.bf16.mxu0 0
  %2394 = vmatpush1.bf16.msra.mxu0 0
  %2395 = vmatprep.subr.bf16.mxu0 0
  %2396 = vmatpush1.bf16.msra.mxu0 0
  %2397 = vmatprep.subr.bf16.mxu0 0
  %2398 = vmatpush1.bf16.msra.mxu0 0
  %2399 = vmatprep.subr.bf16.mxu0 0
  %2400 = vmatpush1.bf16.msra.mxu0 0
  %2401 = vmatprep.subr.bf16.mxu0 0
  %2402 = vmatpush1.bf16.msra.mxu0 0
  %2403 = vmatprep.subr.bf16.mxu0 0
  %2404 = vmatpush1.bf16.msra.mxu0 0
  %2405 = vmatprep.subr.bf16.mxu0 0
  %2406 = vmatpush1.bf16.msra.mxu0 0
  %2407 = vmatprep.mubr.bf16.mxu0 0
  %2408 = vmatmul.mubr.bf16.gmra.mrb[0].mxu0 %v2367
  %v2409 = vpop.f32.mrb[0].mxu0
  %v2410 = vadd.f32 0.0, %v2409
  %v2411 = vpop.f32.mrb[0].mxu0
  %v2412 = vpop.f32.mrb[0].mxu0
  %v2413 = vadd.f32 0.0, %v2412
  %v2414 = vpop.f32.mrb[0].mxu0
  %2415 = vmatprep.mubr.bf16.mxu0 0
  %2416 = vmatmul.mubr.bf16.gmra.mrb[0].mxu0 %v2370
  %v2417 = vpop.f32.mrb[0].mxu0
  %v2418 = vadd.f32 0.0, %v2417
  %v2419 = vpop.f32.mrb[0].mxu0
  %v2420 = vpop.f32.mrb[0].mxu0
  %v2421 = vpop.f32.mrb[0].mxu0
  %2422 = vdwg.mxu0
  %2426 = vrot.lane.b32.xlu0 %v2296, 16
  %v2427 = vpop.permute.xlu0 %2426
  %2428 = vrot.lane.b32.xlu0 %v2299, 16
  %v2429 = vpop.permute.xlu0 %2428
  %2430 = vrot.lane.b32.xlu0 %v2304, 16
  %v2431 = vpop.permute.xlu0 %2430
  %2438 = vrot.lane.b32.xlu0 %v2353, 32
  %v2439 = vpop.permute.xlu0 %2438
  %2440 = vrot.lane.b32.xlu0 %v2356, 32
  %v2441 = vpop.permute.xlu0 %2440
  %2442 = vrot.lane.b32.xlu0 %v2361, 32
  %v2443 = vpop.permute.xlu0 %2442
  %2450 = vrot.lane.b32.xlu0 %v2410, 48
  %v2451 = vpop.permute.xlu0 %2450
  %2452 = vrot.lane.b32.xlu0 %v2413, 48
  %v2453 = vpop.permute.xlu0 %2452
  %2454 = vrot.lane.b32.xlu0 %v2418, 48
  %v2455 = vpop.permute.xlu0 %2454
  %v2459 = vsel %vm392, %v2239, %v2427
  %v2460 = vsel %vm392, %v2242, %v2429
  %v2461 = vsel %vm392, %v2247, %v2431
  %v2462 = vsel %vm1055, %v2459, %v2439
  %v2463 = vsel %vm1055, %v2460, %v2441
  %v2464 = vsel %vm1055, %v2461, %v2443
  %v2465 = vsel %vm1059, %v2462, %v2451
  %v2466 = vsel %vm1059, %v2463, %v2453
  %v2467 = vsel %vm1059, %v2464, %v2455
  %v2468 = vpack.c.bf16 %v2466, %v2465
  %v2469 = vpack.c.bf16 %v2467, %v2467
  %s2470 = scalar_lea.vmem %s6, 32
  %v2471 = vld [vmem:[%s2470] sm:$0xf]
  %v2472 = vld [vmem:[%s2470 + $0x4] sm:$0xf]
  %v2473 = vld [vmem:[%s2470 + $0x8] sm:$0xf]
  %v2474 = vld [vmem:[%s2470 + $0xc] sm:$0xf]
  %v2475 = vld [vmem:[%s2470 + $0x10] sm:$0xf]
  %v2476 = vld [vmem:[%s2470 + $0x14] sm:$0xf]
  %v2477 = vld [vmem:[%s2470 + $0x18] sm:$0xf]
  %v2478 = vld [vmem:[%s2470 + $0x1c] sm:$0xf]
  %v2480 = vlaneseq
  %v2481 = vshrl.u32 %v2480, 7
  %v2482 = vsub.s32 0, %v2481
  %v2483 = vrot.slane %v1584, %v2482
  %v2493 = vunpack.c.l.b16 %v2471
  %v2494 = vunpack.c.l.b16 %v2472
  %v2495 = vunpack.c.l.b16 %v2473
  %v2496 = vunpack.c.l.b16 %v2474
  %v2497 = vunpack.c.l.b16 %v2475
  %v2498 = vunpack.c.l.b16 %v2476
  %v2499 = vunpack.c.l.b16 %v2477
  %v2500 = vunpack.c.l.b16 %v2478
  %v2501 = vpack.c.b16 %v2494, %v2493
  %v2502 = vpack.c.b16 %v2496, %v2495
  %v2503 = vpack.c.b16 %v2498, %v2497
  %v2504 = vpack.c.b16 %v2500, %v2499
  %v2510 = vsel %vm174, %v2468, 0
  %v2513 = vsel %vm174, %v2469, 0
  %2515 = vmatprep.subr.bf16.mxu0 0
  %2516 = vmatpush1.bf16.msra.mxu0 %v2501
  %2517 = vmatprep.subr.bf16.mxu0 0
  %2518 = vmatpush1.bf16.msra.mxu0 %v2502
  %2519 = vmatprep.subr.bf16.mxu0 0
  %2520 = vmatpush1.bf16.msra.mxu0 %v2503
  %2521 = vmatprep.subr.bf16.mxu0 0
  %2522 = vmatpush1.bf16.msra.mxu0 %v2504
  %2523 = vmatprep.subr.bf16.mxu0 0
  %2524 = vmatpush1.bf16.msra.mxu0 0
  %2525 = vmatprep.subr.bf16.mxu0 0
  %2526 = vmatpush1.bf16.msra.mxu0 0
  %2527 = vmatprep.subr.bf16.mxu0 0
  %2528 = vmatpush1.bf16.msra.mxu0 0
  %2529 = vmatprep.subr.bf16.mxu0 0
  %2530 = vmatpush1.bf16.msra.mxu0 0
  %2531 = vmatprep.subr.bf16.mxu0 0
  %2532 = vmatpush1.bf16.msra.mxu0 0
  %2533 = vmatprep.subr.bf16.mxu0 0
  %2534 = vmatpush1.bf16.msra.mxu0 0
  %2535 = vmatprep.subr.bf16.mxu0 0
  %2536 = vmatpush1.bf16.msra.mxu0 0
  %2537 = vmatprep.subr.bf16.mxu0 0
  %2538 = vmatpush1.bf16.msra.mxu0 0
  %2539 = vmatprep.subr.bf16.mxu0 0
  %2540 = vmatpush1.bf16.msra.mxu0 0
  %2541 = vmatprep.subr.bf16.mxu0 0
  %2542 = vmatpush1.bf16.msra.mxu0 0
  %2543 = vmatprep.subr.bf16.mxu0 0
  %2544 = vmatpush1.bf16.msra.mxu0 0
  %2545 = vmatprep.subr.bf16.mxu0 0
  %2546 = vmatpush1.bf16.msra.mxu0 0
  %2547 = vmatprep.mubr.bf16.mxu0 0
  %2548 = vmatmul.mubr.bf16.gmra.mrb[0].mxu0 %v2510
  %v2549 = vpop.f32.mrb[0].mxu0
  %v2550 = vadd.f32 %v2483, %v2549
  %v2551 = vpop.f32.mrb[0].mxu0
  %v2552 = vpop.f32.mrb[0].mxu0
  %v2553 = vadd.f32 %v2483, %v2552
  %v2554 = vpop.f32.mrb[0].mxu0
  %2555 = vmatprep.mubr.bf16.mxu0 0
  %2556 = vmatmul.mubr.bf16.gmra.mrb[0].mxu0 %v2513
  %v2557 = vpop.f32.mrb[0].mxu0
  %v2558 = vadd.f32 %v2483, %v2557
  %v2559 = vpop.f32.mrb[0].mxu0
  %v2560 = vpop.f32.mrb[0].mxu0
  %v2561 = vpop.f32.mrb[0].mxu0
  %2562 = vdwg.mxu0
  %v2563 = vadd.f32 %v1576, %v2550
  %v2564 = vadd.f32 %v1577, %v2553
  %v2565 = vadd.f32 %v1578, %v2558
  %v2566 = vsel %vm174, %v2563, 0.0
  %2567 = vadd.xlane.f32.xlu0 %v2566
  %v2568 = vpop.xlane.xlu0 %2567
  %v2569 = vsel %vm174, %v2564, 0.0
  %2570 = vadd.xlane.f32.xlu0 %v2569
  %v2571 = vpop.xlane.xlu0 %2570
  %v2572 = vsel %vm181, %v2565, 0.0
  %2573 = vadd.xlane.f32.xlu0 %v2572
  %v2574 = vpop.xlane.xlu0 %2573
  %v2575 = vmul.f32 %v2568, %v185
  %v2576 = vmul.f32 %v2571, %v185
  %v2577 = vmul.f32 %v2574, %v185
  %v2578 = vsub.f32 %v2563, %v2575
  %v2579 = vsub.f32 %v2564, %v2576
  %v2580 = vsub.f32 %v2565, %v2577
  %v2581 = vmul.f32 %v2578, %v2578
  %v2582 = vmul.f32 %v2579, %v2579
  %v2583 = vmul.f32 %v2580, %v2580
  %v2584 = vsel %vm174, %v2581, 0.0
  %2585 = vadd.xlane.f32.xlu0 %v2584
  %v2586 = vpop.xlane.xlu0 %2585
  %v2587 = vsel %vm174, %v2582, 0.0
  %2588 = vadd.xlane.f32.xlu0 %v2587
  %v2589 = vpop.xlane.xlu0 %2588
  %v2590 = vsel %vm181, %v2583, 0.0
  %2591 = vadd.xlane.f32.xlu0 %v2590
  %v2592 = vpop.xlane.xlu0 %2591
  %v2593 = vmul.f32 %v2586, %v185
  %v2594 = vmul.f32 %v2589, %v185
  %v2595 = vmul.f32 %v2592, %v185
  %v2596 = vadd.f32 %v2593, 1e-05
  %v2597 = vadd.f32 %v2594, 1e-05
  %v2598 = vadd.f32 %v2595, 1e-05
  %v2599 = vrsqrt.pop %v2596
  %v2600 = vrsqrt.pop %v2597
  %v2601 = vrsqrt.pop %v2598
  %v2602 = vmul.f32 %v2578, %v2599
  %v2603 = vmul.f32 %v2579, %v2600
  %v2604 = vmul.f32 %v2580, %v2601
  %v2606 = vlaneseq
  %v2607 = vshrl.u32 %v2606, 7
  %v2608 = vsub.s32 0, %v2607
  %v2609 = vrot.slane %v1582, %v2608
  %v2611 = vmul.f32 %v2602, %v2609
  %v2612 = vmul.f32 %v2603, %v2609
  %v2613 = vmul.f32 %v2604, %v2609
  %v2615 = vlaneseq
  %v2616 = vshrl.u32 %v2615, 7
  %v2617 = vsub.s32 0, %v2616
  %v2618 = vrot.slane %v1583, %v2617
  %v2620 = vadd.f32 %v2611, %v2618
  %v2621 = vadd.f32 %v2612, %v2618
  %v2622 = vadd.f32 %v2613, %v2618
  %v2623 = vpack.c.bf16 %v2621, %v2620
  %v2624 = vpack.c.bf16 %v2622, %v2622
  %s2625 = scalar_lea.vmem %s8, 64
  %v2626 = vld [vmem:[%s2625] sm:$0xff]
  %v2627 = vld [vmem:[%s2625 + $0x8] sm:$0xff]
  %v2628 = vld [vmem:[%s2625 + $0x10] sm:$0xff]
  %v2629 = vld [vmem:[%s2625 + $0x18] sm:$0xff]
  %v2630 = vld [vmem:[%s2625 + $0x20] sm:$0xff]
  %v2631 = vld [vmem:[%s2625 + $0x28] sm:$0xff]
  %v2632 = vld [vmem:[%s2625 + $0x30] sm:$0xff]
  %v2633 = vld [vmem:[%s2625 + $0x38] sm:$0xff]
  %s2634 = scalar_lea.vmem %s9, 2
  %v2635 = vld [vmem:[%s2634] sm:$0x3]
  %v2637 = vlaneseq
  %v2638 = vshrl.u32 %v2637, 7
  %v2639 = vsub.s32 0, %v2638
  %v2640 = vrot.slane %v2635, %v2639
  %v2641 = vlaneseq
  %v2642 = vshrl.u32 %v2641, 7
  %v2643 = vsub.s32 1, %v2642
  %v2644 = vrot.slane %v2635, %v2643
  %v2655 = vunpack.c.l.b16 %v2626
  %v2656 = vunpack.c.h.b16 %v2626
  %v2657 = vunpack.c.l.b16 %v2627
  %v2658 = vunpack.c.h.b16 %v2627
  %v2659 = vunpack.c.l.b16 %v2628
  %v2660 = vunpack.c.h.b16 %v2628
  %v2661 = vunpack.c.l.b16 %v2629
  %v2662 = vunpack.c.h.b16 %v2629
  %v2663 = vunpack.c.l.b16 %v2630
  %v2664 = vunpack.c.h.b16 %v2630
  %v2665 = vunpack.c.l.b16 %v2631
  %v2666 = vunpack.c.h.b16 %v2631
  %v2667 = vunpack.c.l.b16 %v2632
  %v2668 = vunpack.c.h.b16 %v2632
  %v2669 = vunpack.c.l.b16 %v2633
  %v2670 = vunpack.c.h.b16 %v2633
  %v2671 = vpack.c.b16 %v2657, %v2655
  %v2672 = vpack.c.b16 %v2658, %v2656
  %v2673 = vpack.c.b16 %v2661, %v2659
  %v2674 = vpack.c.b16 %v2662, %v2660
  %v2675 = vpack.c.b16 %v2665, %v2663
  %v2676 = vpack.c.b16 %v2666, %v2664
  %v2677 = vpack.c.b16 %v2669, %v2667
  %v2678 = vpack.c.b16 %v2670, %v2668
  %v2688 = vsel %vm174, %v2623, 0
  %v2691 = vsel %vm174, %v2624, 0
  %2693 = vmatprep.subr.bf16.mxu0 %v2672
  %2694 = vmatpush1.bf16.msra.mxu0 %v2671
  %2695 = vmatprep.subr.bf16.mxu0 %v2674
  %2696 = vmatpush1.bf16.msra.mxu0 %v2673
  %2697 = vmatprep.subr.bf16.mxu0 %v2676
  %2698 = vmatpush1.bf16.msra.mxu0 %v2675
  %2699 = vmatprep.subr.bf16.mxu0 %v2678
  %2700 = vmatpush1.bf16.msra.mxu0 %v2677
  %2701 = vmatprep.subr.bf16.mxu0 0
  %2702 = vmatpush1.bf16.msra.mxu0 0
  %2703 = vmatprep.subr.bf16.mxu0 0
  %2704 = vmatpush1.bf16.msra.mxu0 0
  %2705 = vmatprep.subr.bf16.mxu0 0
  %2706 = vmatpush1.bf16.msra.mxu0 0
  %2707 = vmatprep.subr.bf16.mxu0 0
  %2708 = vmatpush1.bf16.msra.mxu0 0
  %2709 = vmatprep.subr.bf16.mxu0 0
  %2710 = vmatpush1.bf16.msra.mxu0 0
  %2711 = vmatprep.subr.bf16.mxu0 0
  %2712 = vmatpush1.bf16.msra.mxu0 0
  %2713 = vmatprep.subr.bf16.mxu0 0
  %2714 = vmatpush1.bf16.msra.mxu0 0
  %2715 = vmatprep.subr.bf16.mxu0 0
  %2716 = vmatpush1.bf16.msra.mxu0 0
  %2717 = vmatprep.subr.bf16.mxu0 0
  %2718 = vmatpush1.bf16.msra.mxu0 0
  %2719 = vmatprep.subr.bf16.mxu0 0
  %2720 = vmatpush1.bf16.msra.mxu0 0
  %2721 = vmatprep.subr.bf16.mxu0 0
  %2722 = vmatpush1.bf16.msra.mxu0 0
  %2723 = vmatprep.subr.bf16.mxu0 0
  %2724 = vmatpush1.bf16.msra.mxu0 0
  %2725 = vmatprep.mubr.bf16.mxu0 0
  %2726 = vmatmul.mubr.bf16.gmra.mrb[0].mxu0 %v2688
  %v2727 = vpop.f32.mrb[0].mxu0
  %v2728 = vadd.f32 %v2640, %v2727
  %v2729 = vpop.f32.mrb[0].mxu0
  %v2730 = vadd.f32 %v2644, %v2729
  %v2731 = vpop.f32.mrb[0].mxu0
  %v2732 = vadd.f32 %v2640, %v2731
  %v2733 = vpop.f32.mrb[0].mxu0
  %v2734 = vadd.f32 %v2644, %v2733
  %2735 = vmatprep.mubr.bf16.mxu0 0
  %2736 = vmatmul.mubr.bf16.gmra.mrb[0].mxu0 %v2691
  %v2737 = vpop.f32.mrb[0].mxu0
  %v2738 = vadd.f32 %v2640, %v2737
  %v2739 = vpop.f32.mrb[0].mxu0
  %v2740 = vadd.f32 %v2644, %v2739
  %v2741 = vpop.f32.mrb[0].mxu0
  %v2742 = vpop.f32.mrb[0].mxu0
  %2743 = vdwg.mxu0
  %v2744 = vmul.f32 %v2728, 0.5
  %v2745 = vmul.f32 %v2730, 0.5
  %v2746 = vmul.f32 %v2732, 0.5
  %v2747 = vmul.f32 %v2734, 0.5
  %v2748 = vmul.f32 %v2738, 0.5
  %v2749 = vmul.f32 %v2740, 0.5
  %v2750 = vmul.f32 %v2728, 0.044715
  %v2751 = vmul.f32 %v2730, 0.044715
  %v2752 = vmul.f32 %v2732, 0.044715
  %v2753 = vmul.f32 %v2734, 0.044715
  %v2754 = vmul.f32 %v2738, 0.044715
  %v2755 = vmul.f32 %v2740, 0.044715
  %v2756 = vmul.f32 %v2750, %v2728
  %v2757 = vmul.f32 %v2751, %v2730
  %v2758 = vmul.f32 %v2752, %v2732
  %v2759 = vmul.f32 %v2753, %v2734
  %v2760 = vmul.f32 %v2754, %v2738
  %v2761 = vmul.f32 %v2755, %v2740
  %v2762 = vmul.f32 %v2756, %v2728
  %v2763 = vmul.f32 %v2757, %v2730
  %v2764 = vmul.f32 %v2758, %v2732
  %v2765 = vmul.f32 %v2759, %v2734
  %v2766 = vmul.f32 %v2760, %v2738
  %v2767 = vmul.f32 %v2761, %v2740
  %v2768 = vadd.f32 %v2728, %v2762
  %v2769 = vadd.f32 %v2730, %v2763
  %v2770 = vadd.f32 %v2732, %v2764
  %v2771 = vadd.f32 %v2734, %v2765
  %v2772 = vadd.f32 %v2738, %v2766
  %v2773 = vadd.f32 %v2740, %v2767
  %v2774 = vmul.f32 %v2768, 0.7978846
  %v2775 = vmul.f32 %v2769, 0.7978846
  %v2776 = vmul.f32 %v2770, 0.7978846
  %v2777 = vmul.f32 %v2771, 0.7978846
  %v2778 = vmul.f32 %v2772, 0.7978846
  %v2779 = vmul.f32 %v2773, 0.7978846
  %v2780 = vtanh.pop %v2774
  %v2781 = vtanh.pop %v2775
  %v2782 = vtanh.pop %v2776
  %v2783 = vtanh.pop %v2777
  %v2784 = vtanh.pop %v2778
  %v2785 = vtanh.pop %v2779
  %v2786 = vadd.f32 %v2780, 1.0
  %v2787 = vadd.f32 %v2781, 1.0
  %v2788 = vadd.f32 %v2782, 1.0
  %v2789 = vadd.f32 %v2783, 1.0
  %v2790 = vadd.f32 %v2784, 1.0
  %v2791 = vadd.f32 %v2785, 1.0
  %v2792 = vmul.f32 %v2744, %v2786
  %v2793 = vmul.f32 %v2745, %v2787
  %v2794 = vmul.f32 %v2746, %v2788
  %v2795 = vmul.f32 %v2747, %v2789
  %v2796 = vmul.f32 %v2748, %v2790
  %v2797 = vmul.f32 %v2749, %v2791
  %v2798 = vpack.c.bf16 %v2794, %v2792
  %v2799 = vpack.c.bf16 %v2795, %v2793
  %v2800 = vpack.c.bf16 %v2796, %v2796
  %v2801 = vpack.c.bf16 %v2797, %v2797
  %s2802 = scalar_lea.vmem %s10, 128
  %v2803 = vld [vmem:[%s2802] sm:$0xf]
  %v2804 = vld [vmem:[%s2802 + $0x4] sm:$0xf]
  %v2805 = vld [vmem:[%s2802 + $0x8] sm:$0xf]
  %v2806 = vld [vmem:[%s2802 + $0xc] sm:$0xf]
  %v2807 = vld [vmem:[%s2802 + $0x10] sm:$0xf]
  %v2808 = vld [vmem:[%s2802 + $0x14] sm:$0xf]
  %v2809 = vld [vmem:[%s2802 + $0x18] sm:$0xf]
  %v2810 = vld [vmem:[%s2802 + $0x1c] sm:$0xf]
  %v2811 = vld [vmem:[%s2802 + $0x20] sm:$0xf]
  %v2812 = vld [vmem:[%s2802 + $0x24] sm:$0xf]
  %v2813 = vld [vmem:[%s2802 + $0x28] sm:$0xf]
  %v2814 = vld [vmem:[%s2802 + $0x2c] sm:$0xf]
  %v2815 = vld [vmem:[%s2802 + $0x30] sm:$0xf]
  %v2816 = vld [vmem:[%s2802 + $0x34] sm:$0xf]
  %v2817 = vld [vmem:[%s2802 + $0x38] sm:$0xf]
  %v2818 = vld [vmem:[%s2802 + $0x3c] sm:$0xf]
  %v2819 = vld [vmem:[%s2802 + $0x40] sm:$0xf]
  %v2820 = vld [vmem:[%s2802 + $0x44] sm:$0xf]
  %v2821 = vld [vmem:[%s2802 + $0x48] sm:$0xf]
  %v2822 = vld [vmem:[%s2802 + $0x4c] sm:$0xf]
  %v2823 = vld [vmem:[%s2802 + $0x50] sm:$0xf]
  %v2824 = vld [vmem:[%s2802 + $0x54] sm:$0xf]
  %v2825 = vld [vmem:[%s2802 + $0x58] sm:$0xf]
  %v2826 = vld [vmem:[%s2802 + $0x5c] sm:$0xf]
  %v2827 = vld [vmem:[%s2802 + $0x60] sm:$0xf]
  %v2828 = vld [vmem:[%s2802 + $0x64] sm:$0xf]
  %v2829 = vld [vmem:[%s2802 + $0x68] sm:$0xf]
  %v2830 = vld [vmem:[%s2802 + $0x6c] sm:$0xf]
  %v2831 = vld [vmem:[%s2802 + $0x70] sm:$0xf]
  %v2832 = vld [vmem:[%s2802 + $0x74] sm:$0xf]
  %v2833 = vld [vmem:[%s2802 + $0x78] sm:$0xf]
  %v2834 = vld [vmem:[%s2802 + $0x7c] sm:$0xf]
  %v2836 = vlaneseq
  %v2837 = vshrl.u32 %v2836, 7
  %v2838 = vsub.s32 0, %v2837
  %v2839 = vrot.slane %v1585, %v2838
  %v2873 = vunpack.c.l.b16 %v2803
  %v2874 = vunpack.c.l.b16 %v2804
  %v2875 = vunpack.c.l.b16 %v2805
  %v2876 = vunpack.c.l.b16 %v2806
  %v2877 = vunpack.c.l.b16 %v2807
  %v2878 = vunpack.c.l.b16 %v2808
  %v2879 = vunpack.c.l.b16 %v2809
  %v2880 = vunpack.c.l.b16 %v2810
  %v2881 = vunpack.c.l.b16 %v2811
  %v2882 = vunpack.c.l.b16 %v2812
  %v2883 = vunpack.c.l.b16 %v2813
  %v2884 = vunpack.c.l.b16 %v2814
  %v2885 = vunpack.c.l.b16 %v2815
  %v2886 = vunpack.c.l.b16 %v2816
  %v2887 = vunpack.c.l.b16 %v2817
  %v2888 = vunpack.c.l.b16 %v2818
  %v2889 = vunpack.c.l.b16 %v2819
  %v2890 = vunpack.c.l.b16 %v2820
  %v2891 = vunpack.c.l.b16 %v2821
  %v2892 = vunpack.c.l.b16 %v2822
  %v2893 = vunpack.c.l.b16 %v2823
  %v2894 = vunpack.c.l.b16 %v2824
  %v2895 = vunpack.c.l.b16 %v2825
  %v2896 = vunpack.c.l.b16 %v2826
  %v2897 = vunpack.c.l.b16 %v2827
  %v2898 = vunpack.c.l.b16 %v2828
  %v2899 = vunpack.c.l.b16 %v2829
  %v2900 = vunpack.c.l.b16 %v2830
  %v2901 = vunpack.c.l.b16 %v2831
  %v2902 = vunpack.c.l.b16 %v2832
  %v2903 = vunpack.c.l.b16 %v2833
  %v2904 = vunpack.c.l.b16 %v2834
  %v2905 = vpack.c.b16 %v2874, %v2873
  %v2906 = vpack.c.b16 %v2876, %v2875
  %v2907 = vpack.c.b16 %v2878, %v2877
  %v2908 = vpack.c.b16 %v2880, %v2879
  %v2909 = vpack.c.b16 %v2882, %v2881
  %v2910 = vpack.c.b16 %v2884, %v2883
  %v2911 = vpack.c.b16 %v2886, %v2885
  %v2912 = vpack.c.b16 %v2888, %v2887
  %v2913 = vpack.c.b16 %v2890, %v2889
  %v2914 = vpack.c.b16 %v2892, %v2891
  %v2915 = vpack.c.b16 %v2894, %v2893
  %v2916 = vpack.c.b16 %v2896, %v2895
  %v2917 = vpack.c.b16 %v2898, %v2897
  %v2918 = vpack.c.b16 %v2900, %v2899
  %v2919 = vpack.c.b16 %v2902, %v2901
  %v2920 = vpack.c.b16 %v2904, %v2903
  %2937 = vmatprep.subr.bf16.mxu0 0
  %2938 = vmatpush1.bf16.msra.mxu0 %v2905
  %2939 = vmatprep.subr.bf16.mxu0 0
  %2940 = vmatpush1.bf16.msra.mxu0 %v2906
  %2941 = vmatprep.subr.bf16.mxu0 0
  %2942 = vmatpush1.bf16.msra.mxu0 %v2907
  %2943 = vmatprep.subr.bf16.mxu0 0
  %2944 = vmatpush1.bf16.msra.mxu0 %v2908
  %2945 = vmatprep.subr.bf16.mxu0 0
  %2946 = vmatpush1.bf16.msra.mxu0 %v2909
  %2947 = vmatprep.subr.bf16.mxu0 0
  %2948 = vmatpush1.bf16.msra.mxu0 %v2910
  %2949 = vmatprep.subr.bf16.mxu0 0
  %2950 = vmatpush1.bf16.msra.mxu0 %v2911
  %2951 = vmatprep.subr.bf16.mxu0 0
  %2952 = vmatpush1.bf16.msra.mxu0 %v2912
  %2953 = vmatprep.subr.bf16.mxu0 0
  %2954 = vmatpush1.bf16.msra.mxu0 %v2913
  %2955 = vmatprep.subr.bf16.mxu0 0
  %2956 = vmatpush1.bf16.msra.mxu0 %v2914
  %2957 = vmatprep.subr.bf16.mxu0 0
  %2958 = vmatpush1.bf16.msra.mxu0 %v2915
  %2959 = vmatprep.subr.bf16.mxu0 0
  %2960 = vmatpush1.bf16.msra.mxu0 %v2916
  %2961 = vmatprep.subr.bf16.mxu0 0
  %2962 = vmatpush1.bf16.msra.mxu0 %v2917
  %2963 = vmatprep.subr.bf16.mxu0 0
  %2964 = vmatpush1.bf16.msra.mxu0 %v2918
  %2965 = vmatprep.subr.bf16.mxu0 0
  %2966 = vmatpush1.bf16.msra.mxu0 %v2919
  %2967 = vmatprep.subr.bf16.mxu0 0
  %2968 = vmatpush1.bf16.msra.mxu0 %v2920
  %2969 = vmatprep.mubr.bf16.mxu0 %v2799
  %2970 = vmatmul.mubr.bf16.gmra.mrb[0].mxu0 %v2798
  %v2971 = vpop.f32.mrb[0].mxu0
  %v2972 = vadd.f32 %v2839, %v2971
  %v2973 = vpop.f32.mrb[0].mxu0
  %v2974 = vpop.f32.mrb[0].mxu0
  %v2975 = vadd.f32 %v2839, %v2974
  %v2976 = vpop.f32.mrb[0].mxu0
  %2977 = vmatprep.mubr.bf16.mxu0 %v2801
  %2978 = vmatmul.mubr.bf16.gmra.mrb[0].mxu0 %v2800
  %v2979 = vpop.f32.mrb[0].mxu0
  %v2980 = vadd.f32 %v2839, %v2979
  %v2981 = vpop.f32.mrb[0].mxu0
  %v2982 = vpop.f32.mrb[0].mxu0
  %v2983 = vpop.f32.mrb[0].mxu0
  %2984 = vdwg.mxu0
  %v2985 = vadd.f32 %v2563, %v2972
  %v2986 = vadd.f32 %v2564, %v2975
  %v2987 = vadd.f32 %v2565, %v2980
  %v2988 = vpack.c.bf16 %v2986, %v2985
  %v2989 = vpack.c.bf16 %v2987, %v2987
  %v2990 = vld [vmem:[%s11] sm:$0xf]
  %v2991 = vld [vmem:[%s11 + $0x4] sm:$0xf]
  %v2992 = vld [vmem:[%s11 + $0x8] sm:$0xf]
  %v2993 = vld [vmem:[%s11 + $0xc] sm:$0xf]
  %v2994 = vld [vmem:[%s11 + $0x10] sm:$0xf]
  %v2995 = vld [vmem:[%s11 + $0x14] sm:$0xf]
  %v2996 = vld [vmem:[%s11 + $0x18] sm:$0xf]
  %v2997 = vld [vmem:[%s11 + $0x1c] sm:$0xf]
  %v2998 = vld [vmem:[%s12] sm:$0x1]
  %v3000 = vlaneseq
  %v3001 = vshrl.u32 %v3000, 7
  %v3002 = vsub.s32 0, %v3001
  %v3003 = vrot.slane %v2998, %v3002
  %v3013 = vunpack.c.l.b16 %v2990
  %v3014 = vunpack.c.l.b16 %v2991
  %v3015 = vunpack.c.l.b16 %v2992
  %v3016 = vunpack.c.l.b16 %v2993
  %v3017 = vunpack.c.l.b16 %v2994
  %v3018 = vunpack.c.l.b16 %v2995
  %v3019 = vunpack.c.l.b16 %v2996
  %v3020 = vunpack.c.l.b16 %v2997
  %v3021 = vpack.c.b16 %v3014, %v3013
  %v3022 = vpack.c.b16 %v3016, %v3015
  %v3023 = vpack.c.b16 %v3018, %v3017
  %v3024 = vpack.c.b16 %v3020, %v3019
  %v3030 = vsel %vm174, %v2988, 0
  %v3033 = vsel %vm174, %v2989, 0
  %3035 = vmatprep.subr.bf16.mxu0 0
  %3036 = vmatpush1.bf16.msra.mxu0 %v3021
  %3037 = vmatprep.subr.bf16.mxu0 0
  %3038 = vmatpush1.bf16.msra.mxu0 %v3022
  %3039 = vmatprep.subr.bf16.mxu0 0
  %3040 = vmatpush1.bf16.msra.mxu0 %v3023
  %3041 = vmatprep.subr.bf16.mxu0 0
  %3042 = vmatpush1.bf16.msra.mxu0 %v3024
  %3043 = vmatprep.subr.bf16.mxu0 0
  %3044 = vmatpush1.bf16.msra.mxu0 0
  %3045 = vmatprep.subr.bf16.mxu0 0
  %3046 = vmatpush1.bf16.msra.mxu0 0
  %3047 = vmatprep.subr.bf16.mxu0 0
  %3048 = vmatpush1.bf16.msra.mxu0 0
  %3049 = vmatprep.subr.bf16.mxu0 0
  %3050 = vmatpush1.bf16.msra.mxu0 0
  %3051 = vmatprep.subr.bf16.mxu0 0
  %3052 = vmatpush1.bf16.msra.mxu0 0
  %3053 = vmatprep.subr.bf16.mxu0 0
  %3054 = vmatpush1.bf16.msra.mxu0 0
  %3055 = vmatprep.subr.bf16.mxu0 0
  %3056 = vmatpush1.bf16.msra.mxu0 0
  %3057 = vmatprep.subr.bf16.mxu0 0
  %3058 = vmatpush1.bf16.msra.mxu0 0
  %3059 = vmatprep.subr.bf16.mxu0 0
  %3060 = vmatpush1.bf16.msra.mxu0 0
  %3061 = vmatprep.subr.bf16.mxu0 0
  %3062 = vmatpush1.bf16.msra.mxu0 0
  %3063 = vmatprep.subr.bf16.mxu0 0
  %3064 = vmatpush1.bf16.msra.mxu0 0
  %3065 = vmatprep.subr.bf16.mxu0 0
  %3066 = vmatpush1.bf16.msra.mxu0 0
  %3067 = vmatprep.mubr.bf16.mxu0 0
  %3068 = vmatmul.mubr.bf16.gmra.mrb[0].mxu0 %v3030
  %v3069 = vpop.f32.mrb[0].mxu0
  %v3070 = vadd.f32 %v3003, %v3069
  %v3071 = vpop.f32.mrb[0].mxu0
  %v3072 = vpop.f32.mrb[0].mxu0
  %v3073 = vadd.f32 %v3003, %v3072
  %v3074 = vpop.f32.mrb[0].mxu0
  %3075 = vmatprep.mubr.bf16.mxu0 0
  %3076 = vmatmul.mubr.bf16.gmra.mrb[0].mxu0 %v3033
  %v3077 = vpop.f32.mrb[0].mxu0
  %v3078 = vadd.f32 %v3003, %v3077
  %v3079 = vpop.f32.mrb[0].mxu0
  %v3080 = vpop.f32.mrb[0].mxu0
  %v3081 = vpop.f32.mrb[0].mxu0
  %3082 = vdwg.mxu0
  %3083 = vst [vmem:[%s13] sm:$0xff] %v3070
  %3084 = vst [vmem:[%s13 + $0x8] sm:$0xff] %v3073
  %3085 = vst [vmem:[%s13 + $0x10] sm:$0xf] %v3078
  // Predicated region
  $region54: #{fill_mask_gpt2_forward.1} parent=0 // pred_check
    _
  $region55: #{fill_mask_gpt2_forward.1} parent=0 // pred_check_branch
    %3087 = sbr.rel (0) target = $region57
  $region56: #{fill_mask_gpt2_forward.1} parent=0 // pred_region
    _
  $region57: #{fill_mask_gpt2_forward.1} parent=0 // pred_fallthru
    _
  // Predicated region
  $region58: #{fill_mask_gpt2_forward.1} parent=0 // pred_check
    _
  $region59: #{fill_mask_gpt2_forward.1} parent=0 // pred_check_branch
    %3089 = sbr.rel (0) target = $region61
  $region60: #{fill_mask_gpt2_forward.1} parent=0 // pred_region
    _
  $region61: #{fill_mask_gpt2_forward.1} parent=0 // pred_fallthru
    _

</llo_original>
